<compile_context>
chip_gen: v5e
topology: v5e:2x2
jax: 0.10.0
libtpu: 0.0.40
codegen_flags: <defaults>
</compile_context>

<pallas_src>
import jax
import jax.numpy as jnp
import numpy as np
from jax import lax
from jax.experimental import pallas as pl
from jax.experimental.pallas import tpu as pltpu

LANE = 128


def _round_up(x, m):
    return (x + m - 1) // m * m


def residual_stack_kernel(x_ref, w1_ref, w2_ref, out_ref,
                          x_acc, pad_ref, col_ref):
    # x_ref  : (1, H, W, Cp)    f32 activation tile for one batch element
    # w1_ref : (L, 9*Cp, RHp)   bf16 3x3 conv weights, rows ordered (tap, cin)
    # w2_ref : (L, RHp, Cp)     bf16 1x1 conv weights
    # out_ref: (1, H, W, Cp)    f32
    # x_acc  : (H, W, Cp)       f32 running activation (VMEM scratch)
    # pad_ref: (H+2, W+2, Cp)   f32 zero-padded ReLU(x) (VMEM scratch)
    # col_ref: (H, W, 9*Cp)     bf16 im2col slab (VMEM scratch)
    _, H, W, Cp = x_ref.shape
    L = w1_ref.shape[0]
    cdt = w1_ref.dtype

    # Load this batch tile into the resident f32 accumulator.
    x_acc[...] = x_ref[0].astype(jnp.float32)

    # Zero only the 1-pixel border of the padded scratch (interior is
    # fully overwritten every layer) -- once per batch tile, not per layer.
    zrow = jnp.zeros((1, W + 2, Cp), jnp.float32)
    pad_ref[0:1, :, :] = zrow
    pad_ref[H + 1:H + 2, :, :] = zrow
    zcol = jnp.zeros((H + 2, 1, Cp), jnp.float32)
    pad_ref[:, 0:1, :] = zcol
    pad_ref[:, W + 1:W + 2, :] = zcol

    @pl.loop(0, L)
    def _layer(l):
        # ReLU, then write into the interior of the padded buffer.
        pad_ref[1:H + 1, 1:W + 1, :] = jnp.maximum(x_acc[...], 0.0)

        # im2col: pack the 9 shifted taps into one lane-dense bf16 slab.
        for idx in range(9):
            dy, dx = idx // 3, idx % 3
            col_ref[:, :, idx * Cp:(idx + 1) * Cp] = (
                pad_ref[dy:dy + H, dx:dx + W, :].astype(cdt))

        # 3x3 conv == one deep matmul: (H*W, 9*Cp) @ (9*Cp, RHp), f32 acc.
        col = col_ref[...].reshape(H * W, 9 * Cp)
        h = jnp.dot(col, w1_ref[l], preferred_element_type=jnp.float32)
        h = jnp.maximum(h, 0.0).astype(cdt)

        # 1x1 conv == matmul over channels: (H*W, RHp) @ (RHp, Cp).
        y = jnp.dot(h, w2_ref[l], preferred_element_type=jnp.float32)

        # Residual add in f32.
        x_acc[...] = x_acc[...] + y.reshape(H, W, Cp)

    out_ref[0] = jnp.maximum(x_acc[...], 0.0).astype(out_ref.dtype)


def residual_stack(x_nhwc, w1_stack, w2_stack, *, compute_dtype=jnp.bfloat16):
    """x_nhwc: (N,H,W,C) f32; w1_stack: (L,9,C,RH); w2_stack: (L,RH,C)."""
    N, H, W, C = x_nhwc.shape
    L, _, cin, RH = w1_stack.shape
    assert cin == C and w2_stack.shape == (L, RH, C)

    # Pad channel dims to the 128-lane MXU/vreg geometry (zero padding keeps
    # the math exact; padded channels stay identically zero).
    Cp = _round_up(C, LANE)
    RHp = _round_up(RH, LANE)

    xp = jnp.pad(x_nhwc, ((0, 0), (0, 0), (0, 0), (0, Cp - C)))
    w1p = jnp.pad(w1_stack, ((0, 0), (0, 0), (0, Cp - C), (0, RHp - RH)))
    w1p = w1p.reshape(L, 9 * Cp, RHp).astype(compute_dtype)
    w2p = jnp.pad(w2_stack, ((0, 0), (0, RHp - RH), (0, Cp - C)))
    w2p = w2p.astype(compute_dtype)

    out = pl.pallas_call(
        residual_stack_kernel,
        out_shape=jax.ShapeDtypeStruct((N, H, W, Cp), jnp.float32),
        grid_spec=pltpu.PrefetchScalarGridSpec(
            num_scalar_prefetch=0,
            grid=(N,),
            in_specs=[
                pl.BlockSpec((1, H, W, Cp), lambda n: (n, 0, 0, 0)),
                # Weights: constant block index -> loaded once, stay resident.
                pl.BlockSpec((L, 9 * Cp, RHp), lambda n: (0, 0, 0)),
                pl.BlockSpec((L, RHp, Cp), lambda n: (0, 0, 0)),
            ],
            out_specs=pl.BlockSpec((1, H, W, Cp), lambda n: (n, 0, 0, 0)),
            scratch_shapes=[
                pltpu.VMEM((H, W, Cp), jnp.float32),           # x_acc
                pltpu.VMEM((H + 2, W + 2, Cp), jnp.float32),   # padded ReLU(x)
                pltpu.VMEM((H, W, 9 * Cp), compute_dtype),     # im2col slab
            ],
        ),
        compiler_params=pltpu.CompilerParams(
            dimension_semantics=("parallel",),
            vmem_limit_bytes=48 * 1024 * 1024,
        ),
    )(xp, w1p, w2p)

    return out[..., :C]


def ref_residual_stack(x_nhwc, w1_stack, w2_stack, compute_dtype=jnp.bfloat16):
    """Pure-JAX reference using lax.conv, same bf16-in / f32-accumulate scheme."""
    L, _, C, RH = w1_stack.shape
    x = x_nhwc.astype(jnp.float32)
    dn = ("NHWC", "HWIO", "NHWC")
    for l in range(L):
        xr = jax.nn.relu(x).astype(compute_dtype)
        w1 = w1_stack[l].reshape(3, 3, C, RH).astype(compute_dtype)   # HWIO
        h = lax.conv_general_dilated(xr, w1, (1, 1), "SAME",
                                     dimension_numbers=dn,
                                     preferred_element_type=jnp.float32)
        h = jax.nn.relu(h).astype(compute_dtype)
        w2 = w2_stack[l].reshape(1, 1, RH, C).astype(compute_dtype)
        y = lax.conv_general_dilated(h, w2, (1, 1), "SAME",
                                     dimension_numbers=dn,
                                     preferred_element_type=jnp.float32)
        x = x + y
    return jax.nn.relu(x)


if __name__ == "__main__":
    # Module hyperparameters (in_channels must equal num_hiddens for the
    # residual add, as in the PyTorch model's intended usage).
    N, HW = 2, 16
    in_channels = num_hiddens = 4
    num_residual_hiddens = 8
    num_residual_layers = 2
    assert in_channels == num_hiddens

    key = jax.random.PRNGKey(0)
    kx, k1, k2 = jax.random.split(key, 3)

    # PyTorch forward takes NCHW; build NCHW then transpose to kernel layout NHWC.
    x_nchw = jax.random.normal(kx, (N, in_channels, HW, HW), dtype=jnp.float32)
    x_nhwc = jnp.transpose(x_nchw, (0, 2, 3, 1))

    # Deterministic synthetic weights.
    #   Conv2d 3x3 weight (OIHW): (RH, Cin, 3, 3)  -> (3,3,Cin,RH) -> (9,Cin,RH)
    #   Conv2d 1x1 weight (OIHW): (Cout, RH, 1, 1) -> (RH, Cout)
    w1_oihw = 0.1 * jax.random.normal(
        k1, (num_residual_layers, num_residual_hiddens, in_channels, 3, 3),
        dtype=jnp.float32)
    w2_oihw = 0.1 * jax.random.normal(
        k2, (num_residual_layers, num_hiddens, num_residual_hiddens, 1, 1),
        dtype=jnp.float32)

    w1_stack = jnp.transpose(w1_oihw, (0, 3, 4, 2, 1)).reshape(
        num_residual_layers, 9, in_channels, num_residual_hiddens)
    w2_stack = jnp.transpose(w2_oihw[:, :, :, 0, 0], (0, 2, 1))  # (L, RH, C)

    out = residual_stack(x_nhwc, w1_stack, w2_stack)
    out = jax.block_until_ready(out)

    ref = jax.block_until_ready(ref_residual_stack(x_nhwc, w1_stack, w2_stack))
    # bf16 matmul inputs (f32 accumulation) on both sides -> looser tolerance
    # than the pure-f32 path.
    np.testing.assert_allclose(np.asarray(out), np.asarray(ref),
                               rtol=2e-2, atol=2e-2)

    print("KERNEL_OK")
</pallas_src>

<mosaic_0001>
module attributes {stable_mosaic.version = 11 : i64} {
  func.func @residual_stack_kernel(%arg0: i32, %arg1: memref<1x16x16x128xf32, #tpu.memory_space<vmem>>, %arg2: memref<2x1152x128xbf16, #tpu.memory_space<vmem>>, %arg3: memref<2x128x128xbf16, #tpu.memory_space<vmem>>, %arg4: memref<1x16x16x128xf32, #tpu.memory_space<vmem>>, %arg5: memref<16x16x128xf32, #tpu.memory_space<vmem>>, %arg6: memref<18x18x128xf32, #tpu.memory_space<vmem>>, %arg7: memref<16x16x1152xbf16, #tpu.memory_space<vmem>>) attributes {dimension_semantics = [#tpu.dimension_semantics<parallel>], iteration_bounds = array<i64: 2>, scalar_prefetch = 0 : i64, scratch_operands = 3 : i64, tpu.core_type = #tpu.core_type<tc>, window_params = [{transform_indices = @transform_0, window_bounds = array<i64: 1, 16, 16, 128>}, {pipeline_mode = #tpu.pipeline_mode<synchronous>, transform_indices = @transform_1, window_bounds = array<i64: 2, 1152, 128>}, {pipeline_mode = #tpu.pipeline_mode<synchronous>, transform_indices = @transform_2, window_bounds = array<i64: 2, 128, 128>}, {transform_indices = @transform_3, window_bounds = array<i64: 1, 16, 16, 128>}]} {
    %c0 = arith.constant 0 : index
    %c0_0 = arith.constant 0 : index
    %c0_1 = arith.constant 0 : index
    %c0_2 = arith.constant 0 : index
    %0 = vector.load %arg1[%c0, %c0_0, %c0_1, %c0_2] : memref<1x16x16x128xf32, #tpu.memory_space<vmem>>, vector<1x16x16x128xf32>
    %1 = vector.shape_cast %0 : vector<1x16x16x128xf32> to vector<16x16x128xf32>
    %c0_3 = arith.constant 0 : index
    %c0_4 = arith.constant 0 : index
    %c0_5 = arith.constant 0 : index
    %2 = vector.load %arg5[%c0_3, %c0_4, %c0_5] : memref<16x16x128xf32, #tpu.memory_space<vmem>>, vector<16x16x128xf32>
    tpu.vector_store %arg5[%c0_3, %c0_4, %c0_5], %1 {strides = array<i32>} : memref<16x16x128xf32, #tpu.memory_space<vmem>>, vector<16x16x128xf32>,
    %cst = arith.constant 0.000000e+00 : f32
    %3 = vector.broadcast %cst : f32 to vector<1x18x128xf32>
    %c0_6 = arith.constant 0 : index
    %c0_7 = arith.constant 0 : index
    %c0_8 = arith.constant 0 : index
    %4 = vector.load %arg6[%c0_6, %c0_7, %c0_8] : memref<18x18x128xf32, #tpu.memory_space<vmem>>, vector<1x18x128xf32>
    tpu.vector_store %arg6[%c0_6, %c0_7, %c0_8], %3 {strides = array<i32>} : memref<18x18x128xf32, #tpu.memory_space<vmem>>, vector<1x18x128xf32>,
    %c17 = arith.constant 17 : index
    %c0_9 = arith.constant 0 : index
    %c0_10 = arith.constant 0 : index
    %5 = vector.load %arg6[%c17, %c0_9, %c0_10] : memref<18x18x128xf32, #tpu.memory_space<vmem>>, vector<1x18x128xf32>
    tpu.vector_store %arg6[%c17, %c0_9, %c0_10], %3 {strides = array<i32>} : memref<18x18x128xf32, #tpu.memory_space<vmem>>, vector<1x18x128xf32>,
    %cst_11 = arith.constant 0.000000e+00 : f32
    %6 = vector.broadcast %cst_11 : f32 to vector<18x1x128xf32>
    %c0_12 = arith.constant 0 : index
    %c0_13 = arith.constant 0 : index
    %c0_14 = arith.constant 0 : index
    %7 = vector.load %arg6[%c0_12, %c0_13, %c0_14] : memref<18x18x128xf32, #tpu.memory_space<vmem>>, vector<18x1x128xf32>
    tpu.vector_store %arg6[%c0_12, %c0_13, %c0_14], %6 {strides = array<i32>} : memref<18x18x128xf32, #tpu.memory_space<vmem>>, vector<18x1x128xf32>,
    %c0_15 = arith.constant 0 : index
    %c17_16 = arith.constant 17 : index
    %c0_17 = arith.constant 0 : index
    %8 = vector.load %arg6[%c0_15, %c17_16, %c0_17] : memref<18x18x128xf32, #tpu.memory_space<vmem>>, vector<18x1x128xf32>
    tpu.vector_store %arg6[%c0_15, %c17_16, %c0_17], %6 {strides = array<i32>} : memref<18x18x128xf32, #tpu.memory_space<vmem>>, vector<18x1x128xf32>,
    %c0_i32 = arith.constant 0 : i32
    %c2_i32 = arith.constant 2 : i32
    %9 = arith.addi %c0_i32, %c2_i32 : i32
    %c1_i32 = arith.constant 1 : i32
    scf.for %arg8 = %c0_i32 to %9 step %c1_i32  : i32 {
      %c1_i32_27 = arith.constant 1 : i32
      %16 = arith.muli %arg8, %c1_i32_27 : i32
      %c0_i32_28 = arith.constant 0 : i32
      %17 = arith.addi %c0_i32_28, %16 : i32
      %c0_29 = arith.constant 0 : index
      %c0_30 = arith.constant 0 : index
      %c0_31 = arith.constant 0 : index
      %18 = vector.load %arg5[%c0_29, %c0_30, %c0_31] : memref<16x16x128xf32, #tpu.memory_space<vmem>>, vector<16x16x128xf32>
      %cst_32 = arith.constant 0.000000e+00 : f32
      %19 = vector.broadcast %cst_32 : f32 to vector<16x16x128xf32>
      %20 = arith.maximumf %18, %19 : vector<16x16x128xf32>
      %c1 = arith.constant 1 : index
      %c1_33 = arith.constant 1 : index
      %c0_34 = arith.constant 0 : index
      %21 = vector.load %arg6[%c1, %c1_33, %c0_34] : memref<18x18x128xf32, #tpu.memory_space<vmem>>, vector<16x16x128xf32>
      tpu.vector_store %arg6[%c1, %c1_33, %c0_34], %20 {strides = array<i32>} : memref<18x18x128xf32, #tpu.memory_space<vmem>>, vector<16x16x128xf32>,
      %c0_35 = arith.constant 0 : index
      %c0_36 = arith.constant 0 : index
      %c0_37 = arith.constant 0 : index
      %22 = vector.load %arg6[%c0_35, %c0_36, %c0_37] : memref<18x18x128xf32, #tpu.memory_space<vmem>>, vector<16x16x128xf32>
      %23 = arith.truncf %22 : vector<16x16x128xf32> to vector<16x16x128xbf16>
      %c0_38 = arith.constant 0 : index
      %c0_39 = arith.constant 0 : index
      %c0_40 = arith.constant 0 : index
      %24 = vector.load %arg7[%c0_38, %c0_39, %c0_40] : memref<16x16x1152xbf16, #tpu.memory_space<vmem>>, vector<16x16x128xbf16>
      tpu.vector_store %arg7[%c0_38, %c0_39, %c0_40], %23 {strides = array<i32>} : memref<16x16x1152xbf16, #tpu.memory_space<vmem>>, vector<16x16x128xbf16>,
      %c0_41 = arith.constant 0 : index
      %c1_42 = arith.constant 1 : index
      %c0_43 = arith.constant 0 : index
      %25 = vector.load %arg6[%c0_41, %c1_42, %c0_43] : memref<18x18x128xf32, #tpu.memory_space<vmem>>, vector<16x16x128xf32>
      %26 = arith.truncf %25 : vector<16x16x128xf32> to vector<16x16x128xbf16>
      %c0_44 = arith.constant 0 : index
      %c0_45 = arith.constant 0 : index
      %c128 = arith.constant 128 : index
      %27 = vector.load %arg7[%c0_44, %c0_45, %c128] : memref<16x16x1152xbf16, #tpu.memory_space<vmem>>, vector<16x16x128xbf16>
      tpu.vector_store %arg7[%c0_44, %c0_45, %c128], %26 {strides = array<i32>} : memref<16x16x1152xbf16, #tpu.memory_space<vmem>>, vector<16x16x128xbf16>,
      %c0_46 = arith.constant 0 : index
      %c2 = arith.constant 2 : index
      %c0_47 = arith.constant 0 : index
      %28 = vector.load %arg6[%c0_46, %c2, %c0_47] : memref<18x18x128xf32, #tpu.memory_space<vmem>>, vector<16x16x128xf32>
      %29 = arith.truncf %28 : vector<16x16x128xf32> to vector<16x16x128xbf16>
      %c0_48 = arith.constant 0 : index
      %c0_49 = arith.constant 0 : index
      %c256 = arith.constant 256 : index
      %30 = vector.load %arg7[%c0_48, %c0_49, %c256] : memref<16x16x1152xbf16, #tpu.memory_space<vmem>>, vector<16x16x128xbf16>
      tpu.vector_store %arg7[%c0_48, %c0_49, %c256], %29 {strides = array<i32>} : memref<16x16x1152xbf16, #tpu.memory_space<vmem>>, vector<16x16x128xbf16>,
      %c1_50 = arith.constant 1 : index
      %c0_51 = arith.constant 0 : index
      %c0_52 = arith.constant 0 : index
      %31 = vector.load %arg6[%c1_50, %c0_51, %c0_52] : memref<18x18x128xf32, #tpu.memory_space<vmem>>, vector<16x16x128xf32>
      %32 = arith.truncf %31 : vector<16x16x128xf32> to vector<16x16x128xbf16>
      %c0_53 = arith.constant 0 : index
      %c0_54 = arith.constant 0 : index
      %c384 = arith.constant 384 : index
      %33 = vector.load %arg7[%c0_53, %c0_54, %c384] : memref<16x16x1152xbf16, #tpu.memory_space<vmem>>, vector<16x16x128xbf16>
      tpu.vector_store %arg7[%c0_53, %c0_54, %c384], %32 {strides = array<i32>} : memref<16x16x1152xbf16, #tpu.memory_space<vmem>>, vector<16x16x128xbf16>,
      %c1_55 = arith.constant 1 : index
      %c1_56 = arith.constant 1 : index
      %c0_57 = arith.constant 0 : index
      %34 = vector.load %arg6[%c1_55, %c1_56, %c0_57] : memref<18x18x128xf32, #tpu.memory_space<vmem>>, vector<16x16x128xf32>
      %35 = arith.truncf %34 : vector<16x16x128xf32> to vector<16x16x128xbf16>
      %c0_58 = arith.constant 0 : index
      %c0_59 = arith.constant 0 : index
      %c512 = arith.constant 512 : index
      %36 = vector.load %arg7[%c0_58, %c0_59, %c512] : memref<16x16x1152xbf16, #tpu.memory_space<vmem>>, vector<16x16x128xbf16>
      tpu.vector_store %arg7[%c0_58, %c0_59, %c512], %35 {strides = array<i32>} : memref<16x16x1152xbf16, #tpu.memory_space<vmem>>, vector<16x16x128xbf16>,
      %c1_60 = arith.constant 1 : index
      %c2_61 = arith.constant 2 : index
      %c0_62 = arith.constant 0 : index
      %37 = vector.load %arg6[%c1_60, %c2_61, %c0_62] : memref<18x18x128xf32, #tpu.memory_space<vmem>>, vector<16x16x128xf32>
      %38 = arith.truncf %37 : vector<16x16x128xf32> to vector<16x16x128xbf16>
      %c0_63 = arith.constant 0 : index
      %c0_64 = arith.constant 0 : index
      %c640 = arith.constant 640 : index
      %39 = vector.load %arg7[%c0_63, %c0_64, %c640] : memref<16x16x1152xbf16, #tpu.memory_space<vmem>>, vector<16x16x128xbf16>
      tpu.vector_store %arg7[%c0_63, %c0_64, %c640], %38 {strides = array<i32>} : memref<16x16x1152xbf16, #tpu.memory_space<vmem>>, vector<16x16x128xbf16>,
      %c2_65 = arith.constant 2 : index
      %c0_66 = arith.constant 0 : index
      %c0_67 = arith.constant 0 : index
      %40 = vector.load %arg6[%c2_65, %c0_66, %c0_67] : memref<18x18x128xf32, #tpu.memory_space<vmem>>, vector<16x16x128xf32>
      %41 = arith.truncf %40 : vector<16x16x128xf32> to vector<16x16x128xbf16>
      %c0_68 = arith.constant 0 : index
      %c0_69 = arith.constant 0 : index
      %c768 = arith.constant 768 : index
      %42 = vector.load %arg7[%c0_68, %c0_69, %c768] : memref<16x16x1152xbf16, #tpu.memory_space<vmem>>, vector<16x16x128xbf16>
      tpu.vector_store %arg7[%c0_68, %c0_69, %c768], %41 {strides = array<i32>} : memref<16x16x1152xbf16, #tpu.memory_space<vmem>>, vector<16x16x128xbf16>,
      %c2_70 = arith.constant 2 : index
      %c1_71 = arith.constant 1 : index
      %c0_72 = arith.constant 0 : index
      %43 = vector.load %arg6[%c2_70, %c1_71, %c0_72] : memref<18x18x128xf32, #tpu.memory_space<vmem>>, vector<16x16x128xf32>
      %44 = arith.truncf %43 : vector<16x16x128xf32> to vector<16x16x128xbf16>
      %c0_73 = arith.constant 0 : index
      %c0_74 = arith.constant 0 : index
      %c896 = arith.constant 896 : index
      %45 = vector.load %arg7[%c0_73, %c0_74, %c896] : memref<16x16x1152xbf16, #tpu.memory_space<vmem>>, vector<16x16x128xbf16>
      tpu.vector_store %arg7[%c0_73, %c0_74, %c896], %44 {strides = array<i32>} : memref<16x16x1152xbf16, #tpu.memory_space<vmem>>, vector<16x16x128xbf16>,
      %c2_75 = arith.constant 2 : index
      %c2_76 = arith.constant 2 : index
      %c0_77 = arith.constant 0 : index
      %46 = vector.load %arg6[%c2_75, %c2_76, %c0_77] : memref<18x18x128xf32, #tpu.memory_space<vmem>>, vector<16x16x128xf32>
      %47 = arith.truncf %46 : vector<16x16x128xf32> to vector<16x16x128xbf16>
      %c0_78 = arith.constant 0 : index
      %c0_79 = arith.constant 0 : index
      %c1024 = arith.constant 1024 : index
      %48 = vector.load %arg7[%c0_78, %c0_79, %c1024] : memref<16x16x1152xbf16, #tpu.memory_space<vmem>>, vector<16x16x128xbf16>
      tpu.vector_store %arg7[%c0_78, %c0_79, %c1024], %47 {strides = array<i32>} : memref<16x16x1152xbf16, #tpu.memory_space<vmem>>, vector<16x16x128xbf16>,
      %c0_80 = arith.constant 0 : index
      %c0_81 = arith.constant 0 : index
      %c0_82 = arith.constant 0 : index
      %49 = vector.load %arg7[%c0_80, %c0_81, %c0_82] : memref<16x16x1152xbf16, #tpu.memory_space<vmem>>, vector<16x16x1152xbf16>
      %50 = vector.shape_cast %49 : vector<16x16x1152xbf16> to vector<256x1152xbf16>
      %51 = arith.index_cast %17 : i32 to index
      %c0_83 = arith.constant 0 : index
      %c0_84 = arith.constant 0 : index
      %52 = vector.load %arg2[%51, %c0_83, %c0_84] : memref<2x1152x128xbf16, #tpu.memory_space<vmem>>, vector<1x1152x128xbf16>
      %53 = vector.shape_cast %52 : vector<1x1152x128xbf16> to vector<1152x128xbf16>
      %cst_85 = arith.constant dense<0.000000e+00> : vector<256x128xf32>
      %54 = tpu.matmul %50, %53, %cst_85 {dimension_numbers = #tpu.dot_dimension_numbers<[1], [0], [0], [1], [0, 0, 1, 1], [], []>} : vector<256x1152xbf16>, vector<1152x128xbf16>, vector<256x128xf32> -> vector<256x128xf32>
      %cst_86 = arith.constant 0.000000e+00 : f32
      %55 = vector.broadcast %cst_86 : f32 to vector<256x128xf32>
      %56 = arith.maximumf %54, %55 : vector<256x128xf32>
      %57 = arith.truncf %56 : vector<256x128xf32> to vector<256x128xbf16>
      %58 = arith.index_cast %17 : i32 to index
      %c0_87 = arith.constant 0 : index
      %c0_88 = arith.constant 0 : index
      %59 = vector.load %arg3[%58, %c0_87, %c0_88] : memref<2x128x128xbf16, #tpu.memory_space<vmem>>, vector<1x128x128xbf16>
      %60 = vector.shape_cast %59 : vector<1x128x128xbf16> to vector<128x128xbf16>
      %cst_89 = arith.constant dense<0.000000e+00> : vector<256x128xf32>
      %61 = tpu.matmul %57, %60, %cst_89 {dimension_numbers = #tpu.dot_dimension_numbers<[1], [0], [0], [1], [0, 0, 1, 1], [], []>} : vector<256x128xbf16>, vector<128x128xbf16>, vector<256x128xf32> -> vector<256x128xf32>
      %c0_90 = arith.constant 0 : index
      %c0_91 = arith.constant 0 : index
      %c0_92 = arith.constant 0 : index
      %62 = vector.load %arg5[%c0_90, %c0_91, %c0_92] : memref<16x16x128xf32, #tpu.memory_space<vmem>>, vector<16x16x128xf32>
      %63 = vector.shape_cast %61 : vector<256x128xf32> to vector<16x16x128xf32>
      %64 = arith.addf %62, %63 : vector<16x16x128xf32>
      %c0_93 = arith.constant 0 : index
      %c0_94 = arith.constant 0 : index
      %c0_95 = arith.constant 0 : index
      %65 = vector.load %arg5[%c0_93, %c0_94, %c0_95] : memref<16x16x128xf32, #tpu.memory_space<vmem>>, vector<16x16x128xf32>
      tpu.vector_store %arg5[%c0_93, %c0_94, %c0_95], %64 {strides = array<i32>} : memref<16x16x128xf32, #tpu.memory_space<vmem>>, vector<16x16x128xf32>,
    }
    %c2_i32_18 = arith.constant 2 : i32
    %c0_19 = arith.constant 0 : index
    %c0_20 = arith.constant 0 : index
    %c0_21 = arith.constant 0 : index
    %10 = vector.load %arg5[%c0_19, %c0_20, %c0_21] : memref<16x16x128xf32, #tpu.memory_space<vmem>>, vector<16x16x128xf32>
    %cst_22 = arith.constant 0.000000e+00 : f32
    %11 = vector.broadcast %cst_22 : f32 to vector<16x16x128xf32>
    %12 = arith.maximumf %10, %11 : vector<16x16x128xf32>
    %c0_23 = arith.constant 0 : index
    %c0_24 = arith.constant 0 : index
    %c0_25 = arith.constant 0 : index
    %c0_26 = arith.constant 0 : index
    %13 = vector.load %arg4[%c0_23, %c0_24, %c0_25, %c0_26] : memref<1x16x16x128xf32, #tpu.memory_space<vmem>>, vector<1x16x16x128xf32>
    %14 = vector.shape_cast %13 : vector<1x16x16x128xf32> to vector<16x16x128xf32>
    %15 = vector.shape_cast %12 : vector<16x16x128xf32> to vector<1x16x16x128xf32>
    tpu.vector_store %arg4[%c0_23, %c0_24, %c0_25, %c0_26], %15 {strides = array<i32>} : memref<1x16x16x128xf32, #tpu.memory_space<vmem>>, vector<1x16x16x128xf32>,
    return
  }
  func.func @transform_0(%arg0: i32) -> (i32, i32, i32, i32) {
    %c0_i32 = arith.constant 0 : i32
    %c0_i32_0 = arith.constant 0 : i32
    %c0_i32_1 = arith.constant 0 : i32
    %c0_i32_2 = arith.constant 0 : i32
    return %arg0, %c0_i32, %c0_i32_0, %c0_i32_1 : i32, i32, i32, i32
  }
  func.func @transform_1(%arg0: i32) -> (i32, i32, i32) {
    %c0_i32 = arith.constant 0 : i32
    %c0_i32_0 = arith.constant 0 : i32
    %c0_i32_1 = arith.constant 0 : i32
    %c0_i32_2 = arith.constant 0 : i32
    return %c0_i32, %c0_i32_0, %c0_i32_1 : i32, i32, i32
  }
  func.func @transform_2(%arg0: i32) -> (i32, i32, i32) {
    %c0_i32 = arith.constant 0 : i32
    %c0_i32_0 = arith.constant 0 : i32
    %c0_i32_1 = arith.constant 0 : i32
    %c0_i32_2 = arith.constant 0 : i32
    return %c0_i32, %c0_i32_0, %c0_i32_1 : i32, i32, i32
  }
  func.func @transform_3(%arg0: i32) -> (i32, i32, i32, i32) {
    %c0_i32 = arith.constant 0 : i32
    %c0_i32_0 = arith.constant 0 : i32
    %c0_i32_1 = arith.constant 0 : i32
    %c0_i32_2 = arith.constant 0 : i32
    return %arg0, %c0_i32, %c0_i32_0, %c0_i32_1 : i32, i32, i32, i32
  }
}

</mosaic_0001>

<llo_original>
// kernel: tpu_custom_call.1
$region0: #{tpu_custom_call.1}
  #allocation0 [shape = 'u32[]', space=smem, size = 0x4, offset = 0x4, fixed_abs, tag = 'smem constant byte address 0x4 - core index']
  #allocation1 [shape = 'u32[72,128]{1,0:T(1,128)}', space=vmem, size = 0x9000, scoped, tag = 'internal scratch']
  #allocation2 [shape = 'f32[16,16,128]{2,1,0:T(8,128)}', space=vmem, size = 0x20000, scoped, tag = 'scratch operand']
  #allocation3 [shape = 'f32[18,18,128]{2,1,0:T(8,128)}', space=vmem, size = 0x36000, scoped, tag = 'scratch operand']
  #allocation4 [shape = 'bf16[16,16,1152]{2,1,0:T(8,128)(2,1)}', space=vmem, size = 0x90000, scoped, tag = 'scratch operand']
  %s0 = inlined_call_operand.hbm [shape: f32[2,16,16,128], index: 0, kind: input, shape index: {}]
  %s1 = inlined_call_operand.hbm [shape: bf16[2,1152,128], index: 1, kind: input, shape index: {}]
  %s2 = inlined_call_operand.hbm [shape: bf16[2,128,128], index: 2, kind: input, shape index: {}]
  %s3 = inlined_call_operand.hbm [shape: f32[2,16,16,128], index: 3, kind: output, shape index: {}]
  %s4 = sld [smem:[#allocation0]]
  $region64: #{tpu_custom_call.1} parent=0
    _
  %s6 = ssub.s32 1, %s4
  %s7 = scalar_select 0, %s6, %s4
  $region1: #{tpu_custom_call.1} parent=0
    #allocation5 [shape = 'u8[262144]{0}', space=vmem, size = 0x40000, scoped, tag = 'input window, operand 0']
    #allocation6 [shape = 's32[2]{0}', space=sflag, size = 0x8, scoped, tag = 'scoped memory for tpu_custom_call.1']
    #allocation7 [shape = 's32[2]{0}', space=sflag, size = 0x8, scoped, tag = 'scoped memory for tpu_custom_call.1']
    #allocation8 [shape = 'u8[589824]{0}', space=vmem, size = 0x90000, scoped, tag = 'input window, operand 1, single buffered']
    #allocation9 [shape = 's32[1]{0}', space=sflag, size = 0x4, scoped, tag = 'scoped memory for tpu_custom_call.1']
    #allocation10 [shape = 'u8[65536]{0}', space=vmem, size = 0x10000, scoped, tag = 'input window, operand 2, single buffered']
    #allocation11 [shape = 'u8[262144]{0}', space=vmem, size = 0x40000, scoped, tag = 'output window, operand 0']
    %8 = vsyncpa [#allocation6], 0
    %s9 = scalar_lea.sflag [#allocation6], 1
    %10 = vsyncpa %s9, 0
    %11 = vsyncpa [#allocation9], 0
    %12 = vsyncpa [#allocation7], 0
    %s13 = scalar_lea.sflag [#allocation7], 1
    %14 = vsyncpa %s13, 0
    loop: start=0, step=1, limit=4
    $region2: #{tpu_custom_call.1} parent=1 // loop_pre_header
      _
    $region3: #{tpu_custom_call.1} parent=1 // loop_header
      %s16 = sphi 0, %s20
      %p17 = scmp.ge.s32.totalorder %s16, 4
      %s26 = sphi 0, %s28
      %s29 = sphi 0, %s26
      %s30 = sphi 0, %s29
      %s46 = sphi 0, %s30
      %s50 = sphi 0, %s50
      %s52 = sphi 0, %s50
      %s53 = sphi 0, %s52
      %s67 = sphi 0, %s53
      %s71 = sphi 0, %s71
      %s73 = sphi 0, %s71
      %s74 = sphi 0, %s73
      %s88 = sphi 0, %s74
      %s94 = sphi 0, %s96
      %s97 = sphi 0, %s94
      %s98 = sphi 0, %s97
      %s114 = sphi 0, %s98
    $region4: #{tpu_custom_call.1} parent=1 // loop_header_branch
      %19 = sbr.rel (%p17) target = $region8
    $region5: #{tpu_custom_call.1} parent=1 // loop_body
      %s21 = ssub.s32 %s16, 1
      %s22 = ssub.s32 %s16, 2
      %s23 = sadd.s32 %s16, 1
      %s24 = ssub.s32 %s16, %s23
      %p25 = scmp.eq.s32.totalorder %s24, 0
      %s27 = sadd.s32 %s26, 1
      %s28 = scalar_select %p25, %s26, %s27
      %p31 = pneg %p25
      %p32 = scmp.eq.s32.totalorder %s16, 1
      %p33 = por %p31, %p32
      %p34 = scmp.ne.s32.totalorder %s26, %s29
      %p35 = scmp.eq.s32.totalorder %s16, 0
      %p36 = por %p34, %p35
      %p37 = scmp.ne.s32.totalorder %s26, %s29
      %p38 = scmp.eq.s32.totalorder %s21, 1
      %p39 = por %p37, %p38
      %p40 = scmp.ne.s32.totalorder %s29, %s30
      %p41 = scmp.eq.s32.totalorder %s21, 0
      %p42 = por %p40, %p41
      %p43 = scmp.ne.s32.totalorder %s29, %s30
      %p44 = scmp.eq.s32.totalorder %s22, 1
      %p45 = por %p43, %p44
      %p47 = scmp.ne.s32.totalorder %s30, %s46
      %p48 = scmp.eq.s32.totalorder %s22, 0
      %p49 = por %p47, %p48
      %s51 = sadd.s32 %s50, 1
      %p54 = scmp.eq.s32.totalorder %s16, 1
      %p55 = scmp.ne.s32.totalorder %s50, %s52
      %p56 = scmp.eq.s32.totalorder %s16, 0
      %p57 = por %p55, %p56
      %p58 = scmp.ne.s32.totalorder %s50, %s52
      %p59 = scmp.eq.s32.totalorder %s21, 1
      %p60 = por %p58, %p59
      %p61 = scmp.ne.s32.totalorder %s52, %s53
      %p62 = scmp.eq.s32.totalorder %s21, 0
      %p63 = por %p61, %p62
      %p64 = scmp.ne.s32.totalorder %s52, %s53
      %p65 = scmp.eq.s32.totalorder %s22, 1
      %p66 = por %p64, %p65
      %p68 = scmp.ne.s32.totalorder %s53, %s67
      %p69 = scmp.eq.s32.totalorder %s22, 0
      %p70 = por %p68, %p69
      %s72 = sadd.s32 %s71, 1
      %p75 = scmp.eq.s32.totalorder %s16, 1
      %p76 = scmp.ne.s32.totalorder %s71, %s73
      %p77 = scmp.eq.s32.totalorder %s16, 0
      %p78 = por %p76, %p77
      %p79 = scmp.ne.s32.totalorder %s71, %s73
      %p80 = scmp.eq.s32.totalorder %s21, 1
      %p81 = por %p79, %p80
      %p82 = scmp.ne.s32.totalorder %s73, %s74
      %p83 = scmp.eq.s32.totalorder %s21, 0
      %p84 = por %p82, %p83
      %p85 = scmp.ne.s32.totalorder %s73, %s74
      %p86 = scmp.eq.s32.totalorder %s22, 1
      %p87 = por %p85, %p86
      %p89 = scmp.ne.s32.totalorder %s74, %s88
      %p90 = scmp.eq.s32.totalorder %s22, 0
      %p91 = por %p89, %p90
      %s92 = ssub.s32 %s16, %s23
      %p93 = scmp.eq.s32.totalorder %s92, 0
      %s95 = sadd.s32 %s94, 1
      %s96 = scalar_select %p93, %s94, %s95
      %p99 = pneg %p93
      %p100 = scmp.eq.s32.totalorder %s16, 1
      %p101 = por %p99, %p100
      %p102 = scmp.ne.s32.totalorder %s94, %s97
      %p103 = scmp.eq.s32.totalorder %s16, 0
      %p104 = por %p102, %p103
      %p105 = scmp.ne.s32.totalorder %s94, %s97
      %p106 = scmp.eq.s32.totalorder %s21, 1
      %p107 = por %p105, %p106
      %p108 = scmp.ne.s32.totalorder %s97, %s98
      %p109 = scmp.eq.s32.totalorder %s21, 0
      %p110 = por %p108, %p109
      %p111 = scmp.ne.s32.totalorder %s97, %s98
      %p112 = scmp.eq.s32.totalorder %s22, 1
      %p113 = por %p111, %p112
      %p115 = scmp.ne.s32.totalorder %s98, %s114
      %p116 = scmp.eq.s32.totalorder %s22, 0
      %p117 = por %p115, %p116
      %p118 = scmp.le.s32.totalorder 1, %s16
      %p119 = scmp.lt.s32.totalorder %s16, 3
      %p120 = pnand %p118, %p119
      %p121 = pneg %p120
      // Predicated region
      $region9: #{tpu_custom_call.1} parent=5 // pred_check
        _
      $region10: #{tpu_custom_call.1} parent=5 // pred_check_branch
        %123 = sbr.rel (%p120) target = $region12
      $region11: #{tpu_custom_call.1} parent=5 // pred_region
        %s124 = ssub.s32 %s16, 1
        // Predicated region
        $region13: #{tpu_custom_call.1} parent=11 // pred_check
          %p125 = pneg %p63
        $region14: #{tpu_custom_call.1} parent=11 // pred_check_branch
          %127 = sbr.rel (%p125) target = $region16
        $region15: #{tpu_custom_call.1} parent=11 // pred_region
          %129 = vsyncadd [#allocation9], 0
          %s130 = sshll.u32 %s1, 4
          %s131 = int_to_ptr.hbm [resolvable:$true] %s130
          %s132 = sshll.u32 [#allocation8], 4
          %s133 = int_to_ptr.vmem [resolvable:$true] %s132
          %138 = dma.hbm_to_vmem [thread:$0]  %s131, 18432, %s133, [#allocation9], 64, 64, 4
        $region16: #{tpu_custom_call.1} parent=11 // pred_fallthru
          _
        // Predicated region
        $region17: #{tpu_custom_call.1} parent=11 // pred_check
          %p139 = pneg %p84
        $region18: #{tpu_custom_call.1} parent=11 // pred_check_branch
          %141 = sbr.rel (%p139) target = $region20
        $region19: #{tpu_custom_call.1} parent=11 // pred_region
          %143 = vsyncadd [#allocation9], 0
          %s144 = sshll.u32 %s2, 4
          %s145 = int_to_ptr.hbm [resolvable:$true] %s144
          %s146 = sshll.u32 [#allocation10], 4
          %s147 = int_to_ptr.vmem [resolvable:$true] %s146
          %152 = dma.hbm_to_vmem [thread:$0]  %s145, 2048, %s147, [#allocation9], 64, 64, 4
        $region20: #{tpu_custom_call.1} parent=11 // pred_fallthru
          _
      $region12: #{tpu_custom_call.1} parent=5 // pred_fallthru
        _
      %p153 = scmp.lt.s32.totalorder %s16, 2
      // Predicated region
      $region21: #{tpu_custom_call.1} parent=5 // pred_check
        %p154 = pneg %p153
      $region22: #{tpu_custom_call.1} parent=5 // pred_check_branch
        %156 = sbr.rel (%p154) target = $region24
      $region23: #{tpu_custom_call.1} parent=5 // pred_region
        // Predicated region
        $region25: #{tpu_custom_call.1} parent=23 // pred_check
          %p157 = pneg %p36
        $region26: #{tpu_custom_call.1} parent=23 // pred_check_branch
          %159 = sbr.rel (%p157) target = $region28
        $region27: #{tpu_custom_call.1} parent=23 // pred_region
          %s160 = sand.u32 %s26, 1
          %s161 = scalar_lea.sflag [#allocation6], %s160
          %s162 = sand.u32 %s26, 1
          %s163 = smul.addr %s162, 256
          %s164 = scalar_lea.vmem [#allocation5], %s163
          %166 = vsyncadd %s161, 0
          %s167 = smul.addr %s16, 32
          %s168 = smul.addr %s167, 8
          %s169 = scalar_lea.hbm %s0, %s168
          %s170 = sshll.u32 %s169, 4
          %s171 = int_to_ptr.hbm [resolvable:$true] %s170
          %s172 = sshll.u32 %s164, 4
          %s173 = int_to_ptr.vmem [resolvable:$true] %s172
          %178 = dma.hbm_to_vmem [thread:$0]  %s171, 4096, %s173, %s161, 128, 128, 8
        $region28: #{tpu_custom_call.1} parent=23 // pred_fallthru
          _
      $region24: #{tpu_custom_call.1} parent=5 // pred_fallthru
        _
      %p179 = scmp.le.s32.totalorder 1, %s16
      %p180 = scmp.lt.s32.totalorder %s16, 3
      %p181 = pnand %p179, %p180
      %p182 = pneg %p181
      // Predicated region
      $region29: #{tpu_custom_call.1} parent=5 // pred_check
        _
      $region30: #{tpu_custom_call.1} parent=5 // pred_check_branch
        %184 = sbr.rel (%p181) target = $region32
      $region31: #{tpu_custom_call.1} parent=5 // pred_region
        %s185 = ssub.s32 %s16, 1
        %s186 = sand.u32 %s29, 1
        %s187 = scalar_lea.sflag [#allocation6], %s186
        %s188 = sand.u32 %s29, 1
        %s189 = smul.addr %s188, 256
        %s190 = scalar_lea.vmem [#allocation5], %s189
        // Predicated region
        $region33: #{tpu_custom_call.1} parent=31 // pred_check
          %p191 = pneg %p42
        $region34: #{tpu_custom_call.1} parent=31 // pred_check_branch
          %193 = sbr.rel (%p191) target = $region36
        $region35: #{tpu_custom_call.1} parent=31 // pred_region
          %195 = dma.done %s187, 4096
        $region36: #{tpu_custom_call.1} parent=31 // pred_fallthru
          _
        // Predicated region
        $region37: #{tpu_custom_call.1} parent=31 // pred_check
          %p196 = pneg %p63
        $region38: #{tpu_custom_call.1} parent=31 // pred_check_branch
          %198 = sbr.rel (%p196) target = $region40
        $region39: #{tpu_custom_call.1} parent=31 // pred_region
          %200 = dma.done [#allocation9], 18432
        $region40: #{tpu_custom_call.1} parent=31 // pred_fallthru
          _
        // Predicated region
        $region41: #{tpu_custom_call.1} parent=31 // pred_check
          %p201 = pneg %p84
        $region42: #{tpu_custom_call.1} parent=31 // pred_check_branch
          %203 = sbr.rel (%p201) target = $region44
        $region43: #{tpu_custom_call.1} parent=31 // pred_region
          %205 = dma.done [#allocation9], 2048
        $region44: #{tpu_custom_call.1} parent=31 // pred_fallthru
          _
        %s206 = sand.u32 %s29, 1
        %s207 = scalar_lea.sflag [#allocation6], %s206
        %s208 = sand.u32 %s29, 1
        %s209 = smul.addr %s208, 256
        %s210 = scalar_lea.vmem [#allocation5], %s209
        %p211 = pneg %p42
        %p212 = pneg %p39
        %p213 = pneg %p63
        %p214 = pneg %p60
        %p215 = pneg %p84
        %p216 = pneg %p81
        %p217 = pneg %p110
        %p218 = pneg %p107
        %s219 = sand.u32 %s97, 1
        %s220 = scalar_lea.sflag [#allocation7], %s219
        %s221 = sand.u32 %s97, 1
        %s222 = smul.addr %s221, 256
        %s223 = scalar_lea.vmem [#allocation11], %s222
        %v224 = vld [vmem:[%s190] sm:$0xff]
        %v225 = vld [vmem:[%s190 + $0x8] sm:$0xff]
        %v226 = vld [vmem:[%s190 + $0x10] sm:$0xff]
        %v227 = vld [vmem:[%s190 + $0x18] sm:$0xff]
        %v228 = vld [vmem:[%s190 + $0x20] sm:$0xff]
        %v229 = vld [vmem:[%s190 + $0x28] sm:$0xff]
        %v230 = vld [vmem:[%s190 + $0x30] sm:$0xff]
        %v231 = vld [vmem:[%s190 + $0x38] sm:$0xff]
        %v232 = vld [vmem:[%s190 + $0x40] sm:$0xff]
        %v233 = vld [vmem:[%s190 + $0x48] sm:$0xff]
        %v234 = vld [vmem:[%s190 + $0x50] sm:$0xff]
        %v235 = vld [vmem:[%s190 + $0x58] sm:$0xff]
        %v236 = vld [vmem:[%s190 + $0x60] sm:$0xff]
        %v237 = vld [vmem:[%s190 + $0x68] sm:$0xff]
        %v238 = vld [vmem:[%s190 + $0x70] sm:$0xff]
        %v239 = vld [vmem:[%s190 + $0x78] sm:$0xff]
        %v240 = vld [vmem:[%s190 + $0x80] sm:$0xff]
        %v241 = vld [vmem:[%s190 + $0x88] sm:$0xff]
        %v242 = vld [vmem:[%s190 + $0x90] sm:$0xff]
        %v243 = vld [vmem:[%s190 + $0x98] sm:$0xff]
        %v244 = vld [vmem:[%s190 + $0xa0] sm:$0xff]
        %v245 = vld [vmem:[%s190 + $0xa8] sm:$0xff]
        %v246 = vld [vmem:[%s190 + $0xb0] sm:$0xff]
        %v247 = vld [vmem:[%s190 + $0xb8] sm:$0xff]
        %v248 = vld [vmem:[%s190 + $0xc0] sm:$0xff]
        %v249 = vld [vmem:[%s190 + $0xc8] sm:$0xff]
        %v250 = vld [vmem:[%s190 + $0xd0] sm:$0xff]
        %v251 = vld [vmem:[%s190 + $0xd8] sm:$0xff]
        %v252 = vld [vmem:[%s190 + $0xe0] sm:$0xff]
        %v253 = vld [vmem:[%s190 + $0xe8] sm:$0xff]
        %v254 = vld [vmem:[%s190 + $0xf0] sm:$0xff]
        %v255 = vld [vmem:[%s190 + $0xf8] sm:$0xff]
        %256 = vst [vmem:[#allocation2] sm:$0xff] %v224
        %257 = vst [vmem:[#allocation2 + $0x8] sm:$0xff] %v225
        %258 = vst [vmem:[#allocation2 + $0x10] sm:$0xff] %v226
        %259 = vst [vmem:[#allocation2 + $0x18] sm:$0xff] %v227
        %260 = vst [vmem:[#allocation2 + $0x20] sm:$0xff] %v228
        %261 = vst [vmem:[#allocation2 + $0x28] sm:$0xff] %v229
        %262 = vst [vmem:[#allocation2 + $0x30] sm:$0xff] %v230
        %263 = vst [vmem:[#allocation2 + $0x38] sm:$0xff] %v231
        %264 = vst [vmem:[#allocation2 + $0x40] sm:$0xff] %v232
        %265 = vst [vmem:[#allocation2 + $0x48] sm:$0xff] %v233
        %266 = vst [vmem:[#allocation2 + $0x50] sm:$0xff] %v234
        %267 = vst [vmem:[#allocation2 + $0x58] sm:$0xff] %v235
        %268 = vst [vmem:[#allocation2 + $0x60] sm:$0xff] %v236
        %269 = vst [vmem:[#allocation2 + $0x68] sm:$0xff] %v237
        %270 = vst [vmem:[#allocation2 + $0x70] sm:$0xff] %v238
        %271 = vst [vmem:[#allocation2 + $0x78] sm:$0xff] %v239
        %272 = vst [vmem:[#allocation2 + $0x80] sm:$0xff] %v240
        %273 = vst [vmem:[#allocation2 + $0x88] sm:$0xff] %v241
        %274 = vst [vmem:[#allocation2 + $0x90] sm:$0xff] %v242
        %275 = vst [vmem:[#allocation2 + $0x98] sm:$0xff] %v243
        %276 = vst [vmem:[#allocation2 + $0xa0] sm:$0xff] %v244
        %277 = vst [vmem:[#allocation2 + $0xa8] sm:$0xff] %v245
        %278 = vst [vmem:[#allocation2 + $0xb0] sm:$0xff] %v246
        %279 = vst [vmem:[#allocation2 + $0xb8] sm:$0xff] %v247
        %280 = vst [vmem:[#allocation2 + $0xc0] sm:$0xff] %v248
        %281 = vst [vmem:[#allocation2 + $0xc8] sm:$0xff] %v249
        %282 = vst [vmem:[#allocation2 + $0xd0] sm:$0xff] %v250
        %283 = vst [vmem:[#allocation2 + $0xd8] sm:$0xff] %v251
        %284 = vst [vmem:[#allocation2 + $0xe0] sm:$0xff] %v252
        %285 = vst [vmem:[#allocation2 + $0xe8] sm:$0xff] %v253
        %286 = vst [vmem:[#allocation2 + $0xf0] sm:$0xff] %v254
        %287 = vst [vmem:[#allocation2 + $0xf8] sm:$0xff] %v255
        %288 = vst [vmem:[#allocation3] sm:$0xff] 0.0
        %289 = vst [vmem:[#allocation3 + $0x8] sm:$0xff] 0.0
        %290 = vst [vmem:[#allocation3 + $0x10] sm:$0x3] 0.0
        %s291 = scalar_lea.vmem [#allocation3], 408
        %292 = vst [vmem:[%s291] sm:$0xff] 0.0
        %293 = vst [vmem:[%s291 + $0x8] sm:$0xff] 0.0
        %294 = vst [vmem:[%s291 + $0x10] sm:$0x3] 0.0
        %295 = vst [vmem:[#allocation3] sm:$0x1] 0.0
        %296 = vst [vmem:[#allocation3 + $0x18] sm:$0x1] 0.0
        %297 = vst [vmem:[#allocation3 + $0x30] sm:$0x1] 0.0
        %298 = vst [vmem:[#allocation3 + $0x48] sm:$0x1] 0.0
        %299 = vst [vmem:[#allocation3 + $0x60] sm:$0x1] 0.0
        %300 = vst [vmem:[#allocation3 + $0x78] sm:$0x1] 0.0
        %301 = vst [vmem:[#allocation3 + $0x90] sm:$0x1] 0.0
        %302 = vst [vmem:[#allocation3 + $0xa8] sm:$0x1] 0.0
        %303 = vst [vmem:[#allocation3 + $0xc0] sm:$0x1] 0.0
        %304 = vst [vmem:[#allocation3 + $0xd8] sm:$0x1] 0.0
        %305 = vst [vmem:[#allocation3 + $0xf0] sm:$0x1] 0.0
        %306 = vst [vmem:[#allocation3 + $0x108] sm:$0x1] 0.0
        %307 = vst [vmem:[#allocation3 + $0x120] sm:$0x1] 0.0
        %308 = vst [vmem:[#allocation3 + $0x138] sm:$0x1] 0.0
        %309 = vst [vmem:[#allocation3 + $0x150] sm:$0x1] 0.0
        %310 = vst [vmem:[#allocation3 + $0x168] sm:$0x1] 0.0
        %311 = vst [vmem:[#allocation3 + $0x180] sm:$0x1] 0.0
        %312 = vst [vmem:[#allocation3 + $0x198] sm:$0x1] 0.0
        %313 = vst [vmem:[#allocation3 + $0x11] sm:$0x1] 0.0
        %314 = vst [vmem:[#allocation3 + $0x29] sm:$0x1] 0.0
        %315 = vst [vmem:[#allocation3 + $0x41] sm:$0x1] 0.0
        %316 = vst [vmem:[#allocation3 + $0x59] sm:$0x1] 0.0
        %317 = vst [vmem:[#allocation3 + $0x71] sm:$0x1] 0.0
        %318 = vst [vmem:[#allocation3 + $0x89] sm:$0x1] 0.0
        %319 = vst [vmem:[#allocation3 + $0xa1] sm:$0x1] 0.0
        %320 = vst [vmem:[#allocation3 + $0xb9] sm:$0x1] 0.0
        %321 = vst [vmem:[#allocation3 + $0xd1] sm:$0x1] 0.0
        %322 = vst [vmem:[#allocation3 + $0xe9] sm:$0x1] 0.0
        %323 = vst [vmem:[#allocation3 + $0x101] sm:$0x1] 0.0
        %324 = vst [vmem:[#allocation3 + $0x119] sm:$0x1] 0.0
        %325 = vst [vmem:[#allocation3 + $0x131] sm:$0x1] 0.0
        %326 = vst [vmem:[#allocation3 + $0x149] sm:$0x1] 0.0
        %327 = vst [vmem:[#allocation3 + $0x161] sm:$0x1] 0.0
        %328 = vst [vmem:[#allocation3 + $0x179] sm:$0x1] 0.0
        %329 = vst [vmem:[#allocation3 + $0x191] sm:$0x1] 0.0
        %330 = vst [vmem:[#allocation3 + $0x1a9] sm:$0x1] 0.0
        loop: start=0, step=1, limit=2
        $region45: #{tpu_custom_call.1} parent=31 // loop_pre_header
          _
        $region46: #{tpu_custom_call.1} parent=31 // loop_header
          %s332 = sphi 0, %s336
          %p333 = scmp.ge.s32.totalorder %s332, 2
        $region47: #{tpu_custom_call.1} parent=31 // loop_header_branch
          %335 = sbr.rel (%p333) target = $region51
        $region48: #{tpu_custom_call.1} parent=31 // loop_body
          %v337 = vld [vmem:[#allocation2] sm:$0xff]
          %v338 = vld [vmem:[#allocation2 + $0x8] sm:$0xff]
          %v339 = vld [vmem:[#allocation2 + $0x10] sm:$0xff]
          %v340 = vld [vmem:[#allocation2 + $0x18] sm:$0xff]
          %v341 = vld [vmem:[#allocation2 + $0x20] sm:$0xff]
          %v342 = vld [vmem:[#allocation2 + $0x28] sm:$0xff]
          %v343 = vld [vmem:[#allocation2 + $0x30] sm:$0xff]
          %v344 = vld [vmem:[#allocation2 + $0x38] sm:$0xff]
          %v345 = vld [vmem:[#allocation2 + $0x40] sm:$0xff]
          %v346 = vld [vmem:[#allocation2 + $0x48] sm:$0xff]
          %v347 = vld [vmem:[#allocation2 + $0x50] sm:$0xff]
          %v348 = vld [vmem:[#allocation2 + $0x58] sm:$0xff]
          %v349 = vld [vmem:[#allocation2 + $0x60] sm:$0xff]
          %v350 = vld [vmem:[#allocation2 + $0x68] sm:$0xff]
          %v351 = vld [vmem:[#allocation2 + $0x70] sm:$0xff]
          %v352 = vld [vmem:[#allocation2 + $0x78] sm:$0xff]
          %v353 = vld [vmem:[#allocation2 + $0x80] sm:$0xff]
          %v354 = vld [vmem:[#allocation2 + $0x88] sm:$0xff]
          %v355 = vld [vmem:[#allocation2 + $0x90] sm:$0xff]
          %v356 = vld [vmem:[#allocation2 + $0x98] sm:$0xff]
          %v357 = vld [vmem:[#allocation2 + $0xa0] sm:$0xff]
          %v358 = vld [vmem:[#allocation2 + $0xa8] sm:$0xff]
          %v359 = vld [vmem:[#allocation2 + $0xb0] sm:$0xff]
          %v360 = vld [vmem:[#allocation2 + $0xb8] sm:$0xff]
          %v361 = vld [vmem:[#allocation2 + $0xc0] sm:$0xff]
          %v362 = vld [vmem:[#allocation2 + $0xc8] sm:$0xff]
          %v363 = vld [vmem:[#allocation2 + $0xd0] sm:$0xff]
          %v364 = vld [vmem:[#allocation2 + $0xd8] sm:$0xff]
          %v365 = vld [vmem:[#allocation2 + $0xe0] sm:$0xff]
          %v366 = vld [vmem:[#allocation2 + $0xe8] sm:$0xff]
          %v367 = vld [vmem:[#allocation2 + $0xf0] sm:$0xff]
          %v368 = vld [vmem:[#allocation2 + $0xf8] sm:$0xff]
          %v369 = vmax.f32 %v337, 0.0
          %v370 = vmax.f32 %v338, 0.0
          %v371 = vmax.f32 %v339, 0.0
          %v372 = vmax.f32 %v340, 0.0
          %v373 = vmax.f32 %v341, 0.0
          %v374 = vmax.f32 %v342, 0.0
          %v375 = vmax.f32 %v343, 0.0
          %v376 = vmax.f32 %v344, 0.0
          %v377 = vmax.f32 %v345, 0.0
          %v378 = vmax.f32 %v346, 0.0
          %v379 = vmax.f32 %v347, 0.0
          %v380 = vmax.f32 %v348, 0.0
          %v381 = vmax.f32 %v349, 0.0
          %v382 = vmax.f32 %v350, 0.0
          %v383 = vmax.f32 %v351, 0.0
          %v384 = vmax.f32 %v352, 0.0
          %v385 = vmax.f32 %v353, 0.0
          %v386 = vmax.f32 %v354, 0.0
          %v387 = vmax.f32 %v355, 0.0
          %v388 = vmax.f32 %v356, 0.0
          %v389 = vmax.f32 %v357, 0.0
          %v390 = vmax.f32 %v358, 0.0
          %v391 = vmax.f32 %v359, 0.0
          %v392 = vmax.f32 %v360, 0.0
          %v393 = vmax.f32 %v361, 0.0
          %v394 = vmax.f32 %v362, 0.0
          %v395 = vmax.f32 %v363, 0.0
          %v396 = vmax.f32 %v364, 0.0
          %v397 = vmax.f32 %v365, 0.0
          %v398 = vmax.f32 %v366, 0.0
          %v399 = vmax.f32 %v367, 0.0
          %v400 = vmax.f32 %v368, 0.0
          %s401 = scalar_lea.vmem [#allocation3], 24
          %402 = vst [vmem:[%s401 + $0x1] sm:$0xff] %v369
          %403 = vst [vmem:[%s401 + $0x9] sm:$0xff] %v370
          %404 = vst [vmem:[%s401 + $0x19] sm:$0xff] %v371
          %405 = vst [vmem:[%s401 + $0x21] sm:$0xff] %v372
          %406 = vst [vmem:[%s401 + $0x31] sm:$0xff] %v373
          %407 = vst [vmem:[%s401 + $0x39] sm:$0xff] %v374
          %408 = vst [vmem:[%s401 + $0x49] sm:$0xff] %v375
          %409 = vst [vmem:[%s401 + $0x51] sm:$0xff] %v376
          %410 = vst [vmem:[%s401 + $0x61] sm:$0xff] %v377
          %411 = vst [vmem:[%s401 + $0x69] sm:$0xff] %v378
          %412 = vst [vmem:[%s401 + $0x79] sm:$0xff] %v379
          %413 = vst [vmem:[%s401 + $0x81] sm:$0xff] %v380
          %414 = vst [vmem:[%s401 + $0x91] sm:$0xff] %v381
          %415 = vst [vmem:[%s401 + $0x99] sm:$0xff] %v382
          %416 = vst [vmem:[%s401 + $0xa9] sm:$0xff] %v383
          %417 = vst [vmem:[%s401 + $0xb1] sm:$0xff] %v384
          %418 = vst [vmem:[%s401 + $0xc1] sm:$0xff] %v385
          %419 = vst [vmem:[%s401 + $0xc9] sm:$0xff] %v386
          %420 = vst [vmem:[%s401 + $0xd9] sm:$0xff] %v387
          %421 = vst [vmem:[%s401 + $0xe1] sm:$0xff] %v388
          %422 = vst [vmem:[%s401 + $0xf1] sm:$0xff] %v389
          %423 = vst [vmem:[%s401 + $0xf9] sm:$0xff] %v390
          %424 = vst [vmem:[%s401 + $0x109] sm:$0xff] %v391
          %425 = vst [vmem:[%s401 + $0x111] sm:$0xff] %v392
          %426 = vst [vmem:[%s401 + $0x121] sm:$0xff] %v393
          %427 = vst [vmem:[%s401 + $0x129] sm:$0xff] %v394
          %428 = vst [vmem:[%s401 + $0x139] sm:$0xff] %v395
          %429 = vst [vmem:[%s401 + $0x141] sm:$0xff] %v396
          %430 = vst [vmem:[%s401 + $0x151] sm:$0xff] %v397
          %431 = vst [vmem:[%s401 + $0x159] sm:$0xff] %v398
          %432 = vst [vmem:[%s401 + $0x169] sm:$0xff] %v399
          %433 = vst [vmem:[%s401 + $0x171] sm:$0xff] %v400
          %v434 = vld [vmem:[#allocation3] sm:$0xff]
          %v435 = vld [vmem:[#allocation3 + $0x8] sm:$0xff]
          %v436 = vld [vmem:[#allocation3 + $0x18] sm:$0xff]
          %v437 = vld [vmem:[#allocation3 + $0x20] sm:$0xff]
          %v438 = vld [vmem:[#allocation3 + $0x30] sm:$0xff]
          %v439 = vld [vmem:[#allocation3 + $0x38] sm:$0xff]
          %v440 = vld [vmem:[#allocation3 + $0x48] sm:$0xff]
          %v441 = vld [vmem:[#allocation3 + $0x50] sm:$0xff]
          %v442 = vld [vmem:[#allocation3 + $0x60] sm:$0xff]
          %v443 = vld [vmem:[#allocation3 + $0x68] sm:$0xff]
          %v444 = vld [vmem:[#allocation3 + $0x78] sm:$0xff]
          %v445 = vld [vmem:[#allocation3 + $0x80] sm:$0xff]
          %v446 = vld [vmem:[#allocation3 + $0x90] sm:$0xff]
          %v447 = vld [vmem:[#allocation3 + $0x98] sm:$0xff]
          %v448 = vld [vmem:[#allocation3 + $0xa8] sm:$0xff]
          %v449 = vld [vmem:[#allocation3 + $0xb0] sm:$0xff]
          %v450 = vld [vmem:[#allocation3 + $0xc0] sm:$0xff]
          %v451 = vld [vmem:[#allocation3 + $0xc8] sm:$0xff]
          %v452 = vld [vmem:[#allocation3 + $0xd8] sm:$0xff]
          %v453 = vld [vmem:[#allocation3 + $0xe0] sm:$0xff]
          %v454 = vld [vmem:[#allocation3 + $0xf0] sm:$0xff]
          %v455 = vld [vmem:[#allocation3 + $0xf8] sm:$0xff]
          %v456 = vld [vmem:[#allocation3 + $0x108] sm:$0xff]
          %v457 = vld [vmem:[#allocation3 + $0x110] sm:$0xff]
          %v458 = vld [vmem:[#allocation3 + $0x120] sm:$0xff]
          %v459 = vld [vmem:[#allocation3 + $0x128] sm:$0xff]
          %v460 = vld [vmem:[#allocation3 + $0x138] sm:$0xff]
          %v461 = vld [vmem:[#allocation3 + $0x140] sm:$0xff]
          %v462 = vld [vmem:[#allocation3 + $0x150] sm:$0xff]
          %v463 = vld [vmem:[#allocation3 + $0x158] sm:$0xff]
          %v464 = vld [vmem:[#allocation3 + $0x168] sm:$0xff]
          %v465 = vld [vmem:[#allocation3 + $0x170] sm:$0xff]
          %v466 = vpack.c.bf16 %v434, %v434
          %v467 = vpack.c.bf16 %v435, %v435
          %v468 = vpack.c.bf16 %v436, %v436
          %v469 = vpack.c.bf16 %v437, %v437
          %v470 = vpack.c.bf16 %v438, %v438
          %v471 = vpack.c.bf16 %v439, %v439
          %v472 = vpack.c.bf16 %v440, %v440
          %v473 = vpack.c.bf16 %v441, %v441
          %v474 = vpack.c.bf16 %v442, %v442
          %v475 = vpack.c.bf16 %v443, %v443
          %v476 = vpack.c.bf16 %v444, %v444
          %v477 = vpack.c.bf16 %v445, %v445
          %v478 = vpack.c.bf16 %v446, %v446
          %v479 = vpack.c.bf16 %v447, %v447
          %v480 = vpack.c.bf16 %v448, %v448
          %v481 = vpack.c.bf16 %v449, %v449
          %v482 = vpack.c.bf16 %v450, %v450
          %v483 = vpack.c.bf16 %v451, %v451
          %v484 = vpack.c.bf16 %v452, %v452
          %v485 = vpack.c.bf16 %v453, %v453
          %v486 = vpack.c.bf16 %v454, %v454
          %v487 = vpack.c.bf16 %v455, %v455
          %v488 = vpack.c.bf16 %v456, %v456
          %v489 = vpack.c.bf16 %v457, %v457
          %v490 = vpack.c.bf16 %v458, %v458
          %v491 = vpack.c.bf16 %v459, %v459
          %v492 = vpack.c.bf16 %v460, %v460
          %v493 = vpack.c.bf16 %v461, %v461
          %v494 = vpack.c.bf16 %v462, %v462
          %v495 = vpack.c.bf16 %v463, %v463
          %v496 = vpack.c.bf16 %v464, %v464
          %v497 = vpack.c.bf16 %v465, %v465
          %498 = vst [vmem:[#allocation4] sm:$0xf] %v466
          %499 = vst [vmem:[#allocation4 + $0x24] sm:$0xf] %v467
          %500 = vst [vmem:[#allocation4 + $0x48] sm:$0xf] %v468
          %501 = vst [vmem:[#allocation4 + $0x6c] sm:$0xf] %v469
          %502 = vst [vmem:[#allocation4 + $0x90] sm:$0xf] %v470
          %503 = vst [vmem:[#allocation4 + $0xb4] sm:$0xf] %v471
          %504 = vst [vmem:[#allocation4 + $0xd8] sm:$0xf] %v472
          %505 = vst [vmem:[#allocation4 + $0xfc] sm:$0xf] %v473
          %506 = vst [vmem:[#allocation4 + $0x120] sm:$0xf] %v474
          %507 = vst [vmem:[#allocation4 + $0x144] sm:$0xf] %v475
          %508 = vst [vmem:[#allocation4 + $0x168] sm:$0xf] %v476
          %509 = vst [vmem:[#allocation4 + $0x18c] sm:$0xf] %v477
          %510 = vst [vmem:[#allocation4 + $0x1b0] sm:$0xf] %v478
          %511 = vst [vmem:[#allocation4 + $0x1d4] sm:$0xf] %v479
          %512 = vst [vmem:[#allocation4 + $0x1f8] sm:$0xf] %v480
          %513 = vst [vmem:[#allocation4 + $0x21c] sm:$0xf] %v481
          %514 = vst [vmem:[#allocation4 + $0x240] sm:$0xf] %v482
          %515 = vst [vmem:[#allocation4 + $0x264] sm:$0xf] %v483
          %516 = vst [vmem:[#allocation4 + $0x288] sm:$0xf] %v484
          %517 = vst [vmem:[#allocation4 + $0x2ac] sm:$0xf] %v485
          %518 = vst [vmem:[#allocation4 + $0x2d0] sm:$0xf] %v486
          %519 = vst [vmem:[#allocation4 + $0x2f4] sm:$0xf] %v487
          %520 = vst [vmem:[#allocation4 + $0x318] sm:$0xf] %v488
          %521 = vst [vmem:[#allocation4 + $0x33c] sm:$0xf] %v489
          %522 = vst [vmem:[#allocation4 + $0x360] sm:$0xf] %v490
          %523 = vst [vmem:[#allocation4 + $0x384] sm:$0xf] %v491
          %524 = vst [vmem:[#allocation4 + $0x3a8] sm:$0xf] %v492
          %525 = vst [vmem:[#allocation4 + $0x3cc] sm:$0xf] %v493
          %526 = vst [vmem:[#allocation4 + $0x3f0] sm:$0xf] %v494
          %527 = vst [vmem:[#allocation4 + $0x414] sm:$0xf] %v495
          %528 = vst [vmem:[#allocation4 + $0x438] sm:$0xf] %v496
          %529 = vst [vmem:[#allocation4 + $0x45c] sm:$0xf] %v497
          %v530 = vld [vmem:[#allocation3 + $0x1] sm:$0xff]
          %v531 = vld [vmem:[#allocation3 + $0x9] sm:$0xff]
          %v532 = vld [vmem:[#allocation3 + $0x19] sm:$0xff]
          %v533 = vld [vmem:[#allocation3 + $0x21] sm:$0xff]
          %v534 = vld [vmem:[#allocation3 + $0x31] sm:$0xff]
          %v535 = vld [vmem:[#allocation3 + $0x39] sm:$0xff]
          %v536 = vld [vmem:[#allocation3 + $0x49] sm:$0xff]
          %v537 = vld [vmem:[#allocation3 + $0x51] sm:$0xff]
          %v538 = vld [vmem:[#allocation3 + $0x61] sm:$0xff]
          %v539 = vld [vmem:[#allocation3 + $0x69] sm:$0xff]
          %v540 = vld [vmem:[#allocation3 + $0x79] sm:$0xff]
          %v541 = vld [vmem:[#allocation3 + $0x81] sm:$0xff]
          %v542 = vld [vmem:[#allocation3 + $0x91] sm:$0xff]
          %v543 = vld [vmem:[#allocation3 + $0x99] sm:$0xff]
          %v544 = vld [vmem:[#allocation3 + $0xa9] sm:$0xff]
          %v545 = vld [vmem:[#allocation3 + $0xb1] sm:$0xff]
          %v546 = vld [vmem:[#allocation3 + $0xc1] sm:$0xff]
          %v547 = vld [vmem:[#allocation3 + $0xc9] sm:$0xff]
          %v548 = vld [vmem:[#allocation3 + $0xd9] sm:$0xff]
          %v549 = vld [vmem:[#allocation3 + $0xe1] sm:$0xff]
          %v550 = vld [vmem:[#allocation3 + $0xf1] sm:$0xff]
          %v551 = vld [vmem:[#allocation3 + $0xf9] sm:$0xff]
          %v552 = vld [vmem:[#allocation3 + $0x109] sm:$0xff]
          %v553 = vld [vmem:[#allocation3 + $0x111] sm:$0xff]
          %v554 = vld [vmem:[#allocation3 + $0x121] sm:$0xff]
          %v555 = vld [vmem:[#allocation3 + $0x129] sm:$0xff]
          %v556 = vld [vmem:[#allocation3 + $0x139] sm:$0xff]
          %v557 = vld [vmem:[#allocation3 + $0x141] sm:$0xff]
          %v558 = vld [vmem:[#allocation3 + $0x151] sm:$0xff]
          %v559 = vld [vmem:[#allocation3 + $0x159] sm:$0xff]
          %v560 = vld [vmem:[#allocation3 + $0x169] sm:$0xff]
          %v561 = vld [vmem:[#allocation3 + $0x171] sm:$0xff]
          %v562 = vpack.c.bf16 %v530, %v530
          %v563 = vpack.c.bf16 %v531, %v531
          %v564 = vpack.c.bf16 %v532, %v532
          %v565 = vpack.c.bf16 %v533, %v533
          %v566 = vpack.c.bf16 %v534, %v534
          %v567 = vpack.c.bf16 %v535, %v535
          %v568 = vpack.c.bf16 %v536, %v536
          %v569 = vpack.c.bf16 %v537, %v537
          %v570 = vpack.c.bf16 %v538, %v538
          %v571 = vpack.c.bf16 %v539, %v539
          %v572 = vpack.c.bf16 %v540, %v540
          %v573 = vpack.c.bf16 %v541, %v541
          %v574 = vpack.c.bf16 %v542, %v542
          %v575 = vpack.c.bf16 %v543, %v543
          %v576 = vpack.c.bf16 %v544, %v544
          %v577 = vpack.c.bf16 %v545, %v545
          %v578 = vpack.c.bf16 %v546, %v546
          %v579 = vpack.c.bf16 %v547, %v547
          %v580 = vpack.c.bf16 %v548, %v548
          %v581 = vpack.c.bf16 %v549, %v549
          %v582 = vpack.c.bf16 %v550, %v550
          %v583 = vpack.c.bf16 %v551, %v551
          %v584 = vpack.c.bf16 %v552, %v552
          %v585 = vpack.c.bf16 %v553, %v553
          %v586 = vpack.c.bf16 %v554, %v554
          %v587 = vpack.c.bf16 %v555, %v555
          %v588 = vpack.c.bf16 %v556, %v556
          %v589 = vpack.c.bf16 %v557, %v557
          %v590 = vpack.c.bf16 %v558, %v558
          %v591 = vpack.c.bf16 %v559, %v559
          %v592 = vpack.c.bf16 %v560, %v560
          %v593 = vpack.c.bf16 %v561, %v561
          %594 = vst [vmem:[#allocation4 + $0x4] sm:$0xf] %v562
          %595 = vst [vmem:[#allocation4 + $0x28] sm:$0xf] %v563
          %596 = vst [vmem:[#allocation4 + $0x4c] sm:$0xf] %v564
          %597 = vst [vmem:[#allocation4 + $0x70] sm:$0xf] %v565
          %598 = vst [vmem:[#allocation4 + $0x94] sm:$0xf] %v566
          %599 = vst [vmem:[#allocation4 + $0xb8] sm:$0xf] %v567
          %600 = vst [vmem:[#allocation4 + $0xdc] sm:$0xf] %v568
          %601 = vst [vmem:[#allocation4 + $0x100] sm:$0xf] %v569
          %602 = vst [vmem:[#allocation4 + $0x124] sm:$0xf] %v570
          %603 = vst [vmem:[#allocation4 + $0x148] sm:$0xf] %v571
          %604 = vst [vmem:[#allocation4 + $0x16c] sm:$0xf] %v572
          %605 = vst [vmem:[#allocation4 + $0x190] sm:$0xf] %v573
          %606 = vst [vmem:[#allocation4 + $0x1b4] sm:$0xf] %v574
          %607 = vst [vmem:[#allocation4 + $0x1d8] sm:$0xf] %v575
          %608 = vst [vmem:[#allocation4 + $0x1fc] sm:$0xf] %v576
          %609 = vst [vmem:[#allocation4 + $0x220] sm:$0xf] %v577
          %610 = vst [vmem:[#allocation4 + $0x244] sm:$0xf] %v578
          %611 = vst [vmem:[#allocation4 + $0x268] sm:$0xf] %v579
          %612 = vst [vmem:[#allocation4 + $0x28c] sm:$0xf] %v580
          %613 = vst [vmem:[#allocation4 + $0x2b0] sm:$0xf] %v581
          %614 = vst [vmem:[#allocation4 + $0x2d4] sm:$0xf] %v582
          %615 = vst [vmem:[#allocation4 + $0x2f8] sm:$0xf] %v583
          %616 = vst [vmem:[#allocation4 + $0x31c] sm:$0xf] %v584
          %617 = vst [vmem:[#allocation4 + $0x340] sm:$0xf] %v585
          %618 = vst [vmem:[#allocation4 + $0x364] sm:$0xf] %v586
          %619 = vst [vmem:[#allocation4 + $0x388] sm:$0xf] %v587
          %620 = vst [vmem:[#allocation4 + $0x3ac] sm:$0xf] %v588
          %621 = vst [vmem:[#allocation4 + $0x3d0] sm:$0xf] %v589
          %622 = vst [vmem:[#allocation4 + $0x3f4] sm:$0xf] %v590
          %623 = vst [vmem:[#allocation4 + $0x418] sm:$0xf] %v591
          %624 = vst [vmem:[#allocation4 + $0x43c] sm:$0xf] %v592
          %625 = vst [vmem:[#allocation4 + $0x460] sm:$0xf] %v593
          %v626 = vld [vmem:[#allocation3 + $0x2] sm:$0xff]
          %v627 = vld [vmem:[#allocation3 + $0xa] sm:$0xff]
          %v628 = vld [vmem:[#allocation3 + $0x1a] sm:$0xff]
          %v629 = vld [vmem:[#allocation3 + $0x22] sm:$0xff]
          %v630 = vld [vmem:[#allocation3 + $0x32] sm:$0xff]
          %v631 = vld [vmem:[#allocation3 + $0x3a] sm:$0xff]
          %v632 = vld [vmem:[#allocation3 + $0x4a] sm:$0xff]
          %v633 = vld [vmem:[#allocation3 + $0x52] sm:$0xff]
          %v634 = vld [vmem:[#allocation3 + $0x62] sm:$0xff]
          %v635 = vld [vmem:[#allocation3 + $0x6a] sm:$0xff]
          %v636 = vld [vmem:[#allocation3 + $0x7a] sm:$0xff]
          %v637 = vld [vmem:[#allocation3 + $0x82] sm:$0xff]
          %v638 = vld [vmem:[#allocation3 + $0x92] sm:$0xff]
          %v639 = vld [vmem:[#allocation3 + $0x9a] sm:$0xff]
          %v640 = vld [vmem:[#allocation3 + $0xaa] sm:$0xff]
          %v641 = vld [vmem:[#allocation3 + $0xb2] sm:$0xff]
          %v642 = vld [vmem:[#allocation3 + $0xc2] sm:$0xff]
          %v643 = vld [vmem:[#allocation3 + $0xca] sm:$0xff]
          %v644 = vld [vmem:[#allocation3 + $0xda] sm:$0xff]
          %v645 = vld [vmem:[#allocation3 + $0xe2] sm:$0xff]
          %v646 = vld [vmem:[#allocation3 + $0xf2] sm:$0xff]
          %v647 = vld [vmem:[#allocation3 + $0xfa] sm:$0xff]
          %v648 = vld [vmem:[#allocation3 + $0x10a] sm:$0xff]
          %v649 = vld [vmem:[#allocation3 + $0x112] sm:$0xff]
          %v650 = vld [vmem:[#allocation3 + $0x122] sm:$0xff]
          %v651 = vld [vmem:[#allocation3 + $0x12a] sm:$0xff]
          %v652 = vld [vmem:[#allocation3 + $0x13a] sm:$0xff]
          %v653 = vld [vmem:[#allocation3 + $0x142] sm:$0xff]
          %v654 = vld [vmem:[#allocation3 + $0x152] sm:$0xff]
          %v655 = vld [vmem:[#allocation3 + $0x15a] sm:$0xff]
          %v656 = vld [vmem:[#allocation3 + $0x16a] sm:$0xff]
          %v657 = vld [vmem:[#allocation3 + $0x172] sm:$0xff]
          %v658 = vpack.c.bf16 %v626, %v626
          %v659 = vpack.c.bf16 %v627, %v627
          %v660 = vpack.c.bf16 %v628, %v628
          %v661 = vpack.c.bf16 %v629, %v629
          %v662 = vpack.c.bf16 %v630, %v630
          %v663 = vpack.c.bf16 %v631, %v631
          %v664 = vpack.c.bf16 %v632, %v632
          %v665 = vpack.c.bf16 %v633, %v633
          %v666 = vpack.c.bf16 %v634, %v634
          %v667 = vpack.c.bf16 %v635, %v635
          %v668 = vpack.c.bf16 %v636, %v636
          %v669 = vpack.c.bf16 %v637, %v637
          %v670 = vpack.c.bf16 %v638, %v638
          %v671 = vpack.c.bf16 %v639, %v639
          %v672 = vpack.c.bf16 %v640, %v640
          %v673 = vpack.c.bf16 %v641, %v641
          %v674 = vpack.c.bf16 %v642, %v642
          %v675 = vpack.c.bf16 %v643, %v643
          %v676 = vpack.c.bf16 %v644, %v644
          %v677 = vpack.c.bf16 %v645, %v645
          %v678 = vpack.c.bf16 %v646, %v646
          %v679 = vpack.c.bf16 %v647, %v647
          %v680 = vpack.c.bf16 %v648, %v648
          %v681 = vpack.c.bf16 %v649, %v649
          %v682 = vpack.c.bf16 %v650, %v650
          %v683 = vpack.c.bf16 %v651, %v651
          %v684 = vpack.c.bf16 %v652, %v652
          %v685 = vpack.c.bf16 %v653, %v653
          %v686 = vpack.c.bf16 %v654, %v654
          %v687 = vpack.c.bf16 %v655, %v655
          %v688 = vpack.c.bf16 %v656, %v656
          %v689 = vpack.c.bf16 %v657, %v657
          %690 = vst [vmem:[#allocation4 + $0x8] sm:$0xf] %v658
          %691 = vst [vmem:[#allocation4 + $0x2c] sm:$0xf] %v659
          %692 = vst [vmem:[#allocation4 + $0x50] sm:$0xf] %v660
          %693 = vst [vmem:[#allocation4 + $0x74] sm:$0xf] %v661
          %694 = vst [vmem:[#allocation4 + $0x98] sm:$0xf] %v662
          %695 = vst [vmem:[#allocation4 + $0xbc] sm:$0xf] %v663
          %696 = vst [vmem:[#allocation4 + $0xe0] sm:$0xf] %v664
          %697 = vst [vmem:[#allocation4 + $0x104] sm:$0xf] %v665
          %698 = vst [vmem:[#allocation4 + $0x128] sm:$0xf] %v666
          %699 = vst [vmem:[#allocation4 + $0x14c] sm:$0xf] %v667
          %700 = vst [vmem:[#allocation4 + $0x170] sm:$0xf] %v668
          %701 = vst [vmem:[#allocation4 + $0x194] sm:$0xf] %v669
          %702 = vst [vmem:[#allocation4 + $0x1b8] sm:$0xf] %v670
          %703 = vst [vmem:[#allocation4 + $0x1dc] sm:$0xf] %v671
          %704 = vst [vmem:[#allocation4 + $0x200] sm:$0xf] %v672
          %705 = vst [vmem:[#allocation4 + $0x224] sm:$0xf] %v673
          %706 = vst [vmem:[#allocation4 + $0x248] sm:$0xf] %v674
          %707 = vst [vmem:[#allocation4 + $0x26c] sm:$0xf] %v675
          %708 = vst [vmem:[#allocation4 + $0x290] sm:$0xf] %v676
          %709 = vst [vmem:[#allocation4 + $0x2b4] sm:$0xf] %v677
          %710 = vst [vmem:[#allocation4 + $0x2d8] sm:$0xf] %v678
          %711 = vst [vmem:[#allocation4 + $0x2fc] sm:$0xf] %v679
          %712 = vst [vmem:[#allocation4 + $0x320] sm:$0xf] %v680
          %713 = vst [vmem:[#allocation4 + $0x344] sm:$0xf] %v681
          %714 = vst [vmem:[#allocation4 + $0x368] sm:$0xf] %v682
          %715 = vst [vmem:[#allocation4 + $0x38c] sm:$0xf] %v683
          %716 = vst [vmem:[#allocation4 + $0x3b0] sm:$0xf] %v684
          %717 = vst [vmem:[#allocation4 + $0x3d4] sm:$0xf] %v685
          %718 = vst [vmem:[#allocation4 + $0x3f8] sm:$0xf] %v686
          %719 = vst [vmem:[#allocation4 + $0x41c] sm:$0xf] %v687
          %720 = vst [vmem:[#allocation4 + $0x440] sm:$0xf] %v688
          %721 = vst [vmem:[#allocation4 + $0x464] sm:$0xf] %v689
          %v722 = vld [vmem:[%s401] sm:$0xff]
          %v723 = vld [vmem:[%s401 + $0x8] sm:$0xff]
          %v724 = vld [vmem:[%s401 + $0x18] sm:$0xff]
          %v725 = vld [vmem:[%s401 + $0x20] sm:$0xff]
          %v726 = vld [vmem:[%s401 + $0x30] sm:$0xff]
          %v727 = vld [vmem:[%s401 + $0x38] sm:$0xff]
          %v728 = vld [vmem:[%s401 + $0x48] sm:$0xff]
          %v729 = vld [vmem:[%s401 + $0x50] sm:$0xff]
          %v730 = vld [vmem:[%s401 + $0x60] sm:$0xff]
          %v731 = vld [vmem:[%s401 + $0x68] sm:$0xff]
          %v732 = vld [vmem:[%s401 + $0x78] sm:$0xff]
          %v733 = vld [vmem:[%s401 + $0x80] sm:$0xff]
          %v734 = vld [vmem:[%s401 + $0x90] sm:$0xff]
          %v735 = vld [vmem:[%s401 + $0x98] sm:$0xff]
          %v736 = vld [vmem:[%s401 + $0xa8] sm:$0xff]
          %v737 = vld [vmem:[%s401 + $0xb0] sm:$0xff]
          %v738 = vld [vmem:[%s401 + $0xc0] sm:$0xff]
          %v739 = vld [vmem:[%s401 + $0xc8] sm:$0xff]
          %v740 = vld [vmem:[%s401 + $0xd8] sm:$0xff]
          %v741 = vld [vmem:[%s401 + $0xe0] sm:$0xff]
          %v742 = vld [vmem:[%s401 + $0xf0] sm:$0xff]
          %v743 = vld [vmem:[%s401 + $0xf8] sm:$0xff]
          %v744 = vld [vmem:[%s401 + $0x108] sm:$0xff]
          %v745 = vld [vmem:[%s401 + $0x110] sm:$0xff]
          %v746 = vld [vmem:[%s401 + $0x120] sm:$0xff]
          %v747 = vld [vmem:[%s401 + $0x128] sm:$0xff]
          %v748 = vld [vmem:[%s401 + $0x138] sm:$0xff]
          %v749 = vld [vmem:[%s401 + $0x140] sm:$0xff]
          %v750 = vld [vmem:[%s401 + $0x150] sm:$0xff]
          %v751 = vld [vmem:[%s401 + $0x158] sm:$0xff]
          %v752 = vld [vmem:[%s401 + $0x168] sm:$0xff]
          %v753 = vld [vmem:[%s401 + $0x170] sm:$0xff]
          %v754 = vpack.c.bf16 %v722, %v722
          %v755 = vpack.c.bf16 %v723, %v723
          %v756 = vpack.c.bf16 %v724, %v724
          %v757 = vpack.c.bf16 %v725, %v725
          %v758 = vpack.c.bf16 %v726, %v726
          %v759 = vpack.c.bf16 %v727, %v727
          %v760 = vpack.c.bf16 %v728, %v728
          %v761 = vpack.c.bf16 %v729, %v729
          %v762 = vpack.c.bf16 %v730, %v730
          %v763 = vpack.c.bf16 %v731, %v731
          %v764 = vpack.c.bf16 %v732, %v732
          %v765 = vpack.c.bf16 %v733, %v733
          %v766 = vpack.c.bf16 %v734, %v734
          %v767 = vpack.c.bf16 %v735, %v735
          %v768 = vpack.c.bf16 %v736, %v736
          %v769 = vpack.c.bf16 %v737, %v737
          %v770 = vpack.c.bf16 %v738, %v738
          %v771 = vpack.c.bf16 %v739, %v739
          %v772 = vpack.c.bf16 %v740, %v740
          %v773 = vpack.c.bf16 %v741, %v741
          %v774 = vpack.c.bf16 %v742, %v742
          %v775 = vpack.c.bf16 %v743, %v743
          %v776 = vpack.c.bf16 %v744, %v744
          %v777 = vpack.c.bf16 %v745, %v745
          %v778 = vpack.c.bf16 %v746, %v746
          %v779 = vpack.c.bf16 %v747, %v747
          %v780 = vpack.c.bf16 %v748, %v748
          %v781 = vpack.c.bf16 %v749, %v749
          %v782 = vpack.c.bf16 %v750, %v750
          %v783 = vpack.c.bf16 %v751, %v751
          %v784 = vpack.c.bf16 %v752, %v752
          %v785 = vpack.c.bf16 %v753, %v753
          %786 = vst [vmem:[#allocation4 + $0xc] sm:$0xf] %v754
          %787 = vst [vmem:[#allocation4 + $0x30] sm:$0xf] %v755
          %788 = vst [vmem:[#allocation4 + $0x54] sm:$0xf] %v756
          %789 = vst [vmem:[#allocation4 + $0x78] sm:$0xf] %v757
          %790 = vst [vmem:[#allocation4 + $0x9c] sm:$0xf] %v758
          %791 = vst [vmem:[#allocation4 + $0xc0] sm:$0xf] %v759
          %792 = vst [vmem:[#allocation4 + $0xe4] sm:$0xf] %v760
          %793 = vst [vmem:[#allocation4 + $0x108] sm:$0xf] %v761
          %794 = vst [vmem:[#allocation4 + $0x12c] sm:$0xf] %v762
          %795 = vst [vmem:[#allocation4 + $0x150] sm:$0xf] %v763
          %796 = vst [vmem:[#allocation4 + $0x174] sm:$0xf] %v764
          %797 = vst [vmem:[#allocation4 + $0x198] sm:$0xf] %v765
          %798 = vst [vmem:[#allocation4 + $0x1bc] sm:$0xf] %v766
          %799 = vst [vmem:[#allocation4 + $0x1e0] sm:$0xf] %v767
          %800 = vst [vmem:[#allocation4 + $0x204] sm:$0xf] %v768
          %801 = vst [vmem:[#allocation4 + $0x228] sm:$0xf] %v769
          %802 = vst [vmem:[#allocation4 + $0x24c] sm:$0xf] %v770
          %803 = vst [vmem:[#allocation4 + $0x270] sm:$0xf] %v771
          %804 = vst [vmem:[#allocation4 + $0x294] sm:$0xf] %v772
          %805 = vst [vmem:[#allocation4 + $0x2b8] sm:$0xf] %v773
          %806 = vst [vmem:[#allocation4 + $0x2dc] sm:$0xf] %v774
          %807 = vst [vmem:[#allocation4 + $0x300] sm:$0xf] %v775
          %808 = vst [vmem:[#allocation4 + $0x324] sm:$0xf] %v776
          %809 = vst [vmem:[#allocation4 + $0x348] sm:$0xf] %v777
          %810 = vst [vmem:[#allocation4 + $0x36c] sm:$0xf] %v778
          %811 = vst [vmem:[#allocation4 + $0x390] sm:$0xf] %v779
          %812 = vst [vmem:[#allocation4 + $0x3b4] sm:$0xf] %v780
          %813 = vst [vmem:[#allocation4 + $0x3d8] sm:$0xf] %v781
          %814 = vst [vmem:[#allocation4 + $0x3fc] sm:$0xf] %v782
          %815 = vst [vmem:[#allocation4 + $0x420] sm:$0xf] %v783
          %816 = vst [vmem:[#allocation4 + $0x444] sm:$0xf] %v784
          %817 = vst [vmem:[#allocation4 + $0x468] sm:$0xf] %v785
          %v818 = vld [vmem:[%s401 + $0x1] sm:$0xff]
          %v819 = vld [vmem:[%s401 + $0x9] sm:$0xff]
          %v820 = vld [vmem:[%s401 + $0x19] sm:$0xff]
          %v821 = vld [vmem:[%s401 + $0x21] sm:$0xff]
          %v822 = vld [vmem:[%s401 + $0x31] sm:$0xff]
          %v823 = vld [vmem:[%s401 + $0x39] sm:$0xff]
          %v824 = vld [vmem:[%s401 + $0x49] sm:$0xff]
          %v825 = vld [vmem:[%s401 + $0x51] sm:$0xff]
          %v826 = vld [vmem:[%s401 + $0x61] sm:$0xff]
          %v827 = vld [vmem:[%s401 + $0x69] sm:$0xff]
          %v828 = vld [vmem:[%s401 + $0x79] sm:$0xff]
          %v829 = vld [vmem:[%s401 + $0x81] sm:$0xff]
          %v830 = vld [vmem:[%s401 + $0x91] sm:$0xff]
          %v831 = vld [vmem:[%s401 + $0x99] sm:$0xff]
          %v832 = vld [vmem:[%s401 + $0xa9] sm:$0xff]
          %v833 = vld [vmem:[%s401 + $0xb1] sm:$0xff]
          %v834 = vld [vmem:[%s401 + $0xc1] sm:$0xff]
          %v835 = vld [vmem:[%s401 + $0xc9] sm:$0xff]
          %v836 = vld [vmem:[%s401 + $0xd9] sm:$0xff]
          %v837 = vld [vmem:[%s401 + $0xe1] sm:$0xff]
          %v838 = vld [vmem:[%s401 + $0xf1] sm:$0xff]
          %v839 = vld [vmem:[%s401 + $0xf9] sm:$0xff]
          %v840 = vld [vmem:[%s401 + $0x109] sm:$0xff]
          %v841 = vld [vmem:[%s401 + $0x111] sm:$0xff]
          %v842 = vld [vmem:[%s401 + $0x121] sm:$0xff]
          %v843 = vld [vmem:[%s401 + $0x129] sm:$0xff]
          %v844 = vld [vmem:[%s401 + $0x139] sm:$0xff]
          %v845 = vld [vmem:[%s401 + $0x141] sm:$0xff]
          %v846 = vld [vmem:[%s401 + $0x151] sm:$0xff]
          %v847 = vld [vmem:[%s401 + $0x159] sm:$0xff]
          %v848 = vld [vmem:[%s401 + $0x169] sm:$0xff]
          %v849 = vld [vmem:[%s401 + $0x171] sm:$0xff]
          %v850 = vpack.c.bf16 %v818, %v818
          %v851 = vpack.c.bf16 %v819, %v819
          %v852 = vpack.c.bf16 %v820, %v820
          %v853 = vpack.c.bf16 %v821, %v821
          %v854 = vpack.c.bf16 %v822, %v822
          %v855 = vpack.c.bf16 %v823, %v823
          %v856 = vpack.c.bf16 %v824, %v824
          %v857 = vpack.c.bf16 %v825, %v825
          %v858 = vpack.c.bf16 %v826, %v826
          %v859 = vpack.c.bf16 %v827, %v827
          %v860 = vpack.c.bf16 %v828, %v828
          %v861 = vpack.c.bf16 %v829, %v829
          %v862 = vpack.c.bf16 %v830, %v830
          %v863 = vpack.c.bf16 %v831, %v831
          %v864 = vpack.c.bf16 %v832, %v832
          %v865 = vpack.c.bf16 %v833, %v833
          %v866 = vpack.c.bf16 %v834, %v834
          %v867 = vpack.c.bf16 %v835, %v835
          %v868 = vpack.c.bf16 %v836, %v836
          %v869 = vpack.c.bf16 %v837, %v837
          %v870 = vpack.c.bf16 %v838, %v838
          %v871 = vpack.c.bf16 %v839, %v839
          %v872 = vpack.c.bf16 %v840, %v840
          %v873 = vpack.c.bf16 %v841, %v841
          %v874 = vpack.c.bf16 %v842, %v842
          %v875 = vpack.c.bf16 %v843, %v843
          %v876 = vpack.c.bf16 %v844, %v844
          %v877 = vpack.c.bf16 %v845, %v845
          %v878 = vpack.c.bf16 %v846, %v846
          %v879 = vpack.c.bf16 %v847, %v847
          %v880 = vpack.c.bf16 %v848, %v848
          %v881 = vpack.c.bf16 %v849, %v849
          %882 = vst [vmem:[#allocation4 + $0x10] sm:$0xf] %v850
          %883 = vst [vmem:[#allocation4 + $0x34] sm:$0xf] %v851
          %884 = vst [vmem:[#allocation4 + $0x58] sm:$0xf] %v852
          %885 = vst [vmem:[#allocation4 + $0x7c] sm:$0xf] %v853
          %886 = vst [vmem:[#allocation4 + $0xa0] sm:$0xf] %v854
          %887 = vst [vmem:[#allocation4 + $0xc4] sm:$0xf] %v855
          %888 = vst [vmem:[#allocation4 + $0xe8] sm:$0xf] %v856
          %889 = vst [vmem:[#allocation4 + $0x10c] sm:$0xf] %v857
          %890 = vst [vmem:[#allocation4 + $0x130] sm:$0xf] %v858
          %891 = vst [vmem:[#allocation4 + $0x154] sm:$0xf] %v859
          %892 = vst [vmem:[#allocation4 + $0x178] sm:$0xf] %v860
          %893 = vst [vmem:[#allocation4 + $0x19c] sm:$0xf] %v861
          %894 = vst [vmem:[#allocation4 + $0x1c0] sm:$0xf] %v862
          %895 = vst [vmem:[#allocation4 + $0x1e4] sm:$0xf] %v863
          %896 = vst [vmem:[#allocation4 + $0x208] sm:$0xf] %v864
          %897 = vst [vmem:[#allocation4 + $0x22c] sm:$0xf] %v865
          %898 = vst [vmem:[#allocation4 + $0x250] sm:$0xf] %v866
          %899 = vst [vmem:[#allocation4 + $0x274] sm:$0xf] %v867
          %900 = vst [vmem:[#allocation4 + $0x298] sm:$0xf] %v868
          %901 = vst [vmem:[#allocation4 + $0x2bc] sm:$0xf] %v869
          %902 = vst [vmem:[#allocation4 + $0x2e0] sm:$0xf] %v870
          %903 = vst [vmem:[#allocation4 + $0x304] sm:$0xf] %v871
          %904 = vst [vmem:[#allocation4 + $0x328] sm:$0xf] %v872
          %905 = vst [vmem:[#allocation4 + $0x34c] sm:$0xf] %v873
          %906 = vst [vmem:[#allocation4 + $0x370] sm:$0xf] %v874
          %907 = vst [vmem:[#allocation4 + $0x394] sm:$0xf] %v875
          %908 = vst [vmem:[#allocation4 + $0x3b8] sm:$0xf] %v876
          %909 = vst [vmem:[#allocation4 + $0x3dc] sm:$0xf] %v877
          %910 = vst [vmem:[#allocation4 + $0x400] sm:$0xf] %v878
          %911 = vst [vmem:[#allocation4 + $0x424] sm:$0xf] %v879
          %912 = vst [vmem:[#allocation4 + $0x448] sm:$0xf] %v880
          %913 = vst [vmem:[#allocation4 + $0x46c] sm:$0xf] %v881
          %v914 = vld [vmem:[%s401 + $0x2] sm:$0xff]
          %v915 = vld [vmem:[%s401 + $0xa] sm:$0xff]
          %v916 = vld [vmem:[%s401 + $0x1a] sm:$0xff]
          %v917 = vld [vmem:[%s401 + $0x22] sm:$0xff]
          %v918 = vld [vmem:[%s401 + $0x32] sm:$0xff]
          %v919 = vld [vmem:[%s401 + $0x3a] sm:$0xff]
          %v920 = vld [vmem:[%s401 + $0x4a] sm:$0xff]
          %v921 = vld [vmem:[%s401 + $0x52] sm:$0xff]
          %v922 = vld [vmem:[%s401 + $0x62] sm:$0xff]
          %v923 = vld [vmem:[%s401 + $0x6a] sm:$0xff]
          %v924 = vld [vmem:[%s401 + $0x7a] sm:$0xff]
          %v925 = vld [vmem:[%s401 + $0x82] sm:$0xff]
          %v926 = vld [vmem:[%s401 + $0x92] sm:$0xff]
          %v927 = vld [vmem:[%s401 + $0x9a] sm:$0xff]
          %v928 = vld [vmem:[%s401 + $0xaa] sm:$0xff]
          %v929 = vld [vmem:[%s401 + $0xb2] sm:$0xff]
          %v930 = vld [vmem:[%s401 + $0xc2] sm:$0xff]
          %v931 = vld [vmem:[%s401 + $0xca] sm:$0xff]
          %v932 = vld [vmem:[%s401 + $0xda] sm:$0xff]
          %v933 = vld [vmem:[%s401 + $0xe2] sm:$0xff]
          %v934 = vld [vmem:[%s401 + $0xf2] sm:$0xff]
          %v935 = vld [vmem:[%s401 + $0xfa] sm:$0xff]
          %v936 = vld [vmem:[%s401 + $0x10a] sm:$0xff]
          %v937 = vld [vmem:[%s401 + $0x112] sm:$0xff]
          %v938 = vld [vmem:[%s401 + $0x122] sm:$0xff]
          %v939 = vld [vmem:[%s401 + $0x12a] sm:$0xff]
          %v940 = vld [vmem:[%s401 + $0x13a] sm:$0xff]
          %v941 = vld [vmem:[%s401 + $0x142] sm:$0xff]
          %v942 = vld [vmem:[%s401 + $0x152] sm:$0xff]
          %v943 = vld [vmem:[%s401 + $0x15a] sm:$0xff]
          %v944 = vld [vmem:[%s401 + $0x16a] sm:$0xff]
          %v945 = vld [vmem:[%s401 + $0x172] sm:$0xff]
          %v946 = vpack.c.bf16 %v914, %v914
          %v947 = vpack.c.bf16 %v915, %v915
          %v948 = vpack.c.bf16 %v916, %v916
          %v949 = vpack.c.bf16 %v917, %v917
          %v950 = vpack.c.bf16 %v918, %v918
          %v951 = vpack.c.bf16 %v919, %v919
          %v952 = vpack.c.bf16 %v920, %v920
          %v953 = vpack.c.bf16 %v921, %v921
          %v954 = vpack.c.bf16 %v922, %v922
          %v955 = vpack.c.bf16 %v923, %v923
          %v956 = vpack.c.bf16 %v924, %v924
          %v957 = vpack.c.bf16 %v925, %v925
          %v958 = vpack.c.bf16 %v926, %v926
          %v959 = vpack.c.bf16 %v927, %v927
          %v960 = vpack.c.bf16 %v928, %v928
          %v961 = vpack.c.bf16 %v929, %v929
          %v962 = vpack.c.bf16 %v930, %v930
          %v963 = vpack.c.bf16 %v931, %v931
          %v964 = vpack.c.bf16 %v932, %v932
          %v965 = vpack.c.bf16 %v933, %v933
          %v966 = vpack.c.bf16 %v934, %v934
          %v967 = vpack.c.bf16 %v935, %v935
          %v968 = vpack.c.bf16 %v936, %v936
          %v969 = vpack.c.bf16 %v937, %v937
          %v970 = vpack.c.bf16 %v938, %v938
          %v971 = vpack.c.bf16 %v939, %v939
          %v972 = vpack.c.bf16 %v940, %v940
          %v973 = vpack.c.bf16 %v941, %v941
          %v974 = vpack.c.bf16 %v942, %v942
          %v975 = vpack.c.bf16 %v943, %v943
          %v976 = vpack.c.bf16 %v944, %v944
          %v977 = vpack.c.bf16 %v945, %v945
          %978 = vst [vmem:[#allocation4 + $0x14] sm:$0xf] %v946
          %979 = vst [vmem:[#allocation4 + $0x38] sm:$0xf] %v947
          %980 = vst [vmem:[#allocation4 + $0x5c] sm:$0xf] %v948
          %981 = vst [vmem:[#allocation4 + $0x80] sm:$0xf] %v949
          %982 = vst [vmem:[#allocation4 + $0xa4] sm:$0xf] %v950
          %983 = vst [vmem:[#allocation4 + $0xc8] sm:$0xf] %v951
          %984 = vst [vmem:[#allocation4 + $0xec] sm:$0xf] %v952
          %985 = vst [vmem:[#allocation4 + $0x110] sm:$0xf] %v953
          %986 = vst [vmem:[#allocation4 + $0x134] sm:$0xf] %v954
          %987 = vst [vmem:[#allocation4 + $0x158] sm:$0xf] %v955
          %988 = vst [vmem:[#allocation4 + $0x17c] sm:$0xf] %v956
          %989 = vst [vmem:[#allocation4 + $0x1a0] sm:$0xf] %v957
          %990 = vst [vmem:[#allocation4 + $0x1c4] sm:$0xf] %v958
          %991 = vst [vmem:[#allocation4 + $0x1e8] sm:$0xf] %v959
          %992 = vst [vmem:[#allocation4 + $0x20c] sm:$0xf] %v960
          %993 = vst [vmem:[#allocation4 + $0x230] sm:$0xf] %v961
          %994 = vst [vmem:[#allocation4 + $0x254] sm:$0xf] %v962
          %995 = vst [vmem:[#allocation4 + $0x278] sm:$0xf] %v963
          %996 = vst [vmem:[#allocation4 + $0x29c] sm:$0xf] %v964
          %997 = vst [vmem:[#allocation4 + $0x2c0] sm:$0xf] %v965
          %998 = vst [vmem:[#allocation4 + $0x2e4] sm:$0xf] %v966
          %999 = vst [vmem:[#allocation4 + $0x308] sm:$0xf] %v967
          %1000 = vst [vmem:[#allocation4 + $0x32c] sm:$0xf] %v968
          %1001 = vst [vmem:[#allocation4 + $0x350] sm:$0xf] %v969
          %1002 = vst [vmem:[#allocation4 + $0x374] sm:$0xf] %v970
          %1003 = vst [vmem:[#allocation4 + $0x398] sm:$0xf] %v971
          %1004 = vst [vmem:[#allocation4 + $0x3bc] sm:$0xf] %v972
          %1005 = vst [vmem:[#allocation4 + $0x3e0] sm:$0xf] %v973
          %1006 = vst [vmem:[#allocation4 + $0x404] sm:$0xf] %v974
          %1007 = vst [vmem:[#allocation4 + $0x428] sm:$0xf] %v975
          %1008 = vst [vmem:[#allocation4 + $0x44c] sm:$0xf] %v976
          %1009 = vst [vmem:[#allocation4 + $0x470] sm:$0xf] %v977
          %s1010 = scalar_lea.vmem [#allocation3], 48
          %v1011 = vld [vmem:[%s1010] sm:$0xff]
          %v1012 = vld [vmem:[%s1010 + $0x8] sm:$0xff]
          %v1013 = vld [vmem:[%s1010 + $0x18] sm:$0xff]
          %v1014 = vld [vmem:[%s1010 + $0x20] sm:$0xff]
          %v1015 = vld [vmem:[%s1010 + $0x30] sm:$0xff]
          %v1016 = vld [vmem:[%s1010 + $0x38] sm:$0xff]
          %v1017 = vld [vmem:[%s1010 + $0x48] sm:$0xff]
          %v1018 = vld [vmem:[%s1010 + $0x50] sm:$0xff]
          %v1019 = vld [vmem:[%s1010 + $0x60] sm:$0xff]
          %v1020 = vld [vmem:[%s1010 + $0x68] sm:$0xff]
          %v1021 = vld [vmem:[%s1010 + $0x78] sm:$0xff]
          %v1022 = vld [vmem:[%s1010 + $0x80] sm:$0xff]
          %v1023 = vld [vmem:[%s1010 + $0x90] sm:$0xff]
          %v1024 = vld [vmem:[%s1010 + $0x98] sm:$0xff]
          %v1025 = vld [vmem:[%s1010 + $0xa8] sm:$0xff]
          %v1026 = vld [vmem:[%s1010 + $0xb0] sm:$0xff]
          %v1027 = vld [vmem:[%s1010 + $0xc0] sm:$0xff]
          %v1028 = vld [vmem:[%s1010 + $0xc8] sm:$0xff]
          %v1029 = vld [vmem:[%s1010 + $0xd8] sm:$0xff]
          %v1030 = vld [vmem:[%s1010 + $0xe0] sm:$0xff]
          %v1031 = vld [vmem:[%s1010 + $0xf0] sm:$0xff]
          %v1032 = vld [vmem:[%s1010 + $0xf8] sm:$0xff]
          %v1033 = vld [vmem:[%s1010 + $0x108] sm:$0xff]
          %v1034 = vld [vmem:[%s1010 + $0x110] sm:$0xff]
          %v1035 = vld [vmem:[%s1010 + $0x120] sm:$0xff]
          %v1036 = vld [vmem:[%s1010 + $0x128] sm:$0xff]
          %v1037 = vld [vmem:[%s1010 + $0x138] sm:$0xff]
          %v1038 = vld [vmem:[%s1010 + $0x140] sm:$0xff]
          %v1039 = vld [vmem:[%s1010 + $0x150] sm:$0xff]
          %v1040 = vld [vmem:[%s1010 + $0x158] sm:$0xff]
          %v1041 = vld [vmem:[%s1010 + $0x168] sm:$0xff]
          %v1042 = vld [vmem:[%s1010 + $0x170] sm:$0xff]
          %v1043 = vpack.c.bf16 %v1011, %v1011
          %v1044 = vpack.c.bf16 %v1012, %v1012
          %v1045 = vpack.c.bf16 %v1013, %v1013
          %v1046 = vpack.c.bf16 %v1014, %v1014
          %v1047 = vpack.c.bf16 %v1015, %v1015
          %v1048 = vpack.c.bf16 %v1016, %v1016
          %v1049 = vpack.c.bf16 %v1017, %v1017
          %v1050 = vpack.c.bf16 %v1018, %v1018
          %v1051 = vpack.c.bf16 %v1019, %v1019
          %v1052 = vpack.c.bf16 %v1020, %v1020
          %v1053 = vpack.c.bf16 %v1021, %v1021
          %v1054 = vpack.c.bf16 %v1022, %v1022
          %v1055 = vpack.c.bf16 %v1023, %v1023
          %v1056 = vpack.c.bf16 %v1024, %v1024
          %v1057 = vpack.c.bf16 %v1025, %v1025
          %v1058 = vpack.c.bf16 %v1026, %v1026
          %v1059 = vpack.c.bf16 %v1027, %v1027
          %v1060 = vpack.c.bf16 %v1028, %v1028
          %v1061 = vpack.c.bf16 %v1029, %v1029
          %v1062 = vpack.c.bf16 %v1030, %v1030
          %v1063 = vpack.c.bf16 %v1031, %v1031
          %v1064 = vpack.c.bf16 %v1032, %v1032
          %v1065 = vpack.c.bf16 %v1033, %v1033
          %v1066 = vpack.c.bf16 %v1034, %v1034
          %v1067 = vpack.c.bf16 %v1035, %v1035
          %v1068 = vpack.c.bf16 %v1036, %v1036
          %v1069 = vpack.c.bf16 %v1037, %v1037
          %v1070 = vpack.c.bf16 %v1038, %v1038
          %v1071 = vpack.c.bf16 %v1039, %v1039
          %v1072 = vpack.c.bf16 %v1040, %v1040
          %v1073 = vpack.c.bf16 %v1041, %v1041
          %v1074 = vpack.c.bf16 %v1042, %v1042
          %1075 = vst [vmem:[#allocation4 + $0x18] sm:$0xf] %v1043
          %1076 = vst [vmem:[#allocation4 + $0x3c] sm:$0xf] %v1044
          %1077 = vst [vmem:[#allocation4 + $0x60] sm:$0xf] %v1045
          %1078 = vst [vmem:[#allocation4 + $0x84] sm:$0xf] %v1046
          %1079 = vst [vmem:[#allocation4 + $0xa8] sm:$0xf] %v1047
          %1080 = vst [vmem:[#allocation4 + $0xcc] sm:$0xf] %v1048
          %1081 = vst [vmem:[#allocation4 + $0xf0] sm:$0xf] %v1049
          %1082 = vst [vmem:[#allocation4 + $0x114] sm:$0xf] %v1050
          %1083 = vst [vmem:[#allocation4 + $0x138] sm:$0xf] %v1051
          %1084 = vst [vmem:[#allocation4 + $0x15c] sm:$0xf] %v1052
          %1085 = vst [vmem:[#allocation4 + $0x180] sm:$0xf] %v1053
          %1086 = vst [vmem:[#allocation4 + $0x1a4] sm:$0xf] %v1054
          %1087 = vst [vmem:[#allocation4 + $0x1c8] sm:$0xf] %v1055
          %1088 = vst [vmem:[#allocation4 + $0x1ec] sm:$0xf] %v1056
          %1089 = vst [vmem:[#allocation4 + $0x210] sm:$0xf] %v1057
          %1090 = vst [vmem:[#allocation4 + $0x234] sm:$0xf] %v1058
          %1091 = vst [vmem:[#allocation4 + $0x258] sm:$0xf] %v1059
          %1092 = vst [vmem:[#allocation4 + $0x27c] sm:$0xf] %v1060
          %1093 = vst [vmem:[#allocation4 + $0x2a0] sm:$0xf] %v1061
          %1094 = vst [vmem:[#allocation4 + $0x2c4] sm:$0xf] %v1062
          %1095 = vst [vmem:[#allocation4 + $0x2e8] sm:$0xf] %v1063
          %1096 = vst [vmem:[#allocation4 + $0x30c] sm:$0xf] %v1064
          %1097 = vst [vmem:[#allocation4 + $0x330] sm:$0xf] %v1065
          %1098 = vst [vmem:[#allocation4 + $0x354] sm:$0xf] %v1066
          %1099 = vst [vmem:[#allocation4 + $0x378] sm:$0xf] %v1067
          %1100 = vst [vmem:[#allocation4 + $0x39c] sm:$0xf] %v1068
          %1101 = vst [vmem:[#allocation4 + $0x3c0] sm:$0xf] %v1069
          %1102 = vst [vmem:[#allocation4 + $0x3e4] sm:$0xf] %v1070
          %1103 = vst [vmem:[#allocation4 + $0x408] sm:$0xf] %v1071
          %1104 = vst [vmem:[#allocation4 + $0x42c] sm:$0xf] %v1072
          %1105 = vst [vmem:[#allocation4 + $0x450] sm:$0xf] %v1073
          %1106 = vst [vmem:[#allocation4 + $0x474] sm:$0xf] %v1074
          %v1107 = vld [vmem:[%s1010 + $0x1] sm:$0xff]
          %v1108 = vld [vmem:[%s1010 + $0x9] sm:$0xff]
          %v1109 = vld [vmem:[%s1010 + $0x19] sm:$0xff]
          %v1110 = vld [vmem:[%s1010 + $0x21] sm:$0xff]
          %v1111 = vld [vmem:[%s1010 + $0x31] sm:$0xff]
          %v1112 = vld [vmem:[%s1010 + $0x39] sm:$0xff]
          %v1113 = vld [vmem:[%s1010 + $0x49] sm:$0xff]
          %v1114 = vld [vmem:[%s1010 + $0x51] sm:$0xff]
          %v1115 = vld [vmem:[%s1010 + $0x61] sm:$0xff]
          %v1116 = vld [vmem:[%s1010 + $0x69] sm:$0xff]
          %v1117 = vld [vmem:[%s1010 + $0x79] sm:$0xff]
          %v1118 = vld [vmem:[%s1010 + $0x81] sm:$0xff]
          %v1119 = vld [vmem:[%s1010 + $0x91] sm:$0xff]
          %v1120 = vld [vmem:[%s1010 + $0x99] sm:$0xff]
          %v1121 = vld [vmem:[%s1010 + $0xa9] sm:$0xff]
          %v1122 = vld [vmem:[%s1010 + $0xb1] sm:$0xff]
          %v1123 = vld [vmem:[%s1010 + $0xc1] sm:$0xff]
          %v1124 = vld [vmem:[%s1010 + $0xc9] sm:$0xff]
          %v1125 = vld [vmem:[%s1010 + $0xd9] sm:$0xff]
          %v1126 = vld [vmem:[%s1010 + $0xe1] sm:$0xff]
          %v1127 = vld [vmem:[%s1010 + $0xf1] sm:$0xff]
          %v1128 = vld [vmem:[%s1010 + $0xf9] sm:$0xff]
          %v1129 = vld [vmem:[%s1010 + $0x109] sm:$0xff]
          %v1130 = vld [vmem:[%s1010 + $0x111] sm:$0xff]
          %v1131 = vld [vmem:[%s1010 + $0x121] sm:$0xff]
          %v1132 = vld [vmem:[%s1010 + $0x129] sm:$0xff]
          %v1133 = vld [vmem:[%s1010 + $0x139] sm:$0xff]
          %v1134 = vld [vmem:[%s1010 + $0x141] sm:$0xff]
          %v1135 = vld [vmem:[%s1010 + $0x151] sm:$0xff]
          %v1136 = vld [vmem:[%s1010 + $0x159] sm:$0xff]
          %v1137 = vld [vmem:[%s1010 + $0x169] sm:$0xff]
          %v1138 = vld [vmem:[%s1010 + $0x171] sm:$0xff]
          %v1139 = vpack.c.bf16 %v1107, %v1107
          %v1140 = vpack.c.bf16 %v1108, %v1108
          %v1141 = vpack.c.bf16 %v1109, %v1109
          %v1142 = vpack.c.bf16 %v1110, %v1110
          %v1143 = vpack.c.bf16 %v1111, %v1111
          %v1144 = vpack.c.bf16 %v1112, %v1112
          %v1145 = vpack.c.bf16 %v1113, %v1113
          %v1146 = vpack.c.bf16 %v1114, %v1114
          %v1147 = vpack.c.bf16 %v1115, %v1115
          %v1148 = vpack.c.bf16 %v1116, %v1116
          %v1149 = vpack.c.bf16 %v1117, %v1117
          %v1150 = vpack.c.bf16 %v1118, %v1118
          %v1151 = vpack.c.bf16 %v1119, %v1119
          %v1152 = vpack.c.bf16 %v1120, %v1120
          %v1153 = vpack.c.bf16 %v1121, %v1121
          %v1154 = vpack.c.bf16 %v1122, %v1122
          %v1155 = vpack.c.bf16 %v1123, %v1123
          %v1156 = vpack.c.bf16 %v1124, %v1124
          %v1157 = vpack.c.bf16 %v1125, %v1125
          %v1158 = vpack.c.bf16 %v1126, %v1126
          %v1159 = vpack.c.bf16 %v1127, %v1127
          %v1160 = vpack.c.bf16 %v1128, %v1128
          %v1161 = vpack.c.bf16 %v1129, %v1129
          %v1162 = vpack.c.bf16 %v1130, %v1130
          %v1163 = vpack.c.bf16 %v1131, %v1131
          %v1164 = vpack.c.bf16 %v1132, %v1132
          %v1165 = vpack.c.bf16 %v1133, %v1133
          %v1166 = vpack.c.bf16 %v1134, %v1134
          %v1167 = vpack.c.bf16 %v1135, %v1135
          %v1168 = vpack.c.bf16 %v1136, %v1136
          %v1169 = vpack.c.bf16 %v1137, %v1137
          %v1170 = vpack.c.bf16 %v1138, %v1138
          %1171 = vst [vmem:[#allocation4 + $0x1c] sm:$0xf] %v1139
          %1172 = vst [vmem:[#allocation4 + $0x40] sm:$0xf] %v1140
          %1173 = vst [vmem:[#allocation4 + $0x64] sm:$0xf] %v1141
          %1174 = vst [vmem:[#allocation4 + $0x88] sm:$0xf] %v1142
          %1175 = vst [vmem:[#allocation4 + $0xac] sm:$0xf] %v1143
          %1176 = vst [vmem:[#allocation4 + $0xd0] sm:$0xf] %v1144
          %1177 = vst [vmem:[#allocation4 + $0xf4] sm:$0xf] %v1145
          %1178 = vst [vmem:[#allocation4 + $0x118] sm:$0xf] %v1146
          %1179 = vst [vmem:[#allocation4 + $0x13c] sm:$0xf] %v1147
          %1180 = vst [vmem:[#allocation4 + $0x160] sm:$0xf] %v1148
          %1181 = vst [vmem:[#allocation4 + $0x184] sm:$0xf] %v1149
          %1182 = vst [vmem:[#allocation4 + $0x1a8] sm:$0xf] %v1150
          %1183 = vst [vmem:[#allocation4 + $0x1cc] sm:$0xf] %v1151
          %1184 = vst [vmem:[#allocation4 + $0x1f0] sm:$0xf] %v1152
          %1185 = vst [vmem:[#allocation4 + $0x214] sm:$0xf] %v1153
          %1186 = vst [vmem:[#allocation4 + $0x238] sm:$0xf] %v1154
          %1187 = vst [vmem:[#allocation4 + $0x25c] sm:$0xf] %v1155
          %1188 = vst [vmem:[#allocation4 + $0x280] sm:$0xf] %v1156
          %1189 = vst [vmem:[#allocation4 + $0x2a4] sm:$0xf] %v1157
          %1190 = vst [vmem:[#allocation4 + $0x2c8] sm:$0xf] %v1158
          %1191 = vst [vmem:[#allocation4 + $0x2ec] sm:$0xf] %v1159
          %1192 = vst [vmem:[#allocation4 + $0x310] sm:$0xf] %v1160
          %1193 = vst [vmem:[#allocation4 + $0x334] sm:$0xf] %v1161
          %1194 = vst [vmem:[#allocation4 + $0x358] sm:$0xf] %v1162
          %1195 = vst [vmem:[#allocation4 + $0x37c] sm:$0xf] %v1163
          %1196 = vst [vmem:[#allocation4 + $0x3a0] sm:$0xf] %v1164
          %1197 = vst [vmem:[#allocation4 + $0x3c4] sm:$0xf] %v1165
          %1198 = vst [vmem:[#allocation4 + $0x3e8] sm:$0xf] %v1166
          %1199 = vst [vmem:[#allocation4 + $0x40c] sm:$0xf] %v1167
          %1200 = vst [vmem:[#allocation4 + $0x430] sm:$0xf] %v1168
          %1201 = vst [vmem:[#allocation4 + $0x454] sm:$0xf] %v1169
          %1202 = vst [vmem:[#allocation4 + $0x478] sm:$0xf] %v1170
          %v1203 = vld [vmem:[%s1010 + $0x2] sm:$0xff]
          %v1204 = vld [vmem:[%s1010 + $0xa] sm:$0xff]
          %v1205 = vld [vmem:[%s1010 + $0x1a] sm:$0xff]
          %v1206 = vld [vmem:[%s1010 + $0x22] sm:$0xff]
          %v1207 = vld [vmem:[%s1010 + $0x32] sm:$0xff]
          %v1208 = vld [vmem:[%s1010 + $0x3a] sm:$0xff]
          %v1209 = vld [vmem:[%s1010 + $0x4a] sm:$0xff]
          %v1210 = vld [vmem:[%s1010 + $0x52] sm:$0xff]
          %v1211 = vld [vmem:[%s1010 + $0x62] sm:$0xff]
          %v1212 = vld [vmem:[%s1010 + $0x6a] sm:$0xff]
          %v1213 = vld [vmem:[%s1010 + $0x7a] sm:$0xff]
          %v1214 = vld [vmem:[%s1010 + $0x82] sm:$0xff]
          %v1215 = vld [vmem:[%s1010 + $0x92] sm:$0xff]
          %v1216 = vld [vmem:[%s1010 + $0x9a] sm:$0xff]
          %v1217 = vld [vmem:[%s1010 + $0xaa] sm:$0xff]
          %v1218 = vld [vmem:[%s1010 + $0xb2] sm:$0xff]
          %v1219 = vld [vmem:[%s1010 + $0xc2] sm:$0xff]
          %v1220 = vld [vmem:[%s1010 + $0xca] sm:$0xff]
          %v1221 = vld [vmem:[%s1010 + $0xda] sm:$0xff]
          %v1222 = vld [vmem:[%s1010 + $0xe2] sm:$0xff]
          %v1223 = vld [vmem:[%s1010 + $0xf2] sm:$0xff]
          %v1224 = vld [vmem:[%s1010 + $0xfa] sm:$0xff]
          %v1225 = vld [vmem:[%s1010 + $0x10a] sm:$0xff]
          %v1226 = vld [vmem:[%s1010 + $0x112] sm:$0xff]
          %v1227 = vld [vmem:[%s1010 + $0x122] sm:$0xff]
          %v1228 = vld [vmem:[%s1010 + $0x12a] sm:$0xff]
          %v1229 = vld [vmem:[%s1010 + $0x13a] sm:$0xff]
          %v1230 = vld [vmem:[%s1010 + $0x142] sm:$0xff]
          %v1231 = vld [vmem:[%s1010 + $0x152] sm:$0xff]
          %v1232 = vld [vmem:[%s1010 + $0x15a] sm:$0xff]
          %v1233 = vld [vmem:[%s1010 + $0x16a] sm:$0xff]
          %v1234 = vld [vmem:[%s1010 + $0x172] sm:$0xff]
          %v1235 = vpack.c.bf16 %v1203, %v1203
          %v1236 = vpack.c.bf16 %v1204, %v1204
          %v1237 = vpack.c.bf16 %v1205, %v1205
          %v1238 = vpack.c.bf16 %v1206, %v1206
          %v1239 = vpack.c.bf16 %v1207, %v1207
          %v1240 = vpack.c.bf16 %v1208, %v1208
          %v1241 = vpack.c.bf16 %v1209, %v1209
          %v1242 = vpack.c.bf16 %v1210, %v1210
          %v1243 = vpack.c.bf16 %v1211, %v1211
          %v1244 = vpack.c.bf16 %v1212, %v1212
          %v1245 = vpack.c.bf16 %v1213, %v1213
          %v1246 = vpack.c.bf16 %v1214, %v1214
          %v1247 = vpack.c.bf16 %v1215, %v1215
          %v1248 = vpack.c.bf16 %v1216, %v1216
          %v1249 = vpack.c.bf16 %v1217, %v1217
          %v1250 = vpack.c.bf16 %v1218, %v1218
          %v1251 = vpack.c.bf16 %v1219, %v1219
          %v1252 = vpack.c.bf16 %v1220, %v1220
          %v1253 = vpack.c.bf16 %v1221, %v1221
          %v1254 = vpack.c.bf16 %v1222, %v1222
          %v1255 = vpack.c.bf16 %v1223, %v1223
          %v1256 = vpack.c.bf16 %v1224, %v1224
          %v1257 = vpack.c.bf16 %v1225, %v1225
          %v1258 = vpack.c.bf16 %v1226, %v1226
          %v1259 = vpack.c.bf16 %v1227, %v1227
          %v1260 = vpack.c.bf16 %v1228, %v1228
          %v1261 = vpack.c.bf16 %v1229, %v1229
          %v1262 = vpack.c.bf16 %v1230, %v1230
          %v1263 = vpack.c.bf16 %v1231, %v1231
          %v1264 = vpack.c.bf16 %v1232, %v1232
          %v1265 = vpack.c.bf16 %v1233, %v1233
          %v1266 = vpack.c.bf16 %v1234, %v1234
          %1267 = vst [vmem:[#allocation4 + $0x20] sm:$0xf] %v1235
          %1268 = vst [vmem:[#allocation4 + $0x44] sm:$0xf] %v1236
          %1269 = vst [vmem:[#allocation4 + $0x68] sm:$0xf] %v1237
          %1270 = vst [vmem:[#allocation4 + $0x8c] sm:$0xf] %v1238
          %1271 = vst [vmem:[#allocation4 + $0xb0] sm:$0xf] %v1239
          %1272 = vst [vmem:[#allocation4 + $0xd4] sm:$0xf] %v1240
          %1273 = vst [vmem:[#allocation4 + $0xf8] sm:$0xf] %v1241
          %1274 = vst [vmem:[#allocation4 + $0x11c] sm:$0xf] %v1242
          %1275 = vst [vmem:[#allocation4 + $0x140] sm:$0xf] %v1243
          %1276 = vst [vmem:[#allocation4 + $0x164] sm:$0xf] %v1244
          %1277 = vst [vmem:[#allocation4 + $0x188] sm:$0xf] %v1245
          %1278 = vst [vmem:[#allocation4 + $0x1ac] sm:$0xf] %v1246
          %1279 = vst [vmem:[#allocation4 + $0x1d0] sm:$0xf] %v1247
          %1280 = vst [vmem:[#allocation4 + $0x1f4] sm:$0xf] %v1248
          %1281 = vst [vmem:[#allocation4 + $0x218] sm:$0xf] %v1249
          %1282 = vst [vmem:[#allocation4 + $0x23c] sm:$0xf] %v1250
          %1283 = vst [vmem:[#allocation4 + $0x260] sm:$0xf] %v1251
          %1284 = vst [vmem:[#allocation4 + $0x284] sm:$0xf] %v1252
          %1285 = vst [vmem:[#allocation4 + $0x2a8] sm:$0xf] %v1253
          %1286 = vst [vmem:[#allocation4 + $0x2cc] sm:$0xf] %v1254
          %1287 = vst [vmem:[#allocation4 + $0x2f0] sm:$0xf] %v1255
          %1288 = vst [vmem:[#allocation4 + $0x314] sm:$0xf] %v1256
          %1289 = vst [vmem:[#allocation4 + $0x338] sm:$0xf] %v1257
          %1290 = vst [vmem:[#allocation4 + $0x35c] sm:$0xf] %v1258
          %1291 = vst [vmem:[#allocation4 + $0x380] sm:$0xf] %v1259
          %1292 = vst [vmem:[#allocation4 + $0x3a4] sm:$0xf] %v1260
          %1293 = vst [vmem:[#allocation4 + $0x3c8] sm:$0xf] %v1261
          %1294 = vst [vmem:[#allocation4 + $0x3ec] sm:$0xf] %v1262
          %1295 = vst [vmem:[#allocation4 + $0x410] sm:$0xf] %v1263
          %1296 = vst [vmem:[#allocation4 + $0x434] sm:$0xf] %v1264
          %1297 = vst [vmem:[#allocation4 + $0x458] sm:$0xf] %v1265
          %1298 = vst [vmem:[#allocation4 + $0x47c] sm:$0xf] %v1266
          %v1299 = vld [vmem:[#allocation4] sm:$0xff]
          %v1300 = vld [vmem:[#allocation4 + $0x8] sm:$0xff]
          %v1301 = vld [vmem:[#allocation4 + $0x10] sm:$0xff]
          %v1302 = vld [vmem:[#allocation4 + $0x18] sm:$0xff]
          %v1303 = vld [vmem:[#allocation4 + $0x20] sm:$0xf]
          %v1304 = vld [vmem:[#allocation4 + $0x24] sm:$0xff]
          %v1305 = vld [vmem:[#allocation4 + $0x2c] sm:$0xff]
          %v1306 = vld [vmem:[#allocation4 + $0x34] sm:$0xff]
          %v1307 = vld [vmem:[#allocation4 + $0x3c] sm:$0xff]
          %v1308 = vld [vmem:[#allocation4 + $0x44] sm:$0xf]
          %v1309 = vld [vmem:[#allocation4 + $0x48] sm:$0xff]
          %v1310 = vld [vmem:[#allocation4 + $0x50] sm:$0xff]
          %v1311 = vld [vmem:[#allocation4 + $0x58] sm:$0xff]
          %v1312 = vld [vmem:[#allocation4 + $0x60] sm:$0xff]
          %v1313 = vld [vmem:[#allocation4 + $0x68] sm:$0xf]
          %v1314 = vld [vmem:[#allocation4 + $0x6c] sm:$0xff]
          %v1315 = vld [vmem:[#allocation4 + $0x74] sm:$0xff]
          %v1316 = vld [vmem:[#allocation4 + $0x7c] sm:$0xff]
          %v1317 = vld [vmem:[#allocation4 + $0x84] sm:$0xff]
          %v1318 = vld [vmem:[#allocation4 + $0x8c] sm:$0xf]
          %v1319 = vld [vmem:[#allocation4 + $0x90] sm:$0xff]
          %v1320 = vld [vmem:[#allocation4 + $0x98] sm:$0xff]
          %v1321 = vld [vmem:[#allocation4 + $0xa0] sm:$0xff]
          %v1322 = vld [vmem:[#allocation4 + $0xa8] sm:$0xff]
          %v1323 = vld [vmem:[#allocation4 + $0xb0] sm:$0xf]
          %v1324 = vld [vmem:[#allocation4 + $0xb4] sm:$0xff]
          %v1325 = vld [vmem:[#allocation4 + $0xbc] sm:$0xff]
          %v1326 = vld [vmem:[#allocation4 + $0xc4] sm:$0xff]
          %v1327 = vld [vmem:[#allocation4 + $0xcc] sm:$0xff]
          %v1328 = vld [vmem:[#allocation4 + $0xd4] sm:$0xf]
          %v1329 = vld [vmem:[#allocation4 + $0xd8] sm:$0xff]
          %v1330 = vld [vmem:[#allocation4 + $0xe0] sm:$0xff]
          %v1331 = vld [vmem:[#allocation4 + $0xe8] sm:$0xff]
          %v1332 = vld [vmem:[#allocation4 + $0xf0] sm:$0xff]
          %v1333 = vld [vmem:[#allocation4 + $0xf8] sm:$0xf]
          %v1334 = vld [vmem:[#allocation4 + $0xfc] sm:$0xff]
          %v1335 = vld [vmem:[#allocation4 + $0x104] sm:$0xff]
          %v1336 = vld [vmem:[#allocation4 + $0x10c] sm:$0xff]
          %v1337 = vld [vmem:[#allocation4 + $0x114] sm:$0xff]
          %v1338 = vld [vmem:[#allocation4 + $0x11c] sm:$0xf]
          %v1339 = vld [vmem:[#allocation4 + $0x120] sm:$0xff]
          %v1340 = vld [vmem:[#allocation4 + $0x128] sm:$0xff]
          %v1341 = vld [vmem:[#allocation4 + $0x130] sm:$0xff]
          %v1342 = vld [vmem:[#allocation4 + $0x138] sm:$0xff]
          %v1343 = vld [vmem:[#allocation4 + $0x140] sm:$0xf]
          %v1344 = vld [vmem:[#allocation4 + $0x144] sm:$0xff]
          %v1345 = vld [vmem:[#allocation4 + $0x14c] sm:$0xff]
          %v1346 = vld [vmem:[#allocation4 + $0x154] sm:$0xff]
          %v1347 = vld [vmem:[#allocation4 + $0x15c] sm:$0xff]
          %v1348 = vld [vmem:[#allocation4 + $0x164] sm:$0xf]
          %v1349 = vld [vmem:[#allocation4 + $0x168] sm:$0xff]
          %v1350 = vld [vmem:[#allocation4 + $0x170] sm:$0xff]
          %v1351 = vld [vmem:[#allocation4 + $0x178] sm:$0xff]
          %v1352 = vld [vmem:[#allocation4 + $0x180] sm:$0xff]
          %v1353 = vld [vmem:[#allocation4 + $0x188] sm:$0xf]
          %v1354 = vld [vmem:[#allocation4 + $0x18c] sm:$0xff]
          %v1355 = vld [vmem:[#allocation4 + $0x194] sm:$0xff]
          %v1356 = vld [vmem:[#allocation4 + $0x19c] sm:$0xff]
          %v1357 = vld [vmem:[#allocation4 + $0x1a4] sm:$0xff]
          %v1358 = vld [vmem:[#allocation4 + $0x1ac] sm:$0xf]
          %v1359 = vld [vmem:[#allocation4 + $0x1b0] sm:$0xff]
          %v1360 = vld [vmem:[#allocation4 + $0x1b8] sm:$0xff]
          %v1361 = vld [vmem:[#allocation4 + $0x1c0] sm:$0xff]
          %v1362 = vld [vmem:[#allocation4 + $0x1c8] sm:$0xff]
          %v1363 = vld [vmem:[#allocation4 + $0x1d0] sm:$0xf]
          %v1364 = vld [vmem:[#allocation4 + $0x1d4] sm:$0xff]
          %v1365 = vld [vmem:[#allocation4 + $0x1dc] sm:$0xff]
          %v1366 = vld [vmem:[#allocation4 + $0x1e4] sm:$0xff]
          %v1367 = vld [vmem:[#allocation4 + $0x1ec] sm:$0xff]
          %v1368 = vld [vmem:[#allocation4 + $0x1f4] sm:$0xf]
          %v1369 = vld [vmem:[#allocation4 + $0x1f8] sm:$0xff]
          %v1370 = vld [vmem:[#allocation4 + $0x200] sm:$0xff]
          %v1371 = vld [vmem:[#allocation4 + $0x208] sm:$0xff]
          %v1372 = vld [vmem:[#allocation4 + $0x210] sm:$0xff]
          %v1373 = vld [vmem:[#allocation4 + $0x218] sm:$0xf]
          %v1374 = vld [vmem:[#allocation4 + $0x21c] sm:$0xff]
          %v1375 = vld [vmem:[#allocation4 + $0x224] sm:$0xff]
          %v1376 = vld [vmem:[#allocation4 + $0x22c] sm:$0xff]
          %v1377 = vld [vmem:[#allocation4 + $0x234] sm:$0xff]
          %v1378 = vld [vmem:[#allocation4 + $0x23c] sm:$0xf]
          %v1379 = vld [vmem:[#allocation4 + $0x240] sm:$0xff]
          %v1380 = vld [vmem:[#allocation4 + $0x248] sm:$0xff]
          %v1381 = vld [vmem:[#allocation4 + $0x250] sm:$0xff]
          %v1382 = vld [vmem:[#allocation4 + $0x258] sm:$0xff]
          %v1383 = vld [vmem:[#allocation4 + $0x260] sm:$0xf]
          %v1384 = vld [vmem:[#allocation4 + $0x264] sm:$0xff]
          %v1385 = vld [vmem:[#allocation4 + $0x26c] sm:$0xff]
          %v1386 = vld [vmem:[#allocation4 + $0x274] sm:$0xff]
          %v1387 = vld [vmem:[#allocation4 + $0x27c] sm:$0xff]
          %v1388 = vld [vmem:[#allocation4 + $0x284] sm:$0xf]
          %v1389 = vld [vmem:[#allocation4 + $0x288] sm:$0xff]
          %v1390 = vld [vmem:[#allocation4 + $0x290] sm:$0xff]
          %v1391 = vld [vmem:[#allocation4 + $0x298] sm:$0xff]
          %v1392 = vld [vmem:[#allocation4 + $0x2a0] sm:$0xff]
          %v1393 = vld [vmem:[#allocation4 + $0x2a8] sm:$0xf]
          %v1394 = vld [vmem:[#allocation4 + $0x2ac] sm:$0xff]
          %v1395 = vld [vmem:[#allocation4 + $0x2b4] sm:$0xff]
          %v1396 = vld [vmem:[#allocation4 + $0x2bc] sm:$0xff]
          %v1397 = vld [vmem:[#allocation4 + $0x2c4] sm:$0xff]
          %v1398 = vld [vmem:[#allocation4 + $0x2cc] sm:$0xf]
          %v1399 = vld [vmem:[#allocation4 + $0x2d0] sm:$0xff]
          %v1400 = vld [vmem:[#allocation4 + $0x2d8] sm:$0xff]
          %v1401 = vld [vmem:[#allocation4 + $0x2e0] sm:$0xff]
          %v1402 = vld [vmem:[#allocation4 + $0x2e8] sm:$0xff]
          %v1403 = vld [vmem:[#allocation4 + $0x2f0] sm:$0xf]
          %v1404 = vld [vmem:[#allocation4 + $0x2f4] sm:$0xff]
          %v1405 = vld [vmem:[#allocation4 + $0x2fc] sm:$0xff]
          %v1406 = vld [vmem:[#allocation4 + $0x304] sm:$0xff]
          %v1407 = vld [vmem:[#allocation4 + $0x30c] sm:$0xff]
          %v1408 = vld [vmem:[#allocation4 + $0x314] sm:$0xf]
          %v1409 = vld [vmem:[#allocation4 + $0x318] sm:$0xff]
          %v1410 = vld [vmem:[#allocation4 + $0x320] sm:$0xff]
          %v1411 = vld [vmem:[#allocation4 + $0x328] sm:$0xff]
          %v1412 = vld [vmem:[#allocation4 + $0x330] sm:$0xff]
          %v1413 = vld [vmem:[#allocation4 + $0x338] sm:$0xf]
          %v1414 = vld [vmem:[#allocation4 + $0x33c] sm:$0xff]
          %v1415 = vld [vmem:[#allocation4 + $0x344] sm:$0xff]
          %v1416 = vld [vmem:[#allocation4 + $0x34c] sm:$0xff]
          %v1417 = vld [vmem:[#allocation4 + $0x354] sm:$0xff]
          %v1418 = vld [vmem:[#allocation4 + $0x35c] sm:$0xf]
          %v1419 = vld [vmem:[#allocation4 + $0x360] sm:$0xff]
          %v1420 = vld [vmem:[#allocation4 + $0x368] sm:$0xff]
          %v1421 = vld [vmem:[#allocation4 + $0x370] sm:$0xff]
          %v1422 = vld [vmem:[#allocation4 + $0x378] sm:$0xff]
          %v1423 = vld [vmem:[#allocation4 + $0x380] sm:$0xf]
          %v1424 = vld [vmem:[#allocation4 + $0x384] sm:$0xff]
          %v1425 = vld [vmem:[#allocation4 + $0x38c] sm:$0xff]
          %v1426 = vld [vmem:[#allocation4 + $0x394] sm:$0xff]
          %v1427 = vld [vmem:[#allocation4 + $0x39c] sm:$0xff]
          %v1428 = vld [vmem:[#allocation4 + $0x3a4] sm:$0xf]
          %v1429 = vld [vmem:[#allocation4 + $0x3a8] sm:$0xff]
          %v1430 = vld [vmem:[#allocation4 + $0x3b0] sm:$0xff]
          %v1431 = vld [vmem:[#allocation4 + $0x3b8] sm:$0xff]
          %v1432 = vld [vmem:[#allocation4 + $0x3c0] sm:$0xff]
          %v1433 = vld [vmem:[#allocation4 + $0x3c8] sm:$0xf]
          %v1434 = vld [vmem:[#allocation4 + $0x3cc] sm:$0xff]
          %v1435 = vld [vmem:[#allocation4 + $0x3d4] sm:$0xff]
          %v1436 = vld [vmem:[#allocation4 + $0x3dc] sm:$0xff]
          %v1437 = vld [vmem:[#allocation4 + $0x3e4] sm:$0xff]
          %v1438 = vld [vmem:[#allocation4 + $0x3ec] sm:$0xf]
          %v1439 = vld [vmem:[#allocation4 + $0x3f0] sm:$0xff]
          %v1440 = vld [vmem:[#allocation4 + $0x3f8] sm:$0xff]
          %v1441 = vld [vmem:[#allocation4 + $0x400] sm:$0xff]
          %v1442 = vld [vmem:[#allocation4 + $0x408] sm:$0xff]
          %v1443 = vld [vmem:[#allocation4 + $0x410] sm:$0xf]
          %v1444 = vld [vmem:[#allocation4 + $0x414] sm:$0xff]
          %v1445 = vld [vmem:[#allocation4 + $0x41c] sm:$0xff]
          %v1446 = vld [vmem:[#allocation4 + $0x424] sm:$0xff]
          %v1447 = vld [vmem:[#allocation4 + $0x42c] sm:$0xff]
          %v1448 = vld [vmem:[#allocation4 + $0x434] sm:$0xf]
          %v1449 = vld [vmem:[#allocation4 + $0x438] sm:$0xff]
          %v1450 = vld [vmem:[#allocation4 + $0x440] sm:$0xff]
          %v1451 = vld [vmem:[#allocation4 + $0x448] sm:$0xff]
          %v1452 = vld [vmem:[#allocation4 + $0x450] sm:$0xff]
          %v1453 = vld [vmem:[#allocation4 + $0x458] sm:$0xf]
          %v1454 = vld [vmem:[#allocation4 + $0x45c] sm:$0xff]
          %v1455 = vld [vmem:[#allocation4 + $0x464] sm:$0xff]
          %v1456 = vld [vmem:[#allocation4 + $0x46c] sm:$0xff]
          %v1457 = vld [vmem:[#allocation4 + $0x474] sm:$0xff]
          %v1458 = vld [vmem:[#allocation4 + $0x47c] sm:$0xf]
          %s1459 = smul.u32 %s332, 144
          %s1460 = smul.addr %s1459, 4
          %s1461 = scalar_lea.vmem [#allocation8], %s1460
          %v1462 = vld [vmem:[%s1461] sm:$0xf]
          %v1463 = vld [vmem:[%s1461 + $0x4] sm:$0xf]
          %v1464 = vld [vmem:[%s1461 + $0x8] sm:$0xf]
          %v1465 = vld [vmem:[%s1461 + $0xc] sm:$0xf]
          %v1466 = vld [vmem:[%s1461 + $0x10] sm:$0xf]
          %v1467 = vld [vmem:[%s1461 + $0x14] sm:$0xf]
          %v1468 = vld [vmem:[%s1461 + $0x18] sm:$0xf]
          %v1469 = vld [vmem:[%s1461 + $0x1c] sm:$0xf]
          %v1470 = vld [vmem:[%s1461 + $0x20] sm:$0xf]
          %v1471 = vld [vmem:[%s1461 + $0x24] sm:$0xf]
          %v1472 = vld [vmem:[%s1461 + $0x28] sm:$0xf]
          %v1473 = vld [vmem:[%s1461 + $0x2c] sm:$0xf]
          %v1474 = vld [vmem:[%s1461 + $0x30] sm:$0xf]
          %v1475 = vld [vmem:[%s1461 + $0x34] sm:$0xf]
          %v1476 = vld [vmem:[%s1461 + $0x38] sm:$0xf]
          %v1477 = vld [vmem:[%s1461 + $0x3c] sm:$0xf]
          %v1478 = vld [vmem:[%s1461 + $0x40] sm:$0xf]
          %v1479 = vld [vmem:[%s1461 + $0x44] sm:$0xf]
          %v1480 = vld [vmem:[%s1461 + $0x48] sm:$0xf]
          %v1481 = vld [vmem:[%s1461 + $0x4c] sm:$0xf]
          %v1482 = vld [vmem:[%s1461 + $0x50] sm:$0xf]
          %v1483 = vld [vmem:[%s1461 + $0x54] sm:$0xf]
          %v1484 = vld [vmem:[%s1461 + $0x58] sm:$0xf]
          %v1485 = vld [vmem:[%s1461 + $0x5c] sm:$0xf]
          %v1486 = vld [vmem:[%s1461 + $0x60] sm:$0xf]
          %v1487 = vld [vmem:[%s1461 + $0x64] sm:$0xf]
          %v1488 = vld [vmem:[%s1461 + $0x68] sm:$0xf]
          %v1489 = vld [vmem:[%s1461 + $0x6c] sm:$0xf]
          %v1490 = vld [vmem:[%s1461 + $0x70] sm:$0xf]
          %v1491 = vld [vmem:[%s1461 + $0x74] sm:$0xf]
          %v1492 = vld [vmem:[%s1461 + $0x78] sm:$0xf]
          %v1493 = vld [vmem:[%s1461 + $0x7c] sm:$0xf]
          %v1494 = vld [vmem:[%s1461 + $0x80] sm:$0xf]
          %v1495 = vld [vmem:[%s1461 + $0x84] sm:$0xf]
          %v1496 = vld [vmem:[%s1461 + $0x88] sm:$0xf]
          %v1497 = vld [vmem:[%s1461 + $0x8c] sm:$0xf]
          %v1498 = vld [vmem:[%s1461 + $0x90] sm:$0xf]
          %v1499 = vld [vmem:[%s1461 + $0x94] sm:$0xf]
          %v1500 = vld [vmem:[%s1461 + $0x98] sm:$0xf]
          %v1501 = vld [vmem:[%s1461 + $0x9c] sm:$0xf]
          %v1502 = vld [vmem:[%s1461 + $0xa0] sm:$0xf]
          %v1503 = vld [vmem:[%s1461 + $0xa4] sm:$0xf]
          %v1504 = vld [vmem:[%s1461 + $0xa8] sm:$0xf]
          %v1505 = vld [vmem:[%s1461 + $0xac] sm:$0xf]
          %v1506 = vld [vmem:[%s1461 + $0xb0] sm:$0xf]
          %v1507 = vld [vmem:[%s1461 + $0xb4] sm:$0xf]
          %v1508 = vld [vmem:[%s1461 + $0xb8] sm:$0xf]
          %v1509 = vld [vmem:[%s1461 + $0xbc] sm:$0xf]
          %v1510 = vld [vmem:[%s1461 + $0xc0] sm:$0xf]
          %v1511 = vld [vmem:[%s1461 + $0xc4] sm:$0xf]
          %v1512 = vld [vmem:[%s1461 + $0xc8] sm:$0xf]
          %v1513 = vld [vmem:[%s1461 + $0xcc] sm:$0xf]
          %v1514 = vld [vmem:[%s1461 + $0xd0] sm:$0xf]
          %v1515 = vld [vmem:[%s1461 + $0xd4] sm:$0xf]
          %v1516 = vld [vmem:[%s1461 + $0xd8] sm:$0xf]
          %v1517 = vld [vmem:[%s1461 + $0xdc] sm:$0xf]
          %v1518 = vld [vmem:[%s1461 + $0xe0] sm:$0xf]
          %v1519 = vld [vmem:[%s1461 + $0xe4] sm:$0xf]
          %v1520 = vld [vmem:[%s1461 + $0xe8] sm:$0xf]
          %v1521 = vld [vmem:[%s1461 + $0xec] sm:$0xf]
          %v1522 = vld [vmem:[%s1461 + $0xf0] sm:$0xf]
          %v1523 = vld [vmem:[%s1461 + $0xf4] sm:$0xf]
          %v1524 = vld [vmem:[%s1461 + $0xf8] sm:$0xf]
          %v1525 = vld [vmem:[%s1461 + $0xfc] sm:$0xf]
          %v1526 = vld [vmem:[%s1461 + $0x100] sm:$0xf]
          %v1527 = vld [vmem:[%s1461 + $0x104] sm:$0xf]
          %v1528 = vld [vmem:[%s1461 + $0x108] sm:$0xf]
          %v1529 = vld [vmem:[%s1461 + $0x10c] sm:$0xf]
          %v1530 = vld [vmem:[%s1461 + $0x110] sm:$0xf]
          %v1531 = vld [vmem:[%s1461 + $0x114] sm:$0xf]
          %v1532 = vld [vmem:[%s1461 + $0x118] sm:$0xf]
          %v1533 = vld [vmem:[%s1461 + $0x11c] sm:$0xf]
          %v1534 = vld [vmem:[%s1461 + $0x120] sm:$0xf]
          %v1535 = vld [vmem:[%s1461 + $0x124] sm:$0xf]
          %v1536 = vld [vmem:[%s1461 + $0x128] sm:$0xf]
          %v1537 = vld [vmem:[%s1461 + $0x12c] sm:$0xf]
          %v1538 = vld [vmem:[%s1461 + $0x130] sm:$0xf]
          %v1539 = vld [vmem:[%s1461 + $0x134] sm:$0xf]
          %v1540 = vld [vmem:[%s1461 + $0x138] sm:$0xf]
          %v1541 = vld [vmem:[%s1461 + $0x13c] sm:$0xf]
          %v1542 = vld [vmem:[%s1461 + $0x140] sm:$0xf]
          %v1543 = vld [vmem:[%s1461 + $0x144] sm:$0xf]
          %v1544 = vld [vmem:[%s1461 + $0x148] sm:$0xf]
          %v1545 = vld [vmem:[%s1461 + $0x14c] sm:$0xf]
          %v1546 = vld [vmem:[%s1461 + $0x150] sm:$0xf]
          %v1547 = vld [vmem:[%s1461 + $0x154] sm:$0xf]
          %v1548 = vld [vmem:[%s1461 + $0x158] sm:$0xf]
          %v1549 = vld [vmem:[%s1461 + $0x15c] sm:$0xf]
          %v1550 = vld [vmem:[%s1461 + $0x160] sm:$0xf]
          %v1551 = vld [vmem:[%s1461 + $0x164] sm:$0xf]
          %v1552 = vld [vmem:[%s1461 + $0x168] sm:$0xf]
          %v1553 = vld [vmem:[%s1461 + $0x16c] sm:$0xf]
          %v1554 = vld [vmem:[%s1461 + $0x170] sm:$0xf]
          %v1555 = vld [vmem:[%s1461 + $0x174] sm:$0xf]
          %v1556 = vld [vmem:[%s1461 + $0x178] sm:$0xf]
          %v1557 = vld [vmem:[%s1461 + $0x17c] sm:$0xf]
          %v1558 = vld [vmem:[%s1461 + $0x180] sm:$0xf]
          %v1559 = vld [vmem:[%s1461 + $0x184] sm:$0xf]
          %v1560 = vld [vmem:[%s1461 + $0x188] sm:$0xf]
          %v1561 = vld [vmem:[%s1461 + $0x18c] sm:$0xf]
          %v1562 = vld [vmem:[%s1461 + $0x190] sm:$0xf]
          %v1563 = vld [vmem:[%s1461 + $0x194] sm:$0xf]
          %v1564 = vld [vmem:[%s1461 + $0x198] sm:$0xf]
          %v1565 = vld [vmem:[%s1461 + $0x19c] sm:$0xf]
          %v1566 = vld [vmem:[%s1461 + $0x1a0] sm:$0xf]
          %v1567 = vld [vmem:[%s1461 + $0x1a4] sm:$0xf]
          %v1568 = vld [vmem:[%s1461 + $0x1a8] sm:$0xf]
          %v1569 = vld [vmem:[%s1461 + $0x1ac] sm:$0xf]
          %v1570 = vld [vmem:[%s1461 + $0x1b0] sm:$0xf]
          %v1571 = vld [vmem:[%s1461 + $0x1b4] sm:$0xf]
          %v1572 = vld [vmem:[%s1461 + $0x1b8] sm:$0xf]
          %v1573 = vld [vmem:[%s1461 + $0x1bc] sm:$0xf]
          %v1574 = vld [vmem:[%s1461 + $0x1c0] sm:$0xf]
          %v1575 = vld [vmem:[%s1461 + $0x1c4] sm:$0xf]
          %v1576 = vld [vmem:[%s1461 + $0x1c8] sm:$0xf]
          %v1577 = vld [vmem:[%s1461 + $0x1cc] sm:$0xf]
          %v1578 = vld [vmem:[%s1461 + $0x1d0] sm:$0xf]
          %v1579 = vld [vmem:[%s1461 + $0x1d4] sm:$0xf]
          %v1580 = vld [vmem:[%s1461 + $0x1d8] sm:$0xf]
          %v1581 = vld [vmem:[%s1461 + $0x1dc] sm:$0xf]
          %v1582 = vld [vmem:[%s1461 + $0x1e0] sm:$0xf]
          %v1583 = vld [vmem:[%s1461 + $0x1e4] sm:$0xf]
          %v1584 = vld [vmem:[%s1461 + $0x1e8] sm:$0xf]
          %v1585 = vld [vmem:[%s1461 + $0x1ec] sm:$0xf]
          %v1586 = vld [vmem:[%s1461 + $0x1f0] sm:$0xf]
          %v1587 = vld [vmem:[%s1461 + $0x1f4] sm:$0xf]
          %v1588 = vld [vmem:[%s1461 + $0x1f8] sm:$0xf]
          %v1589 = vld [vmem:[%s1461 + $0x1fc] sm:$0xf]
          %v1590 = vld [vmem:[%s1461 + $0x200] sm:$0xf]
          %v1591 = vld [vmem:[%s1461 + $0x204] sm:$0xf]
          %v1592 = vld [vmem:[%s1461 + $0x208] sm:$0xf]
          %v1593 = vld [vmem:[%s1461 + $0x20c] sm:$0xf]
          %v1594 = vld [vmem:[%s1461 + $0x210] sm:$0xf]
          %v1595 = vld [vmem:[%s1461 + $0x214] sm:$0xf]
          %v1596 = vld [vmem:[%s1461 + $0x218] sm:$0xf]
          %v1597 = vld [vmem:[%s1461 + $0x21c] sm:$0xf]
          %v1598 = vld [vmem:[%s1461 + $0x220] sm:$0xf]
          %v1599 = vld [vmem:[%s1461 + $0x224] sm:$0xf]
          %v1600 = vld [vmem:[%s1461 + $0x228] sm:$0xf]
          %v1601 = vld [vmem:[%s1461 + $0x22c] sm:$0xf]
          %v1602 = vld [vmem:[%s1461 + $0x230] sm:$0xf]
          %v1603 = vld [vmem:[%s1461 + $0x234] sm:$0xf]
          %v1604 = vld [vmem:[%s1461 + $0x238] sm:$0xf]
          %v1605 = vld [vmem:[%s1461 + $0x23c] sm:$0xf]
          %v1766 = vunpack.c.l.b16 %v1299
          %v1767 = vunpack.c.h.b16 %v1299
          %v1768 = vunpack.c.l.b16 %v1300
          %v1769 = vunpack.c.h.b16 %v1300
          %v1770 = vunpack.c.l.b16 %v1301
          %v1771 = vunpack.c.h.b16 %v1301
          %v1772 = vunpack.c.l.b16 %v1302
          %v1773 = vunpack.c.h.b16 %v1302
          %v1774 = vunpack.c.l.b16 %v1303
          %v1775 = vunpack.c.l.b16 %v1304
          %v1776 = vunpack.c.h.b16 %v1304
          %v1777 = vunpack.c.l.b16 %v1305
          %v1778 = vunpack.c.h.b16 %v1305
          %v1779 = vunpack.c.l.b16 %v1306
          %v1780 = vunpack.c.h.b16 %v1306
          %v1781 = vunpack.c.l.b16 %v1307
          %v1782 = vunpack.c.h.b16 %v1307
          %v1783 = vunpack.c.l.b16 %v1308
          %v1784 = vunpack.c.l.b16 %v1309
          %v1785 = vunpack.c.h.b16 %v1309
          %v1786 = vunpack.c.l.b16 %v1310
          %v1787 = vunpack.c.h.b16 %v1310
          %v1788 = vunpack.c.l.b16 %v1311
          %v1789 = vunpack.c.h.b16 %v1311
          %v1790 = vunpack.c.l.b16 %v1312
          %v1791 = vunpack.c.h.b16 %v1312
          %v1792 = vunpack.c.l.b16 %v1313
          %v1793 = vunpack.c.l.b16 %v1314
          %v1794 = vunpack.c.h.b16 %v1314
          %v1795 = vunpack.c.l.b16 %v1315
          %v1796 = vunpack.c.h.b16 %v1315
          %v1797 = vunpack.c.l.b16 %v1316
          %v1798 = vunpack.c.h.b16 %v1316
          %v1799 = vunpack.c.l.b16 %v1317
          %v1800 = vunpack.c.h.b16 %v1317
          %v1801 = vunpack.c.l.b16 %v1318
          %v1802 = vunpack.c.l.b16 %v1319
          %v1803 = vunpack.c.h.b16 %v1319
          %v1804 = vunpack.c.l.b16 %v1320
          %v1805 = vunpack.c.h.b16 %v1320
          %v1806 = vunpack.c.l.b16 %v1321
          %v1807 = vunpack.c.h.b16 %v1321
          %v1808 = vunpack.c.l.b16 %v1322
          %v1809 = vunpack.c.h.b16 %v1322
          %v1810 = vunpack.c.l.b16 %v1323
          %v1811 = vunpack.c.l.b16 %v1324
          %v1812 = vunpack.c.h.b16 %v1324
          %v1813 = vunpack.c.l.b16 %v1325
          %v1814 = vunpack.c.h.b16 %v1325
          %v1815 = vunpack.c.l.b16 %v1326
          %v1816 = vunpack.c.h.b16 %v1326
          %v1817 = vunpack.c.l.b16 %v1327
          %v1818 = vunpack.c.h.b16 %v1327
          %v1819 = vunpack.c.l.b16 %v1328
          %v1820 = vunpack.c.l.b16 %v1329
          %v1821 = vunpack.c.h.b16 %v1329
          %v1822 = vunpack.c.l.b16 %v1330
          %v1823 = vunpack.c.h.b16 %v1330
          %v1824 = vunpack.c.l.b16 %v1331
          %v1825 = vunpack.c.h.b16 %v1331
          %v1826 = vunpack.c.l.b16 %v1332
          %v1827 = vunpack.c.h.b16 %v1332
          %v1828 = vunpack.c.l.b16 %v1333
          %v1829 = vunpack.c.l.b16 %v1334
          %v1830 = vunpack.c.h.b16 %v1334
          %v1831 = vunpack.c.l.b16 %v1335
          %v1832 = vunpack.c.h.b16 %v1335
          %v1833 = vunpack.c.l.b16 %v1336
          %v1834 = vunpack.c.h.b16 %v1336
          %v1835 = vunpack.c.l.b16 %v1337
          %v1836 = vunpack.c.h.b16 %v1337
          %v1837 = vunpack.c.l.b16 %v1338
          %v1838 = vunpack.c.l.b16 %v1339
          %v1839 = vunpack.c.h.b16 %v1339
          %v1840 = vunpack.c.l.b16 %v1340
          %v1841 = vunpack.c.h.b16 %v1340
          %v1842 = vunpack.c.l.b16 %v1341
          %v1843 = vunpack.c.h.b16 %v1341
          %v1844 = vunpack.c.l.b16 %v1342
          %v1845 = vunpack.c.h.b16 %v1342
          %v1846 = vunpack.c.l.b16 %v1343
          %v1847 = vunpack.c.l.b16 %v1344
          %v1848 = vunpack.c.h.b16 %v1344
          %v1849 = vunpack.c.l.b16 %v1345
          %v1850 = vunpack.c.h.b16 %v1345
          %v1851 = vunpack.c.l.b16 %v1346
          %v1852 = vunpack.c.h.b16 %v1346
          %v1853 = vunpack.c.l.b16 %v1347
          %v1854 = vunpack.c.h.b16 %v1347
          %v1855 = vunpack.c.l.b16 %v1348
          %v1856 = vunpack.c.l.b16 %v1349
          %v1857 = vunpack.c.h.b16 %v1349
          %v1858 = vunpack.c.l.b16 %v1350
          %v1859 = vunpack.c.h.b16 %v1350
          %v1860 = vunpack.c.l.b16 %v1351
          %v1861 = vunpack.c.h.b16 %v1351
          %v1862 = vunpack.c.l.b16 %v1352
          %v1863 = vunpack.c.h.b16 %v1352
          %v1864 = vunpack.c.l.b16 %v1353
          %v1865 = vunpack.c.l.b16 %v1354
          %v1866 = vunpack.c.h.b16 %v1354
          %v1867 = vunpack.c.l.b16 %v1355
          %v1868 = vunpack.c.h.b16 %v1355
          %v1869 = vunpack.c.l.b16 %v1356
          %v1870 = vunpack.c.h.b16 %v1356
          %v1871 = vunpack.c.l.b16 %v1357
          %v1872 = vunpack.c.h.b16 %v1357
          %v1873 = vunpack.c.l.b16 %v1358
          %v1874 = vunpack.c.l.b16 %v1359
          %v1875 = vunpack.c.h.b16 %v1359
          %v1876 = vunpack.c.l.b16 %v1360
          %v1877 = vunpack.c.h.b16 %v1360
          %v1878 = vunpack.c.l.b16 %v1361
          %v1879 = vunpack.c.h.b16 %v1361
          %v1880 = vunpack.c.l.b16 %v1362
          %v1881 = vunpack.c.h.b16 %v1362
          %v1882 = vunpack.c.l.b16 %v1363
          %v1883 = vunpack.c.l.b16 %v1364
          %v1884 = vunpack.c.h.b16 %v1364
          %v1885 = vunpack.c.l.b16 %v1365
          %v1886 = vunpack.c.h.b16 %v1365
          %v1887 = vunpack.c.l.b16 %v1366
          %v1888 = vunpack.c.h.b16 %v1366
          %v1889 = vunpack.c.l.b16 %v1367
          %v1890 = vunpack.c.h.b16 %v1367
          %v1891 = vunpack.c.l.b16 %v1368
          %v1892 = vunpack.c.l.b16 %v1369
          %v1893 = vunpack.c.h.b16 %v1369
          %v1894 = vunpack.c.l.b16 %v1370
          %v1895 = vunpack.c.h.b16 %v1370
          %v1896 = vunpack.c.l.b16 %v1371
          %v1897 = vunpack.c.h.b16 %v1371
          %v1898 = vunpack.c.l.b16 %v1372
          %v1899 = vunpack.c.h.b16 %v1372
          %v1900 = vunpack.c.l.b16 %v1373
          %v1901 = vunpack.c.l.b16 %v1374
          %v1902 = vunpack.c.h.b16 %v1374
          %v1903 = vunpack.c.l.b16 %v1375
          %v1904 = vunpack.c.h.b16 %v1375
          %v1905 = vunpack.c.l.b16 %v1376
          %v1906 = vunpack.c.h.b16 %v1376
          %v1907 = vunpack.c.l.b16 %v1377
          %v1908 = vunpack.c.h.b16 %v1377
          %v1909 = vunpack.c.l.b16 %v1378
          %v1910 = vunpack.c.l.b16 %v1379
          %v1911 = vunpack.c.h.b16 %v1379
          %v1912 = vunpack.c.l.b16 %v1380
          %v1913 = vunpack.c.h.b16 %v1380
          %v1914 = vunpack.c.l.b16 %v1381
          %v1915 = vunpack.c.h.b16 %v1381
          %v1916 = vunpack.c.l.b16 %v1382
          %v1917 = vunpack.c.h.b16 %v1382
          %v1918 = vunpack.c.l.b16 %v1383
          %v1919 = vunpack.c.l.b16 %v1384
          %v1920 = vunpack.c.h.b16 %v1384
          %v1921 = vunpack.c.l.b16 %v1385
          %v1922 = vunpack.c.h.b16 %v1385
          %v1923 = vunpack.c.l.b16 %v1386
          %v1924 = vunpack.c.h.b16 %v1386
          %v1925 = vunpack.c.l.b16 %v1387
          %v1926 = vunpack.c.h.b16 %v1387
          %v1927 = vunpack.c.l.b16 %v1388
          %v1928 = vunpack.c.l.b16 %v1389
          %v1929 = vunpack.c.h.b16 %v1389
          %v1930 = vunpack.c.l.b16 %v1390
          %v1931 = vunpack.c.h.b16 %v1390
          %v1932 = vunpack.c.l.b16 %v1391
          %v1933 = vunpack.c.h.b16 %v1391
          %v1934 = vunpack.c.l.b16 %v1392
          %v1935 = vunpack.c.h.b16 %v1392
          %v1936 = vunpack.c.l.b16 %v1393
          %v1937 = vunpack.c.l.b16 %v1394
          %v1938 = vunpack.c.h.b16 %v1394
          %v1939 = vunpack.c.l.b16 %v1395
          %v1940 = vunpack.c.h.b16 %v1395
          %v1941 = vunpack.c.l.b16 %v1396
          %v1942 = vunpack.c.h.b16 %v1396
          %v1943 = vunpack.c.l.b16 %v1397
          %v1944 = vunpack.c.h.b16 %v1397
          %v1945 = vunpack.c.l.b16 %v1398
          %v1946 = vunpack.c.l.b16 %v1399
          %v1947 = vunpack.c.h.b16 %v1399
          %v1948 = vunpack.c.l.b16 %v1400
          %v1949 = vunpack.c.h.b16 %v1400
          %v1950 = vunpack.c.l.b16 %v1401
          %v1951 = vunpack.c.h.b16 %v1401
          %v1952 = vunpack.c.l.b16 %v1402
          %v1953 = vunpack.c.h.b16 %v1402
          %v1954 = vunpack.c.l.b16 %v1403
          %v1955 = vunpack.c.l.b16 %v1404
          %v1956 = vunpack.c.h.b16 %v1404
          %v1957 = vunpack.c.l.b16 %v1405
          %v1958 = vunpack.c.h.b16 %v1405
          %v1959 = vunpack.c.l.b16 %v1406
          %v1960 = vunpack.c.h.b16 %v1406
          %v1961 = vunpack.c.l.b16 %v1407
          %v1962 = vunpack.c.h.b16 %v1407
          %v1963 = vunpack.c.l.b16 %v1408
          %v1964 = vunpack.c.l.b16 %v1409
          %v1965 = vunpack.c.h.b16 %v1409
          %v1966 = vunpack.c.l.b16 %v1410
          %v1967 = vunpack.c.h.b16 %v1410
          %v1968 = vunpack.c.l.b16 %v1411
          %v1969 = vunpack.c.h.b16 %v1411
          %v1970 = vunpack.c.l.b16 %v1412
          %v1971 = vunpack.c.h.b16 %v1412
          %v1972 = vunpack.c.l.b16 %v1413
          %v1973 = vunpack.c.l.b16 %v1414
          %v1974 = vunpack.c.h.b16 %v1414
          %v1975 = vunpack.c.l.b16 %v1415
          %v1976 = vunpack.c.h.b16 %v1415
          %v1977 = vunpack.c.l.b16 %v1416
          %v1978 = vunpack.c.h.b16 %v1416
          %v1979 = vunpack.c.l.b16 %v1417
          %v1980 = vunpack.c.h.b16 %v1417
          %v1981 = vunpack.c.l.b16 %v1418
          %v1982 = vunpack.c.l.b16 %v1419
          %v1983 = vunpack.c.h.b16 %v1419
          %v1984 = vunpack.c.l.b16 %v1420
          %v1985 = vunpack.c.h.b16 %v1420
          %v1986 = vunpack.c.l.b16 %v1421
          %v1987 = vunpack.c.h.b16 %v1421
          %v1988 = vunpack.c.l.b16 %v1422
          %v1989 = vunpack.c.h.b16 %v1422
          %v1990 = vunpack.c.l.b16 %v1423
          %v1991 = vunpack.c.l.b16 %v1424
          %v1992 = vunpack.c.h.b16 %v1424
          %v1993 = vunpack.c.l.b16 %v1425
          %v1994 = vunpack.c.h.b16 %v1425
          %v1995 = vunpack.c.l.b16 %v1426
          %v1996 = vunpack.c.h.b16 %v1426
          %v1997 = vunpack.c.l.b16 %v1427
          %v1998 = vunpack.c.h.b16 %v1427
          %v1999 = vunpack.c.l.b16 %v1428
          %v2000 = vunpack.c.l.b16 %v1429
          %v2001 = vunpack.c.h.b16 %v1429
          %v2002 = vunpack.c.l.b16 %v1430
          %v2003 = vunpack.c.h.b16 %v1430
          %v2004 = vunpack.c.l.b16 %v1431
          %v2005 = vunpack.c.h.b16 %v1431
          %v2006 = vunpack.c.l.b16 %v1432
          %v2007 = vunpack.c.h.b16 %v1432
          %v2008 = vunpack.c.l.b16 %v1433
          %v2009 = vunpack.c.l.b16 %v1434
          %v2010 = vunpack.c.h.b16 %v1434
          %v2011 = vunpack.c.l.b16 %v1435
          %v2012 = vunpack.c.h.b16 %v1435
          %v2013 = vunpack.c.l.b16 %v1436
          %v2014 = vunpack.c.h.b16 %v1436
          %v2015 = vunpack.c.l.b16 %v1437
          %v2016 = vunpack.c.h.b16 %v1437
          %v2017 = vunpack.c.l.b16 %v1438
          %v2018 = vunpack.c.l.b16 %v1439
          %v2019 = vunpack.c.h.b16 %v1439
          %v2020 = vunpack.c.l.b16 %v1440
          %v2021 = vunpack.c.h.b16 %v1440
          %v2022 = vunpack.c.l.b16 %v1441
          %v2023 = vunpack.c.h.b16 %v1441
          %v2024 = vunpack.c.l.b16 %v1442
          %v2025 = vunpack.c.h.b16 %v1442
          %v2026 = vunpack.c.l.b16 %v1443
          %v2027 = vunpack.c.l.b16 %v1444
          %v2028 = vunpack.c.h.b16 %v1444
          %v2029 = vunpack.c.l.b16 %v1445
          %v2030 = vunpack.c.h.b16 %v1445
          %v2031 = vunpack.c.l.b16 %v1446
          %v2032 = vunpack.c.h.b16 %v1446
          %v2033 = vunpack.c.l.b16 %v1447
          %v2034 = vunpack.c.h.b16 %v1447
          %v2035 = vunpack.c.l.b16 %v1448
          %v2036 = vunpack.c.l.b16 %v1449
          %v2037 = vunpack.c.h.b16 %v1449
          %v2038 = vunpack.c.l.b16 %v1450
          %v2039 = vunpack.c.h.b16 %v1450
          %v2040 = vunpack.c.l.b16 %v1451
          %v2041 = vunpack.c.h.b16 %v1451
          %v2042 = vunpack.c.l.b16 %v1452
          %v2043 = vunpack.c.h.b16 %v1452
          %v2044 = vunpack.c.l.b16 %v1453
          %v2045 = vunpack.c.l.b16 %v1454
          %v2046 = vunpack.c.h.b16 %v1454
          %v2047 = vunpack.c.l.b16 %v1455
          %v2048 = vunpack.c.h.b16 %v1455
          %v2049 = vunpack.c.l.b16 %v1456
          %v2050 = vunpack.c.h.b16 %v1456
          %v2051 = vunpack.c.l.b16 %v1457
          %v2052 = vunpack.c.h.b16 %v1457
          %v2053 = vunpack.c.l.b16 %v1458
          %v2054 = vpack.c.b16 %v1775, %v1766
          %v2055 = vpack.c.b16 %v1776, %v1767
          %v2056 = vpack.c.b16 %v1777, %v1768
          %v2057 = vpack.c.b16 %v1778, %v1769
          %v2058 = vpack.c.b16 %v1779, %v1770
          %v2059 = vpack.c.b16 %v1780, %v1771
          %v2060 = vpack.c.b16 %v1781, %v1772
          %v2061 = vpack.c.b16 %v1782, %v1773
          %v2062 = vpack.c.b16 %v1783, %v1774
          %v2063 = vpack.c.b16 %v1793, %v1784
          %v2064 = vpack.c.b16 %v1794, %v1785
          %v2065 = vpack.c.b16 %v1795, %v1786
          %v2066 = vpack.c.b16 %v1796, %v1787
          %v2067 = vpack.c.b16 %v1797, %v1788
          %v2068 = vpack.c.b16 %v1798, %v1789
          %v2069 = vpack.c.b16 %v1799, %v1790
          %v2070 = vpack.c.b16 %v1800, %v1791
          %v2071 = vpack.c.b16 %v1801, %v1792
          %v2072 = vpack.c.b16 %v1811, %v1802
          %v2073 = vpack.c.b16 %v1812, %v1803
          %v2074 = vpack.c.b16 %v1813, %v1804
          %v2075 = vpack.c.b16 %v1814, %v1805
          %v2076 = vpack.c.b16 %v1815, %v1806
          %v2077 = vpack.c.b16 %v1816, %v1807
          %v2078 = vpack.c.b16 %v1817, %v1808
          %v2079 = vpack.c.b16 %v1818, %v1809
          %v2080 = vpack.c.b16 %v1819, %v1810
          %v2081 = vpack.c.b16 %v1829, %v1820
          %v2082 = vpack.c.b16 %v1830, %v1821
          %v2083 = vpack.c.b16 %v1831, %v1822
          %v2084 = vpack.c.b16 %v1832, %v1823
          %v2085 = vpack.c.b16 %v1833, %v1824
          %v2086 = vpack.c.b16 %v1834, %v1825
          %v2087 = vpack.c.b16 %v1835, %v1826
          %v2088 = vpack.c.b16 %v1836, %v1827
          %v2089 = vpack.c.b16 %v1837, %v1828
          %v2090 = vpack.c.b16 %v1847, %v1838
          %v2091 = vpack.c.b16 %v1848, %v1839
          %v2092 = vpack.c.b16 %v1849, %v1840
          %v2093 = vpack.c.b16 %v1850, %v1841
          %v2094 = vpack.c.b16 %v1851, %v1842
          %v2095 = vpack.c.b16 %v1852, %v1843
          %v2096 = vpack.c.b16 %v1853, %v1844
          %v2097 = vpack.c.b16 %v1854, %v1845
          %v2098 = vpack.c.b16 %v1855, %v1846
          %v2099 = vpack.c.b16 %v1865, %v1856
          %v2100 = vpack.c.b16 %v1866, %v1857
          %v2101 = vpack.c.b16 %v1867, %v1858
          %v2102 = vpack.c.b16 %v1868, %v1859
          %v2103 = vpack.c.b16 %v1869, %v1860
          %v2104 = vpack.c.b16 %v1870, %v1861
          %v2105 = vpack.c.b16 %v1871, %v1862
          %v2106 = vpack.c.b16 %v1872, %v1863
          %v2107 = vpack.c.b16 %v1873, %v1864
          %v2108 = vpack.c.b16 %v1883, %v1874
          %v2109 = vpack.c.b16 %v1884, %v1875
          %v2110 = vpack.c.b16 %v1885, %v1876
          %v2111 = vpack.c.b16 %v1886, %v1877
          %v2112 = vpack.c.b16 %v1887, %v1878
          %v2113 = vpack.c.b16 %v1888, %v1879
          %v2114 = vpack.c.b16 %v1889, %v1880
          %v2115 = vpack.c.b16 %v1890, %v1881
          %v2116 = vpack.c.b16 %v1891, %v1882
          %v2117 = vpack.c.b16 %v1901, %v1892
          %v2118 = vpack.c.b16 %v1902, %v1893
          %v2119 = vpack.c.b16 %v1903, %v1894
          %v2120 = vpack.c.b16 %v1904, %v1895
          %v2121 = vpack.c.b16 %v1905, %v1896
          %v2122 = vpack.c.b16 %v1906, %v1897
          %v2123 = vpack.c.b16 %v1907, %v1898
          %v2124 = vpack.c.b16 %v1908, %v1899
          %v2125 = vpack.c.b16 %v1909, %v1900
          %v2126 = vpack.c.b16 %v1919, %v1910
          %v2127 = vpack.c.b16 %v1920, %v1911
          %v2128 = vpack.c.b16 %v1921, %v1912
          %v2129 = vpack.c.b16 %v1922, %v1913
          %v2130 = vpack.c.b16 %v1923, %v1914
          %v2131 = vpack.c.b16 %v1924, %v1915
          %v2132 = vpack.c.b16 %v1925, %v1916
          %v2133 = vpack.c.b16 %v1926, %v1917
          %v2134 = vpack.c.b16 %v1927, %v1918
          %v2135 = vpack.c.b16 %v1937, %v1928
          %v2136 = vpack.c.b16 %v1938, %v1929
          %v2137 = vpack.c.b16 %v1939, %v1930
          %v2138 = vpack.c.b16 %v1940, %v1931
          %v2139 = vpack.c.b16 %v1941, %v1932
          %v2140 = vpack.c.b16 %v1942, %v1933
          %v2141 = vpack.c.b16 %v1943, %v1934
          %v2142 = vpack.c.b16 %v1944, %v1935
          %v2143 = vpack.c.b16 %v1945, %v1936
          %v2144 = vpack.c.b16 %v1955, %v1946
          %v2145 = vpack.c.b16 %v1956, %v1947
          %v2146 = vpack.c.b16 %v1957, %v1948
          %v2147 = vpack.c.b16 %v1958, %v1949
          %v2148 = vpack.c.b16 %v1959, %v1950
          %v2149 = vpack.c.b16 %v1960, %v1951
          %v2150 = vpack.c.b16 %v1961, %v1952
          %v2151 = vpack.c.b16 %v1962, %v1953
          %v2152 = vpack.c.b16 %v1963, %v1954
          %v2153 = vpack.c.b16 %v1973, %v1964
          %v2154 = vpack.c.b16 %v1974, %v1965
          %v2155 = vpack.c.b16 %v1975, %v1966
          %v2156 = vpack.c.b16 %v1976, %v1967
          %v2157 = vpack.c.b16 %v1977, %v1968
          %v2158 = vpack.c.b16 %v1978, %v1969
          %v2159 = vpack.c.b16 %v1979, %v1970
          %v2160 = vpack.c.b16 %v1980, %v1971
          %v2161 = vpack.c.b16 %v1981, %v1972
          %v2162 = vpack.c.b16 %v1991, %v1982
          %v2163 = vpack.c.b16 %v1992, %v1983
          %v2164 = vpack.c.b16 %v1993, %v1984
          %v2165 = vpack.c.b16 %v1994, %v1985
          %v2166 = vpack.c.b16 %v1995, %v1986
          %v2167 = vpack.c.b16 %v1996, %v1987
          %v2168 = vpack.c.b16 %v1997, %v1988
          %v2169 = vpack.c.b16 %v1998, %v1989
          %v2170 = vpack.c.b16 %v1999, %v1990
          %v2171 = vpack.c.b16 %v2009, %v2000
          %v2172 = vpack.c.b16 %v2010, %v2001
          %v2173 = vpack.c.b16 %v2011, %v2002
          %v2174 = vpack.c.b16 %v2012, %v2003
          %v2175 = vpack.c.b16 %v2013, %v2004
          %v2176 = vpack.c.b16 %v2014, %v2005
          %v2177 = vpack.c.b16 %v2015, %v2006
          %v2178 = vpack.c.b16 %v2016, %v2007
          %v2179 = vpack.c.b16 %v2017, %v2008
          %v2180 = vpack.c.b16 %v2027, %v2018
          %v2181 = vpack.c.b16 %v2028, %v2019
          %v2182 = vpack.c.b16 %v2029, %v2020
          %v2183 = vpack.c.b16 %v2030, %v2021
          %v2184 = vpack.c.b16 %v2031, %v2022
          %v2185 = vpack.c.b16 %v2032, %v2023
          %v2186 = vpack.c.b16 %v2033, %v2024
          %v2187 = vpack.c.b16 %v2034, %v2025
          %v2188 = vpack.c.b16 %v2035, %v2026
          %v2189 = vpack.c.b16 %v2045, %v2036
          %v2190 = vpack.c.b16 %v2046, %v2037
          %v2191 = vpack.c.b16 %v2047, %v2038
          %v2192 = vpack.c.b16 %v2048, %v2039
          %v2193 = vpack.c.b16 %v2049, %v2040
          %v2194 = vpack.c.b16 %v2050, %v2041
          %v2195 = vpack.c.b16 %v2051, %v2042
          %v2196 = vpack.c.b16 %v2052, %v2043
          %v2197 = vpack.c.b16 %v2053, %v2044
          %v2486 = vunpack.c.l.b16 %v1462
          %v2487 = vunpack.c.l.b16 %v1463
          %v2488 = vunpack.c.l.b16 %v1464
          %v2489 = vunpack.c.l.b16 %v1465
          %v2490 = vunpack.c.l.b16 %v1466
          %v2491 = vunpack.c.l.b16 %v1467
          %v2492 = vunpack.c.l.b16 %v1468
          %v2493 = vunpack.c.l.b16 %v1469
          %v2494 = vunpack.c.l.b16 %v1470
          %v2495 = vunpack.c.l.b16 %v1471
          %v2496 = vunpack.c.l.b16 %v1472
          %v2497 = vunpack.c.l.b16 %v1473
          %v2498 = vunpack.c.l.b16 %v1474
          %v2499 = vunpack.c.l.b16 %v1475
          %v2500 = vunpack.c.l.b16 %v1476
          %v2501 = vunpack.c.l.b16 %v1477
          %v2502 = vunpack.c.l.b16 %v1478
          %v2503 = vunpack.c.l.b16 %v1479
          %v2504 = vunpack.c.l.b16 %v1480
          %v2505 = vunpack.c.l.b16 %v1481
          %v2506 = vunpack.c.l.b16 %v1482
          %v2507 = vunpack.c.l.b16 %v1483
          %v2508 = vunpack.c.l.b16 %v1484
          %v2509 = vunpack.c.l.b16 %v1485
          %v2510 = vunpack.c.l.b16 %v1486
          %v2511 = vunpack.c.l.b16 %v1487
          %v2512 = vunpack.c.l.b16 %v1488
          %v2513 = vunpack.c.l.b16 %v1489
          %v2514 = vunpack.c.l.b16 %v1490
          %v2515 = vunpack.c.l.b16 %v1491
          %v2516 = vunpack.c.l.b16 %v1492
          %v2517 = vunpack.c.l.b16 %v1493
          %v2518 = vunpack.c.l.b16 %v1494
          %v2519 = vunpack.c.l.b16 %v1495
          %v2520 = vunpack.c.l.b16 %v1496
          %v2521 = vunpack.c.l.b16 %v1497
          %v2522 = vunpack.c.l.b16 %v1498
          %v2523 = vunpack.c.l.b16 %v1499
          %v2524 = vunpack.c.l.b16 %v1500
          %v2525 = vunpack.c.l.b16 %v1501
          %v2526 = vunpack.c.l.b16 %v1502
          %v2527 = vunpack.c.l.b16 %v1503
          %v2528 = vunpack.c.l.b16 %v1504
          %v2529 = vunpack.c.l.b16 %v1505
          %v2530 = vunpack.c.l.b16 %v1506
          %v2531 = vunpack.c.l.b16 %v1507
          %v2532 = vunpack.c.l.b16 %v1508
          %v2533 = vunpack.c.l.b16 %v1509
          %v2534 = vunpack.c.l.b16 %v1510
          %v2535 = vunpack.c.l.b16 %v1511
          %v2536 = vunpack.c.l.b16 %v1512
          %v2537 = vunpack.c.l.b16 %v1513
          %v2538 = vunpack.c.l.b16 %v1514
          %v2539 = vunpack.c.l.b16 %v1515
          %v2540 = vunpack.c.l.b16 %v1516
          %v2541 = vunpack.c.l.b16 %v1517
          %v2542 = vunpack.c.l.b16 %v1518
          %v2543 = vunpack.c.l.b16 %v1519
          %v2544 = vunpack.c.l.b16 %v1520
          %v2545 = vunpack.c.l.b16 %v1521
          %v2546 = vunpack.c.l.b16 %v1522
          %v2547 = vunpack.c.l.b16 %v1523
          %v2548 = vunpack.c.l.b16 %v1524
          %v2549 = vunpack.c.l.b16 %v1525
          %v2550 = vunpack.c.l.b16 %v1526
          %v2551 = vunpack.c.l.b16 %v1527
          %v2552 = vunpack.c.l.b16 %v1528
          %v2553 = vunpack.c.l.b16 %v1529
          %v2554 = vunpack.c.l.b16 %v1530
          %v2555 = vunpack.c.l.b16 %v1531
          %v2556 = vunpack.c.l.b16 %v1532
          %v2557 = vunpack.c.l.b16 %v1533
          %v2558 = vunpack.c.l.b16 %v1534
          %v2559 = vunpack.c.l.b16 %v1535
          %v2560 = vunpack.c.l.b16 %v1536
          %v2561 = vunpack.c.l.b16 %v1537
          %v2562 = vunpack.c.l.b16 %v1538
          %v2563 = vunpack.c.l.b16 %v1539
          %v2564 = vunpack.c.l.b16 %v1540
          %v2565 = vunpack.c.l.b16 %v1541
          %v2566 = vunpack.c.l.b16 %v1542
          %v2567 = vunpack.c.l.b16 %v1543
          %v2568 = vunpack.c.l.b16 %v1544
          %v2569 = vunpack.c.l.b16 %v1545
          %v2570 = vunpack.c.l.b16 %v1546
          %v2571 = vunpack.c.l.b16 %v1547
          %v2572 = vunpack.c.l.b16 %v1548
          %v2573 = vunpack.c.l.b16 %v1549
          %v2574 = vunpack.c.l.b16 %v1550
          %v2575 = vunpack.c.l.b16 %v1551
          %v2576 = vunpack.c.l.b16 %v1552
          %v2577 = vunpack.c.l.b16 %v1553
          %v2578 = vunpack.c.l.b16 %v1554
          %v2579 = vunpack.c.l.b16 %v1555
          %v2580 = vunpack.c.l.b16 %v1556
          %v2581 = vunpack.c.l.b16 %v1557
          %v2582 = vunpack.c.l.b16 %v1558
          %v2583 = vunpack.c.l.b16 %v1559
          %v2584 = vunpack.c.l.b16 %v1560
          %v2585 = vunpack.c.l.b16 %v1561
          %v2586 = vunpack.c.l.b16 %v1562
          %v2587 = vunpack.c.l.b16 %v1563
          %v2588 = vunpack.c.l.b16 %v1564
          %v2589 = vunpack.c.l.b16 %v1565
          %v2590 = vunpack.c.l.b16 %v1566
          %v2591 = vunpack.c.l.b16 %v1567
          %v2592 = vunpack.c.l.b16 %v1568
          %v2593 = vunpack.c.l.b16 %v1569
          %v2594 = vunpack.c.l.b16 %v1570
          %v2595 = vunpack.c.l.b16 %v1571
          %v2596 = vunpack.c.l.b16 %v1572
          %v2597 = vunpack.c.l.b16 %v1573
          %v2598 = vunpack.c.l.b16 %v1574
          %v2599 = vunpack.c.l.b16 %v1575
          %v2600 = vunpack.c.l.b16 %v1576
          %v2601 = vunpack.c.l.b16 %v1577
          %v2602 = vunpack.c.l.b16 %v1578
          %v2603 = vunpack.c.l.b16 %v1579
          %v2604 = vunpack.c.l.b16 %v1580
          %v2605 = vunpack.c.l.b16 %v1581
          %v2606 = vunpack.c.l.b16 %v1582
          %v2607 = vunpack.c.l.b16 %v1583
          %v2608 = vunpack.c.l.b16 %v1584
          %v2609 = vunpack.c.l.b16 %v1585
          %v2610 = vunpack.c.l.b16 %v1586
          %v2611 = vunpack.c.l.b16 %v1587
          %v2612 = vunpack.c.l.b16 %v1588
          %v2613 = vunpack.c.l.b16 %v1589
          %v2614 = vunpack.c.l.b16 %v1590
          %v2615 = vunpack.c.l.b16 %v1591
          %v2616 = vunpack.c.l.b16 %v1592
          %v2617 = vunpack.c.l.b16 %v1593
          %v2618 = vunpack.c.l.b16 %v1594
          %v2619 = vunpack.c.l.b16 %v1595
          %v2620 = vunpack.c.l.b16 %v1596
          %v2621 = vunpack.c.l.b16 %v1597
          %v2622 = vunpack.c.l.b16 %v1598
          %v2623 = vunpack.c.l.b16 %v1599
          %v2624 = vunpack.c.l.b16 %v1600
          %v2625 = vunpack.c.l.b16 %v1601
          %v2626 = vunpack.c.l.b16 %v1602
          %v2627 = vunpack.c.l.b16 %v1603
          %v2628 = vunpack.c.l.b16 %v1604
          %v2629 = vunpack.c.l.b16 %v1605
          %v2630 = vpack.c.b16 %v2487, %v2486
          %v2631 = vpack.c.b16 %v2489, %v2488
          %v2632 = vpack.c.b16 %v2491, %v2490
          %v2633 = vpack.c.b16 %v2493, %v2492
          %v2634 = vpack.c.b16 %v2495, %v2494
          %v2635 = vpack.c.b16 %v2497, %v2496
          %v2636 = vpack.c.b16 %v2499, %v2498
          %v2637 = vpack.c.b16 %v2501, %v2500
          %v2638 = vpack.c.b16 %v2503, %v2502
          %v2639 = vpack.c.b16 %v2505, %v2504
          %v2640 = vpack.c.b16 %v2507, %v2506
          %v2641 = vpack.c.b16 %v2509, %v2508
          %v2642 = vpack.c.b16 %v2511, %v2510
          %v2643 = vpack.c.b16 %v2513, %v2512
          %v2644 = vpack.c.b16 %v2515, %v2514
          %v2645 = vpack.c.b16 %v2517, %v2516
          %v2646 = vpack.c.b16 %v2519, %v2518
          %v2647 = vpack.c.b16 %v2521, %v2520
          %v2648 = vpack.c.b16 %v2523, %v2522
          %v2649 = vpack.c.b16 %v2525, %v2524
          %v2650 = vpack.c.b16 %v2527, %v2526
          %v2651 = vpack.c.b16 %v2529, %v2528
          %v2652 = vpack.c.b16 %v2531, %v2530
          %v2653 = vpack.c.b16 %v2533, %v2532
          %v2654 = vpack.c.b16 %v2535, %v2534
          %v2655 = vpack.c.b16 %v2537, %v2536
          %v2656 = vpack.c.b16 %v2539, %v2538
          %v2657 = vpack.c.b16 %v2541, %v2540
          %v2658 = vpack.c.b16 %v2543, %v2542
          %v2659 = vpack.c.b16 %v2545, %v2544
          %v2660 = vpack.c.b16 %v2547, %v2546
          %v2661 = vpack.c.b16 %v2549, %v2548
          %v2662 = vpack.c.b16 %v2551, %v2550
          %v2663 = vpack.c.b16 %v2553, %v2552
          %v2664 = vpack.c.b16 %v2555, %v2554
          %v2665 = vpack.c.b16 %v2557, %v2556
          %v2666 = vpack.c.b16 %v2559, %v2558
          %v2667 = vpack.c.b16 %v2561, %v2560
          %v2668 = vpack.c.b16 %v2563, %v2562
          %v2669 = vpack.c.b16 %v2565, %v2564
          %v2670 = vpack.c.b16 %v2567, %v2566
          %v2671 = vpack.c.b16 %v2569, %v2568
          %v2672 = vpack.c.b16 %v2571, %v2570
          %v2673 = vpack.c.b16 %v2573, %v2572
          %v2674 = vpack.c.b16 %v2575, %v2574
          %v2675 = vpack.c.b16 %v2577, %v2576
          %v2676 = vpack.c.b16 %v2579, %v2578
          %v2677 = vpack.c.b16 %v2581, %v2580
          %v2678 = vpack.c.b16 %v2583, %v2582
          %v2679 = vpack.c.b16 %v2585, %v2584
          %v2680 = vpack.c.b16 %v2587, %v2586
          %v2681 = vpack.c.b16 %v2589, %v2588
          %v2682 = vpack.c.b16 %v2591, %v2590
          %v2683 = vpack.c.b16 %v2593, %v2592
          %v2684 = vpack.c.b16 %v2595, %v2594
          %v2685 = vpack.c.b16 %v2597, %v2596
          %v2686 = vpack.c.b16 %v2599, %v2598
          %v2687 = vpack.c.b16 %v2601, %v2600
          %v2688 = vpack.c.b16 %v2603, %v2602
          %v2689 = vpack.c.b16 %v2605, %v2604
          %v2690 = vpack.c.b16 %v2607, %v2606
          %v2691 = vpack.c.b16 %v2609, %v2608
          %v2692 = vpack.c.b16 %v2611, %v2610
          %v2693 = vpack.c.b16 %v2613, %v2612
          %v2694 = vpack.c.b16 %v2615, %v2614
          %v2695 = vpack.c.b16 %v2617, %v2616
          %v2696 = vpack.c.b16 %v2619, %v2618
          %v2697 = vpack.c.b16 %v2621, %v2620
          %v2698 = vpack.c.b16 %v2623, %v2622
          %v2699 = vpack.c.b16 %v2625, %v2624
          %v2700 = vpack.c.b16 %v2627, %v2626
          %v2701 = vpack.c.b16 %v2629, %v2628
          %2774 = vmatpush.bf16.msra.mxu0 %v2637
          %2775 = vmatpush.bf16.msra.mxu0 %v2636
          %2776 = vmatpush.bf16.msra.mxu0 %v2635
          %2777 = vmatpush.bf16.msra.mxu0 %v2634
          %2778 = vmatpush.bf16.msra.mxu0 %v2633
          %2779 = vmatpush.bf16.msra.mxu0 %v2632
          %2780 = vmatpush.bf16.msra.mxu0 %v2631
          %2781 = vmatpush.bf16.msra.mxu0 %v2630
          %2782 = vmatmul.bf16.gmra.mxu0 %v2054
          %v2783 = vpop.f32.mrf.mxu0
          %v2784 = vadd.f32 0.0, %v2783
          %v2785 = vpop.f32.mrf.mxu0
          %v2786 = vadd.f32 0.0, %v2785
          %2787 = vmatmul.bf16.gmra.mxu0 %v2063
          %v2788 = vpop.f32.mrf.mxu0
          %v2789 = vadd.f32 0.0, %v2788
          %v2790 = vpop.f32.mrf.mxu0
          %v2791 = vadd.f32 0.0, %v2790
          %2792 = vmatmul.bf16.gmra.mxu0 %v2072
          %v2793 = vpop.f32.mrf.mxu0
          %v2794 = vadd.f32 0.0, %v2793
          %v2795 = vpop.f32.mrf.mxu0
          %v2796 = vadd.f32 0.0, %v2795
          %2797 = vmatmul.bf16.gmra.mxu0 %v2081
          %v2798 = vpop.f32.mrf.mxu0
          %v2799 = vadd.f32 0.0, %v2798
          %v2800 = vpop.f32.mrf.mxu0
          %v2801 = vadd.f32 0.0, %v2800
          %2802 = vmatmul.bf16.gmra.mxu0 %v2090
          %v2803 = vpop.f32.mrf.mxu0
          %v2804 = vadd.f32 0.0, %v2803
          %v2805 = vpop.f32.mrf.mxu0
          %v2806 = vadd.f32 0.0, %v2805
          %2807 = vmatmul.bf16.gmra.mxu0 %v2099
          %v2808 = vpop.f32.mrf.mxu0
          %v2809 = vadd.f32 0.0, %v2808
          %v2810 = vpop.f32.mrf.mxu0
          %v2811 = vadd.f32 0.0, %v2810
          %2812 = vmatmul.bf16.gmra.mxu0 %v2108
          %v2813 = vpop.f32.mrf.mxu0
          %v2814 = vadd.f32 0.0, %v2813
          %v2815 = vpop.f32.mrf.mxu0
          %v2816 = vadd.f32 0.0, %v2815
          %2817 = vmatmul.bf16.gmra.mxu0 %v2117
          %v2818 = vpop.f32.mrf.mxu0
          %v2819 = vadd.f32 0.0, %v2818
          %v2820 = vpop.f32.mrf.mxu0
          %v2821 = vadd.f32 0.0, %v2820
          %2822 = vmatmul.bf16.gmra.mxu0 %v2126
          %v2823 = vpop.f32.mrf.mxu0
          %v2824 = vadd.f32 0.0, %v2823
          %v2825 = vpop.f32.mrf.mxu0
          %v2826 = vadd.f32 0.0, %v2825
          %2827 = vmatmul.bf16.gmra.mxu0 %v2135
          %v2828 = vpop.f32.mrf.mxu0
          %v2829 = vadd.f32 0.0, %v2828
          %v2830 = vpop.f32.mrf.mxu0
          %v2831 = vadd.f32 0.0, %v2830
          %2832 = vmatmul.bf16.gmra.mxu0 %v2144
          %v2833 = vpop.f32.mrf.mxu0
          %v2834 = vadd.f32 0.0, %v2833
          %v2835 = vpop.f32.mrf.mxu0
          %v2836 = vadd.f32 0.0, %v2835
          %2837 = vmatmul.bf16.gmra.mxu0 %v2153
          %v2838 = vpop.f32.mrf.mxu0
          %v2839 = vadd.f32 0.0, %v2838
          %v2840 = vpop.f32.mrf.mxu0
          %v2841 = vadd.f32 0.0, %v2840
          %2842 = vmatmul.bf16.gmra.mxu0 %v2162
          %v2843 = vpop.f32.mrf.mxu0
          %v2844 = vadd.f32 0.0, %v2843
          %v2845 = vpop.f32.mrf.mxu0
          %v2846 = vadd.f32 0.0, %v2845
          %2847 = vmatmul.bf16.gmra.mxu0 %v2171
          %v2848 = vpop.f32.mrf.mxu0
          %v2849 = vadd.f32 0.0, %v2848
          %v2850 = vpop.f32.mrf.mxu0
          %v2851 = vadd.f32 0.0, %v2850
          %2852 = vmatmul.bf16.gmra.mxu0 %v2180
          %v2853 = vpop.f32.mrf.mxu0
          %v2854 = vadd.f32 0.0, %v2853
          %v2855 = vpop.f32.mrf.mxu0
          %v2856 = vadd.f32 0.0, %v2855
          %2857 = vmatmul.bf16.gmra.mxu0 %v2189
          %v2858 = vpop.f32.mrf.mxu0
          %v2859 = vadd.f32 0.0, %v2858
          %v2860 = vpop.f32.mrf.mxu0
          %v2861 = vadd.f32 0.0, %v2860
          %2862 = vdwg.mxu0
          %2863 = vmatpush.bf16.msra.mxu0 %v2645
          %2864 = vmatpush.bf16.msra.mxu0 %v2644
          %2865 = vmatpush.bf16.msra.mxu0 %v2643
          %2866 = vmatpush.bf16.msra.mxu0 %v2642
          %2867 = vmatpush.bf16.msra.mxu0 %v2641
          %2868 = vmatpush.bf16.msra.mxu0 %v2640
          %2869 = vmatpush.bf16.msra.mxu0 %v2639
          %2870 = vmatpush.bf16.msra.mxu0 %v2638
          %2871 = vmatmul.bf16.gmra.mxu0 %v2055
          %v2872 = vpop.f32.mrf.mxu0
          %v2873 = vadd.f32 %v2784, %v2872
          %v2874 = vpop.f32.mrf.mxu0
          %v2875 = vadd.f32 %v2786, %v2874
          %2876 = vmatmul.bf16.gmra.mxu0 %v2064
          %v2877 = vpop.f32.mrf.mxu0
          %v2878 = vadd.f32 %v2789, %v2877
          %v2879 = vpop.f32.mrf.mxu0
          %v2880 = vadd.f32 %v2791, %v2879
          %2881 = vmatmul.bf16.gmra.mxu0 %v2073
          %v2882 = vpop.f32.mrf.mxu0
          %v2883 = vadd.f32 %v2794, %v2882
          %v2884 = vpop.f32.mrf.mxu0
          %v2885 = vadd.f32 %v2796, %v2884
          %2886 = vmatmul.bf16.gmra.mxu0 %v2082
          %v2887 = vpop.f32.mrf.mxu0
          %v2888 = vadd.f32 %v2799, %v2887
          %v2889 = vpop.f32.mrf.mxu0
          %v2890 = vadd.f32 %v2801, %v2889
          %2891 = vmatmul.bf16.gmra.mxu0 %v2091
          %v2892 = vpop.f32.mrf.mxu0
          %v2893 = vadd.f32 %v2804, %v2892
          %v2894 = vpop.f32.mrf.mxu0
          %v2895 = vadd.f32 %v2806, %v2894
          %2896 = vmatmul.bf16.gmra.mxu0 %v2100
          %v2897 = vpop.f32.mrf.mxu0
          %v2898 = vadd.f32 %v2809, %v2897
          %v2899 = vpop.f32.mrf.mxu0
          %v2900 = vadd.f32 %v2811, %v2899
          %2901 = vmatmul.bf16.gmra.mxu0 %v2109
          %v2902 = vpop.f32.mrf.mxu0
          %v2903 = vadd.f32 %v2814, %v2902
          %v2904 = vpop.f32.mrf.mxu0
          %v2905 = vadd.f32 %v2816, %v2904
          %2906 = vmatmul.bf16.gmra.mxu0 %v2118
          %v2907 = vpop.f32.mrf.mxu0
          %v2908 = vadd.f32 %v2819, %v2907
          %v2909 = vpop.f32.mrf.mxu0
          %v2910 = vadd.f32 %v2821, %v2909
          %2911 = vmatmul.bf16.gmra.mxu0 %v2127
          %v2912 = vpop.f32.mrf.mxu0
          %v2913 = vadd.f32 %v2824, %v2912
          %v2914 = vpop.f32.mrf.mxu0
          %v2915 = vadd.f32 %v2826, %v2914
          %2916 = vmatmul.bf16.gmra.mxu0 %v2136
          %v2917 = vpop.f32.mrf.mxu0
          %v2918 = vadd.f32 %v2829, %v2917
          %v2919 = vpop.f32.mrf.mxu0
          %v2920 = vadd.f32 %v2831, %v2919
          %2921 = vmatmul.bf16.gmra.mxu0 %v2145
          %v2922 = vpop.f32.mrf.mxu0
          %v2923 = vadd.f32 %v2834, %v2922
          %v2924 = vpop.f32.mrf.mxu0
          %v2925 = vadd.f32 %v2836, %v2924
          %2926 = vmatmul.bf16.gmra.mxu0 %v2154
          %v2927 = vpop.f32.mrf.mxu0
          %v2928 = vadd.f32 %v2839, %v2927
          %v2929 = vpop.f32.mrf.mxu0
          %v2930 = vadd.f32 %v2841, %v2929
          %2931 = vmatmul.bf16.gmra.mxu0 %v2163
          %v2932 = vpop.f32.mrf.mxu0
          %v2933 = vadd.f32 %v2844, %v2932
          %v2934 = vpop.f32.mrf.mxu0
          %v2935 = vadd.f32 %v2846, %v2934
          %2936 = vmatmul.bf16.gmra.mxu0 %v2172
          %v2937 = vpop.f32.mrf.mxu0
          %v2938 = vadd.f32 %v2849, %v2937
          %v2939 = vpop.f32.mrf.mxu0
          %v2940 = vadd.f32 %v2851, %v2939
          %2941 = vmatmul.bf16.gmra.mxu0 %v2181
          %v2942 = vpop.f32.mrf.mxu0
          %v2943 = vadd.f32 %v2854, %v2942
          %v2944 = vpop.f32.mrf.mxu0
          %v2945 = vadd.f32 %v2856, %v2944
          %2946 = vmatmul.bf16.gmra.mxu0 %v2190
          %v2947 = vpop.f32.mrf.mxu0
          %v2948 = vadd.f32 %v2859, %v2947
          %v2949 = vpop.f32.mrf.mxu0
          %v2950 = vadd.f32 %v2861, %v2949
          %2951 = vdwg.mxu0
          %2952 = vmatpush.bf16.msra.mxu0 %v2653
          %2953 = vmatpush.bf16.msra.mxu0 %v2652
          %2954 = vmatpush.bf16.msra.mxu0 %v2651
          %2955 = vmatpush.bf16.msra.mxu0 %v2650
          %2956 = vmatpush.bf16.msra.mxu0 %v2649
          %2957 = vmatpush.bf16.msra.mxu0 %v2648
          %2958 = vmatpush.bf16.msra.mxu0 %v2647
          %2959 = vmatpush.bf16.msra.mxu0 %v2646
          %2960 = vmatmul.bf16.gmra.mxu0 %v2056
          %v2961 = vpop.f32.mrf.mxu0
          %v2962 = vadd.f32 %v2873, %v2961
          %v2963 = vpop.f32.mrf.mxu0
          %v2964 = vadd.f32 %v2875, %v2963
          %2965 = vmatmul.bf16.gmra.mxu0 %v2065
          %v2966 = vpop.f32.mrf.mxu0
          %v2967 = vadd.f32 %v2878, %v2966
          %v2968 = vpop.f32.mrf.mxu0
          %v2969 = vadd.f32 %v2880, %v2968
          %2970 = vmatmul.bf16.gmra.mxu0 %v2074
          %v2971 = vpop.f32.mrf.mxu0
          %v2972 = vadd.f32 %v2883, %v2971
          %v2973 = vpop.f32.mrf.mxu0
          %v2974 = vadd.f32 %v2885, %v2973
          %2975 = vmatmul.bf16.gmra.mxu0 %v2083
          %v2976 = vpop.f32.mrf.mxu0
          %v2977 = vadd.f32 %v2888, %v2976
          %v2978 = vpop.f32.mrf.mxu0
          %v2979 = vadd.f32 %v2890, %v2978
          %2980 = vmatmul.bf16.gmra.mxu0 %v2092
          %v2981 = vpop.f32.mrf.mxu0
          %v2982 = vadd.f32 %v2893, %v2981
          %v2983 = vpop.f32.mrf.mxu0
          %v2984 = vadd.f32 %v2895, %v2983
          %2985 = vmatmul.bf16.gmra.mxu0 %v2101
          %v2986 = vpop.f32.mrf.mxu0
          %v2987 = vadd.f32 %v2898, %v2986
          %v2988 = vpop.f32.mrf.mxu0
          %v2989 = vadd.f32 %v2900, %v2988
          %2990 = vmatmul.bf16.gmra.mxu0 %v2110
          %v2991 = vpop.f32.mrf.mxu0
          %v2992 = vadd.f32 %v2903, %v2991
          %v2993 = vpop.f32.mrf.mxu0
          %v2994 = vadd.f32 %v2905, %v2993
          %2995 = vmatmul.bf16.gmra.mxu0 %v2119
          %v2996 = vpop.f32.mrf.mxu0
          %v2997 = vadd.f32 %v2908, %v2996
          %v2998 = vpop.f32.mrf.mxu0
          %v2999 = vadd.f32 %v2910, %v2998
          %3000 = vmatmul.bf16.gmra.mxu0 %v2128
          %v3001 = vpop.f32.mrf.mxu0
          %v3002 = vadd.f32 %v2913, %v3001
          %v3003 = vpop.f32.mrf.mxu0
          %v3004 = vadd.f32 %v2915, %v3003
          %3005 = vmatmul.bf16.gmra.mxu0 %v2137
          %v3006 = vpop.f32.mrf.mxu0
          %v3007 = vadd.f32 %v2918, %v3006
          %v3008 = vpop.f32.mrf.mxu0
          %v3009 = vadd.f32 %v2920, %v3008
          %3010 = vmatmul.bf16.gmra.mxu0 %v2146
          %v3011 = vpop.f32.mrf.mxu0
          %v3012 = vadd.f32 %v2923, %v3011
          %v3013 = vpop.f32.mrf.mxu0
          %v3014 = vadd.f32 %v2925, %v3013
          %3015 = vmatmul.bf16.gmra.mxu0 %v2155
          %v3016 = vpop.f32.mrf.mxu0
          %v3017 = vadd.f32 %v2928, %v3016
          %v3018 = vpop.f32.mrf.mxu0
          %v3019 = vadd.f32 %v2930, %v3018
          %3020 = vmatmul.bf16.gmra.mxu0 %v2164
          %v3021 = vpop.f32.mrf.mxu0
          %v3022 = vadd.f32 %v2933, %v3021
          %v3023 = vpop.f32.mrf.mxu0
          %v3024 = vadd.f32 %v2935, %v3023
          %3025 = vmatmul.bf16.gmra.mxu0 %v2173
          %v3026 = vpop.f32.mrf.mxu0
          %v3027 = vadd.f32 %v2938, %v3026
          %v3028 = vpop.f32.mrf.mxu0
          %v3029 = vadd.f32 %v2940, %v3028
          %3030 = vmatmul.bf16.gmra.mxu0 %v2182
          %v3031 = vpop.f32.mrf.mxu0
          %v3032 = vadd.f32 %v2943, %v3031
          %v3033 = vpop.f32.mrf.mxu0
          %v3034 = vadd.f32 %v2945, %v3033
          %3035 = vmatmul.bf16.gmra.mxu0 %v2191
          %v3036 = vpop.f32.mrf.mxu0
          %v3037 = vadd.f32 %v2948, %v3036
          %v3038 = vpop.f32.mrf.mxu0
          %v3039 = vadd.f32 %v2950, %v3038
          %3040 = vdwg.mxu0
          %3041 = vmatpush.bf16.msra.mxu0 %v2661
          %3042 = vmatpush.bf16.msra.mxu0 %v2660
          %3043 = vmatpush.bf16.msra.mxu0 %v2659
          %3044 = vmatpush.bf16.msra.mxu0 %v2658
          %3045 = vmatpush.bf16.msra.mxu0 %v2657
          %3046 = vmatpush.bf16.msra.mxu0 %v2656
          %3047 = vmatpush.bf16.msra.mxu0 %v2655
          %3048 = vmatpush.bf16.msra.mxu0 %v2654
          %3049 = vmatmul.bf16.gmra.mxu0 %v2057
          %v3050 = vpop.f32.mrf.mxu0
          %v3051 = vadd.f32 %v2962, %v3050
          %v3052 = vpop.f32.mrf.mxu0
          %v3053 = vadd.f32 %v2964, %v3052
          %3054 = vmatmul.bf16.gmra.mxu0 %v2066
          %v3055 = vpop.f32.mrf.mxu0
          %v3056 = vadd.f32 %v2967, %v3055
          %v3057 = vpop.f32.mrf.mxu0
          %v3058 = vadd.f32 %v2969, %v3057
          %3059 = vmatmul.bf16.gmra.mxu0 %v2075
          %v3060 = vpop.f32.mrf.mxu0
          %v3061 = vadd.f32 %v2972, %v3060
          %v3062 = vpop.f32.mrf.mxu0
          %v3063 = vadd.f32 %v2974, %v3062
          %3064 = vmatmul.bf16.gmra.mxu0 %v2084
          %v3065 = vpop.f32.mrf.mxu0
          %v3066 = vadd.f32 %v2977, %v3065
          %v3067 = vpop.f32.mrf.mxu0
          %v3068 = vadd.f32 %v2979, %v3067
          %3069 = vmatmul.bf16.gmra.mxu0 %v2093
          %v3070 = vpop.f32.mrf.mxu0
          %v3071 = vadd.f32 %v2982, %v3070
          %v3072 = vpop.f32.mrf.mxu0
          %v3073 = vadd.f32 %v2984, %v3072
          %3074 = vmatmul.bf16.gmra.mxu0 %v2102
          %v3075 = vpop.f32.mrf.mxu0
          %v3076 = vadd.f32 %v2987, %v3075
          %v3077 = vpop.f32.mrf.mxu0
          %v3078 = vadd.f32 %v2989, %v3077
          %3079 = vmatmul.bf16.gmra.mxu0 %v2111
          %v3080 = vpop.f32.mrf.mxu0
          %v3081 = vadd.f32 %v2992, %v3080
          %v3082 = vpop.f32.mrf.mxu0
          %v3083 = vadd.f32 %v2994, %v3082
          %3084 = vmatmul.bf16.gmra.mxu0 %v2120
          %v3085 = vpop.f32.mrf.mxu0
          %v3086 = vadd.f32 %v2997, %v3085
          %v3087 = vpop.f32.mrf.mxu0
          %v3088 = vadd.f32 %v2999, %v3087
          %3089 = vmatmul.bf16.gmra.mxu0 %v2129
          %v3090 = vpop.f32.mrf.mxu0
          %v3091 = vadd.f32 %v3002, %v3090
          %v3092 = vpop.f32.mrf.mxu0
          %v3093 = vadd.f32 %v3004, %v3092
          %3094 = vmatmul.bf16.gmra.mxu0 %v2138
          %v3095 = vpop.f32.mrf.mxu0
          %v3096 = vadd.f32 %v3007, %v3095
          %v3097 = vpop.f32.mrf.mxu0
          %v3098 = vadd.f32 %v3009, %v3097
          %3099 = vmatmul.bf16.gmra.mxu0 %v2147
          %v3100 = vpop.f32.mrf.mxu0
          %v3101 = vadd.f32 %v3012, %v3100
          %v3102 = vpop.f32.mrf.mxu0
          %v3103 = vadd.f32 %v3014, %v3102
          %3104 = vmatmul.bf16.gmra.mxu0 %v2156
          %v3105 = vpop.f32.mrf.mxu0
          %v3106 = vadd.f32 %v3017, %v3105
          %v3107 = vpop.f32.mrf.mxu0
          %v3108 = vadd.f32 %v3019, %v3107
          %3109 = vmatmul.bf16.gmra.mxu0 %v2165
          %v3110 = vpop.f32.mrf.mxu0
          %v3111 = vadd.f32 %v3022, %v3110
          %v3112 = vpop.f32.mrf.mxu0
          %v3113 = vadd.f32 %v3024, %v3112
          %3114 = vmatmul.bf16.gmra.mxu0 %v2174
          %v3115 = vpop.f32.mrf.mxu0
          %v3116 = vadd.f32 %v3027, %v3115
          %v3117 = vpop.f32.mrf.mxu0
          %v3118 = vadd.f32 %v3029, %v3117
          %3119 = vmatmul.bf16.gmra.mxu0 %v2183
          %v3120 = vpop.f32.mrf.mxu0
          %v3121 = vadd.f32 %v3032, %v3120
          %v3122 = vpop.f32.mrf.mxu0
          %v3123 = vadd.f32 %v3034, %v3122
          %3124 = vmatmul.bf16.gmra.mxu0 %v2192
          %v3125 = vpop.f32.mrf.mxu0
          %v3126 = vadd.f32 %v3037, %v3125
          %v3127 = vpop.f32.mrf.mxu0
          %v3128 = vadd.f32 %v3039, %v3127
          %3129 = vdwg.mxu0
          %3130 = vmatpush.bf16.msra.mxu0 %v2669
          %3131 = vmatpush.bf16.msra.mxu0 %v2668
          %3132 = vmatpush.bf16.msra.mxu0 %v2667
          %3133 = vmatpush.bf16.msra.mxu0 %v2666
          %3134 = vmatpush.bf16.msra.mxu0 %v2665
          %3135 = vmatpush.bf16.msra.mxu0 %v2664
          %3136 = vmatpush.bf16.msra.mxu0 %v2663
          %3137 = vmatpush.bf16.msra.mxu0 %v2662
          %3138 = vmatmul.bf16.gmra.mxu0 %v2058
          %v3139 = vpop.f32.mrf.mxu0
          %v3140 = vadd.f32 %v3051, %v3139
          %v3141 = vpop.f32.mrf.mxu0
          %v3142 = vadd.f32 %v3053, %v3141
          %3143 = vmatmul.bf16.gmra.mxu0 %v2067
          %v3144 = vpop.f32.mrf.mxu0
          %v3145 = vadd.f32 %v3056, %v3144
          %v3146 = vpop.f32.mrf.mxu0
          %v3147 = vadd.f32 %v3058, %v3146
          %3148 = vmatmul.bf16.gmra.mxu0 %v2076
          %v3149 = vpop.f32.mrf.mxu0
          %v3150 = vadd.f32 %v3061, %v3149
          %v3151 = vpop.f32.mrf.mxu0
          %v3152 = vadd.f32 %v3063, %v3151
          %3153 = vmatmul.bf16.gmra.mxu0 %v2085
          %v3154 = vpop.f32.mrf.mxu0
          %v3155 = vadd.f32 %v3066, %v3154
          %v3156 = vpop.f32.mrf.mxu0
          %v3157 = vadd.f32 %v3068, %v3156
          %3158 = vmatmul.bf16.gmra.mxu0 %v2094
          %v3159 = vpop.f32.mrf.mxu0
          %v3160 = vadd.f32 %v3071, %v3159
          %v3161 = vpop.f32.mrf.mxu0
          %v3162 = vadd.f32 %v3073, %v3161
          %3163 = vmatmul.bf16.gmra.mxu0 %v2103
          %v3164 = vpop.f32.mrf.mxu0
          %v3165 = vadd.f32 %v3076, %v3164
          %v3166 = vpop.f32.mrf.mxu0
          %v3167 = vadd.f32 %v3078, %v3166
          %3168 = vmatmul.bf16.gmra.mxu0 %v2112
          %v3169 = vpop.f32.mrf.mxu0
          %v3170 = vadd.f32 %v3081, %v3169
          %v3171 = vpop.f32.mrf.mxu0
          %v3172 = vadd.f32 %v3083, %v3171
          %3173 = vmatmul.bf16.gmra.mxu0 %v2121
          %v3174 = vpop.f32.mrf.mxu0
          %v3175 = vadd.f32 %v3086, %v3174
          %v3176 = vpop.f32.mrf.mxu0
          %v3177 = vadd.f32 %v3088, %v3176
          %3178 = vmatmul.bf16.gmra.mxu0 %v2130
          %v3179 = vpop.f32.mrf.mxu0
          %v3180 = vadd.f32 %v3091, %v3179
          %v3181 = vpop.f32.mrf.mxu0
          %v3182 = vadd.f32 %v3093, %v3181
          %3183 = vmatmul.bf16.gmra.mxu0 %v2139
          %v3184 = vpop.f32.mrf.mxu0
          %v3185 = vadd.f32 %v3096, %v3184
          %v3186 = vpop.f32.mrf.mxu0
          %v3187 = vadd.f32 %v3098, %v3186
          %3188 = vmatmul.bf16.gmra.mxu0 %v2148
          %v3189 = vpop.f32.mrf.mxu0
          %v3190 = vadd.f32 %v3101, %v3189
          %v3191 = vpop.f32.mrf.mxu0
          %v3192 = vadd.f32 %v3103, %v3191
          %3193 = vmatmul.bf16.gmra.mxu0 %v2157
          %v3194 = vpop.f32.mrf.mxu0
          %v3195 = vadd.f32 %v3106, %v3194
          %v3196 = vpop.f32.mrf.mxu0
          %v3197 = vadd.f32 %v3108, %v3196
          %3198 = vmatmul.bf16.gmra.mxu0 %v2166
          %v3199 = vpop.f32.mrf.mxu0
          %v3200 = vadd.f32 %v3111, %v3199
          %v3201 = vpop.f32.mrf.mxu0
          %v3202 = vadd.f32 %v3113, %v3201
          %3203 = vmatmul.bf16.gmra.mxu0 %v2175
          %v3204 = vpop.f32.mrf.mxu0
          %v3205 = vadd.f32 %v3116, %v3204
          %v3206 = vpop.f32.mrf.mxu0
          %v3207 = vadd.f32 %v3118, %v3206
          %3208 = vmatmul.bf16.gmra.mxu0 %v2184
          %v3209 = vpop.f32.mrf.mxu0
          %v3210 = vadd.f32 %v3121, %v3209
          %v3211 = vpop.f32.mrf.mxu0
          %v3212 = vadd.f32 %v3123, %v3211
          %3213 = vmatmul.bf16.gmra.mxu0 %v2193
          %v3214 = vpop.f32.mrf.mxu0
          %v3215 = vadd.f32 %v3126, %v3214
          %v3216 = vpop.f32.mrf.mxu0
          %v3217 = vadd.f32 %v3128, %v3216
          %3218 = vdwg.mxu0
          %3219 = vmatpush.bf16.msra.mxu0 %v2677
          %3220 = vmatpush.bf16.msra.mxu0 %v2676
          %3221 = vmatpush.bf16.msra.mxu0 %v2675
          %3222 = vmatpush.bf16.msra.mxu0 %v2674
          %3223 = vmatpush.bf16.msra.mxu0 %v2673
          %3224 = vmatpush.bf16.msra.mxu0 %v2672
          %3225 = vmatpush.bf16.msra.mxu0 %v2671
          %3226 = vmatpush.bf16.msra.mxu0 %v2670
          %3227 = vmatmul.bf16.gmra.mxu0 %v2059
          %v3228 = vpop.f32.mrf.mxu0
          %v3229 = vadd.f32 %v3140, %v3228
          %v3230 = vpop.f32.mrf.mxu0
          %v3231 = vadd.f32 %v3142, %v3230
          %3232 = vmatmul.bf16.gmra.mxu0 %v2068
          %v3233 = vpop.f32.mrf.mxu0
          %v3234 = vadd.f32 %v3145, %v3233
          %v3235 = vpop.f32.mrf.mxu0
          %v3236 = vadd.f32 %v3147, %v3235
          %3237 = vmatmul.bf16.gmra.mxu0 %v2077
          %v3238 = vpop.f32.mrf.mxu0
          %v3239 = vadd.f32 %v3150, %v3238
          %v3240 = vpop.f32.mrf.mxu0
          %v3241 = vadd.f32 %v3152, %v3240
          %3242 = vmatmul.bf16.gmra.mxu0 %v2086
          %v3243 = vpop.f32.mrf.mxu0
          %v3244 = vadd.f32 %v3155, %v3243
          %v3245 = vpop.f32.mrf.mxu0
          %v3246 = vadd.f32 %v3157, %v3245
          %3247 = vmatmul.bf16.gmra.mxu0 %v2095
          %v3248 = vpop.f32.mrf.mxu0
          %v3249 = vadd.f32 %v3160, %v3248
          %v3250 = vpop.f32.mrf.mxu0
          %v3251 = vadd.f32 %v3162, %v3250
          %3252 = vmatmul.bf16.gmra.mxu0 %v2104
          %v3253 = vpop.f32.mrf.mxu0
          %v3254 = vadd.f32 %v3165, %v3253
          %v3255 = vpop.f32.mrf.mxu0
          %v3256 = vadd.f32 %v3167, %v3255
          %3257 = vmatmul.bf16.gmra.mxu0 %v2113
          %v3258 = vpop.f32.mrf.mxu0
          %v3259 = vadd.f32 %v3170, %v3258
          %v3260 = vpop.f32.mrf.mxu0
          %v3261 = vadd.f32 %v3172, %v3260
          %3262 = vmatmul.bf16.gmra.mxu0 %v2122
          %v3263 = vpop.f32.mrf.mxu0
          %v3264 = vadd.f32 %v3175, %v3263
          %v3265 = vpop.f32.mrf.mxu0
          %v3266 = vadd.f32 %v3177, %v3265
          %3267 = vmatmul.bf16.gmra.mxu0 %v2131
          %v3268 = vpop.f32.mrf.mxu0
          %v3269 = vadd.f32 %v3180, %v3268
          %v3270 = vpop.f32.mrf.mxu0
          %v3271 = vadd.f32 %v3182, %v3270
          %3272 = vmatmul.bf16.gmra.mxu0 %v2140
          %v3273 = vpop.f32.mrf.mxu0
          %v3274 = vadd.f32 %v3185, %v3273
          %v3275 = vpop.f32.mrf.mxu0
          %v3276 = vadd.f32 %v3187, %v3275
          %3277 = vmatmul.bf16.gmra.mxu0 %v2149
          %v3278 = vpop.f32.mrf.mxu0
          %v3279 = vadd.f32 %v3190, %v3278
          %v3280 = vpop.f32.mrf.mxu0
          %v3281 = vadd.f32 %v3192, %v3280
          %3282 = vmatmul.bf16.gmra.mxu0 %v2158
          %v3283 = vpop.f32.mrf.mxu0
          %v3284 = vadd.f32 %v3195, %v3283
          %v3285 = vpop.f32.mrf.mxu0
          %v3286 = vadd.f32 %v3197, %v3285
          %3287 = vmatmul.bf16.gmra.mxu0 %v2167
          %v3288 = vpop.f32.mrf.mxu0
          %v3289 = vadd.f32 %v3200, %v3288
          %v3290 = vpop.f32.mrf.mxu0
          %v3291 = vadd.f32 %v3202, %v3290
          %3292 = vmatmul.bf16.gmra.mxu0 %v2176
          %v3293 = vpop.f32.mrf.mxu0
          %v3294 = vadd.f32 %v3205, %v3293
          %v3295 = vpop.f32.mrf.mxu0
          %v3296 = vadd.f32 %v3207, %v3295
          %3297 = vmatmul.bf16.gmra.mxu0 %v2185
          %v3298 = vpop.f32.mrf.mxu0
          %v3299 = vadd.f32 %v3210, %v3298
          %v3300 = vpop.f32.mrf.mxu0
          %v3301 = vadd.f32 %v3212, %v3300
          %3302 = vmatmul.bf16.gmra.mxu0 %v2194
          %v3303 = vpop.f32.mrf.mxu0
          %v3304 = vadd.f32 %v3215, %v3303
          %v3305 = vpop.f32.mrf.mxu0
          %v3306 = vadd.f32 %v3217, %v3305
          %3307 = vdwg.mxu0
          %3308 = vmatpush.bf16.msra.mxu0 %v2685
          %3309 = vmatpush.bf16.msra.mxu0 %v2684
          %3310 = vmatpush.bf16.msra.mxu0 %v2683
          %3311 = vmatpush.bf16.msra.mxu0 %v2682
          %3312 = vmatpush.bf16.msra.mxu0 %v2681
          %3313 = vmatpush.bf16.msra.mxu0 %v2680
          %3314 = vmatpush.bf16.msra.mxu0 %v2679
          %3315 = vmatpush.bf16.msra.mxu0 %v2678
          %3316 = vmatmul.bf16.gmra.mxu0 %v2060
          %v3317 = vpop.f32.mrf.mxu0
          %v3318 = vadd.f32 %v3229, %v3317
          %v3319 = vpop.f32.mrf.mxu0
          %v3320 = vadd.f32 %v3231, %v3319
          %3321 = vmatmul.bf16.gmra.mxu0 %v2069
          %v3322 = vpop.f32.mrf.mxu0
          %v3323 = vadd.f32 %v3234, %v3322
          %v3324 = vpop.f32.mrf.mxu0
          %v3325 = vadd.f32 %v3236, %v3324
          %3326 = vmatmul.bf16.gmra.mxu0 %v2078
          %v3327 = vpop.f32.mrf.mxu0
          %v3328 = vadd.f32 %v3239, %v3327
          %v3329 = vpop.f32.mrf.mxu0
          %v3330 = vadd.f32 %v3241, %v3329
          %3331 = vmatmul.bf16.gmra.mxu0 %v2087
          %v3332 = vpop.f32.mrf.mxu0
          %v3333 = vadd.f32 %v3244, %v3332
          %v3334 = vpop.f32.mrf.mxu0
          %v3335 = vadd.f32 %v3246, %v3334
          %3336 = vmatmul.bf16.gmra.mxu0 %v2096
          %v3337 = vpop.f32.mrf.mxu0
          %v3338 = vadd.f32 %v3249, %v3337
          %v3339 = vpop.f32.mrf.mxu0
          %v3340 = vadd.f32 %v3251, %v3339
          %3341 = vmatmul.bf16.gmra.mxu0 %v2105
          %v3342 = vpop.f32.mrf.mxu0
          %v3343 = vadd.f32 %v3254, %v3342
          %v3344 = vpop.f32.mrf.mxu0
          %v3345 = vadd.f32 %v3256, %v3344
          %3346 = vmatmul.bf16.gmra.mxu0 %v2114
          %v3347 = vpop.f32.mrf.mxu0
          %v3348 = vadd.f32 %v3259, %v3347
          %v3349 = vpop.f32.mrf.mxu0
          %v3350 = vadd.f32 %v3261, %v3349
          %3351 = vmatmul.bf16.gmra.mxu0 %v2123
          %v3352 = vpop.f32.mrf.mxu0
          %v3353 = vadd.f32 %v3264, %v3352
          %v3354 = vpop.f32.mrf.mxu0
          %v3355 = vadd.f32 %v3266, %v3354
          %3356 = vmatmul.bf16.gmra.mxu0 %v2132
          %v3357 = vpop.f32.mrf.mxu0
          %v3358 = vadd.f32 %v3269, %v3357
          %v3359 = vpop.f32.mrf.mxu0
          %v3360 = vadd.f32 %v3271, %v3359
          %3361 = vmatmul.bf16.gmra.mxu0 %v2141
          %v3362 = vpop.f32.mrf.mxu0
          %v3363 = vadd.f32 %v3274, %v3362
          %v3364 = vpop.f32.mrf.mxu0
          %v3365 = vadd.f32 %v3276, %v3364
          %3366 = vmatmul.bf16.gmra.mxu0 %v2150
          %v3367 = vpop.f32.mrf.mxu0
          %v3368 = vadd.f32 %v3279, %v3367
          %v3369 = vpop.f32.mrf.mxu0
          %v3370 = vadd.f32 %v3281, %v3369
          %3371 = vmatmul.bf16.gmra.mxu0 %v2159
          %v3372 = vpop.f32.mrf.mxu0
          %v3373 = vadd.f32 %v3284, %v3372
          %v3374 = vpop.f32.mrf.mxu0
          %v3375 = vadd.f32 %v3286, %v3374
          %3376 = vmatmul.bf16.gmra.mxu0 %v2168
          %v3377 = vpop.f32.mrf.mxu0
          %v3378 = vadd.f32 %v3289, %v3377
          %v3379 = vpop.f32.mrf.mxu0
          %v3380 = vadd.f32 %v3291, %v3379
          %3381 = vmatmul.bf16.gmra.mxu0 %v2177
          %v3382 = vpop.f32.mrf.mxu0
          %v3383 = vadd.f32 %v3294, %v3382
          %v3384 = vpop.f32.mrf.mxu0
          %v3385 = vadd.f32 %v3296, %v3384
          %3386 = vmatmul.bf16.gmra.mxu0 %v2186
          %v3387 = vpop.f32.mrf.mxu0
          %v3388 = vadd.f32 %v3299, %v3387
          %v3389 = vpop.f32.mrf.mxu0
          %v3390 = vadd.f32 %v3301, %v3389
          %3391 = vmatmul.bf16.gmra.mxu0 %v2195
          %v3392 = vpop.f32.mrf.mxu0
          %v3393 = vadd.f32 %v3304, %v3392
          %v3394 = vpop.f32.mrf.mxu0
          %v3395 = vadd.f32 %v3306, %v3394
          %3396 = vdwg.mxu0
          %3397 = vmatpush.bf16.msra.mxu0 %v2693
          %3398 = vmatpush.bf16.msra.mxu0 %v2692
          %3399 = vmatpush.bf16.msra.mxu0 %v2691
          %3400 = vmatpush.bf16.msra.mxu0 %v2690
          %3401 = vmatpush.bf16.msra.mxu0 %v2689
          %3402 = vmatpush.bf16.msra.mxu0 %v2688
          %3403 = vmatpush.bf16.msra.mxu0 %v2687
          %3404 = vmatpush.bf16.msra.mxu0 %v2686
          %3405 = vmatmul.bf16.gmra.mxu0 %v2061
          %v3406 = vpop.f32.mrf.mxu0
          %v3407 = vadd.f32 %v3318, %v3406
          %v3408 = vpop.f32.mrf.mxu0
          %v3409 = vadd.f32 %v3320, %v3408
          %3410 = vmatmul.bf16.gmra.mxu0 %v2070
          %v3411 = vpop.f32.mrf.mxu0
          %v3412 = vadd.f32 %v3323, %v3411
          %v3413 = vpop.f32.mrf.mxu0
          %v3414 = vadd.f32 %v3325, %v3413
          %3415 = vmatmul.bf16.gmra.mxu0 %v2079
          %v3416 = vpop.f32.mrf.mxu0
          %v3417 = vadd.f32 %v3328, %v3416
          %v3418 = vpop.f32.mrf.mxu0
          %v3419 = vadd.f32 %v3330, %v3418
          %3420 = vmatmul.bf16.gmra.mxu0 %v2088
          %v3421 = vpop.f32.mrf.mxu0
          %v3422 = vadd.f32 %v3333, %v3421
          %v3423 = vpop.f32.mrf.mxu0
          %v3424 = vadd.f32 %v3335, %v3423
          %3425 = vmatmul.bf16.gmra.mxu0 %v2097
          %v3426 = vpop.f32.mrf.mxu0
          %v3427 = vadd.f32 %v3338, %v3426
          %v3428 = vpop.f32.mrf.mxu0
          %v3429 = vadd.f32 %v3340, %v3428
          %3430 = vmatmul.bf16.gmra.mxu0 %v2106
          %v3431 = vpop.f32.mrf.mxu0
          %v3432 = vadd.f32 %v3343, %v3431
          %v3433 = vpop.f32.mrf.mxu0
          %v3434 = vadd.f32 %v3345, %v3433
          %3435 = vmatmul.bf16.gmra.mxu0 %v2115
          %v3436 = vpop.f32.mrf.mxu0
          %v3437 = vadd.f32 %v3348, %v3436
          %v3438 = vpop.f32.mrf.mxu0
          %v3439 = vadd.f32 %v3350, %v3438
          %3440 = vmatmul.bf16.gmra.mxu0 %v2124
          %v3441 = vpop.f32.mrf.mxu0
          %v3442 = vadd.f32 %v3353, %v3441
          %v3443 = vpop.f32.mrf.mxu0
          %v3444 = vadd.f32 %v3355, %v3443
          %3445 = vmatmul.bf16.gmra.mxu0 %v2133
          %v3446 = vpop.f32.mrf.mxu0
          %v3447 = vadd.f32 %v3358, %v3446
          %v3448 = vpop.f32.mrf.mxu0
          %v3449 = vadd.f32 %v3360, %v3448
          %3450 = vmatmul.bf16.gmra.mxu0 %v2142
          %v3451 = vpop.f32.mrf.mxu0
          %v3452 = vadd.f32 %v3363, %v3451
          %v3453 = vpop.f32.mrf.mxu0
          %v3454 = vadd.f32 %v3365, %v3453
          %3455 = vmatmul.bf16.gmra.mxu0 %v2151
          %v3456 = vpop.f32.mrf.mxu0
          %v3457 = vadd.f32 %v3368, %v3456
          %v3458 = vpop.f32.mrf.mxu0
          %v3459 = vadd.f32 %v3370, %v3458
          %3460 = vmatmul.bf16.gmra.mxu0 %v2160
          %v3461 = vpop.f32.mrf.mxu0
          %v3462 = vadd.f32 %v3373, %v3461
          %v3463 = vpop.f32.mrf.mxu0
          %v3464 = vadd.f32 %v3375, %v3463
          %3465 = vmatmul.bf16.gmra.mxu0 %v2169
          %v3466 = vpop.f32.mrf.mxu0
          %v3467 = vadd.f32 %v3378, %v3466
          %v3468 = vpop.f32.mrf.mxu0
          %v3469 = vadd.f32 %v3380, %v3468
          %3470 = vmatmul.bf16.gmra.mxu0 %v2178
          %v3471 = vpop.f32.mrf.mxu0
          %v3472 = vadd.f32 %v3383, %v3471
          %v3473 = vpop.f32.mrf.mxu0
          %v3474 = vadd.f32 %v3385, %v3473
          %3475 = vmatmul.bf16.gmra.mxu0 %v2187
          %v3476 = vpop.f32.mrf.mxu0
          %v3477 = vadd.f32 %v3388, %v3476
          %v3478 = vpop.f32.mrf.mxu0
          %v3479 = vadd.f32 %v3390, %v3478
          %3480 = vmatmul.bf16.gmra.mxu0 %v2196
          %v3481 = vpop.f32.mrf.mxu0
          %v3482 = vadd.f32 %v3393, %v3481
          %v3483 = vpop.f32.mrf.mxu0
          %v3484 = vadd.f32 %v3395, %v3483
          %3485 = vdwg.mxu0
          %3486 = vmatpush.bf16.msra.mxu0 %v2701
          %3487 = vmatpush.bf16.msra.mxu0 %v2700
          %3488 = vmatpush.bf16.msra.mxu0 %v2699
          %3489 = vmatpush.bf16.msra.mxu0 %v2698
          %3490 = vmatpush.bf16.msra.mxu0 %v2697
          %3491 = vmatpush.bf16.msra.mxu0 %v2696
          %3492 = vmatpush.bf16.msra.mxu0 %v2695
          %3493 = vmatpush.bf16.msra.mxu0 %v2694
          %3494 = vmatmul.bf16.gmra.mxu0 %v2062
          %v3495 = vpop.f32.mrf.mxu0
          %v3496 = vadd.f32 %v3407, %v3495
          %v3497 = vpop.f32.mrf.mxu0
          %v3498 = vadd.f32 %v3409, %v3497
          %3499 = vmatmul.bf16.gmra.mxu0 %v2071
          %v3500 = vpop.f32.mrf.mxu0
          %v3501 = vadd.f32 %v3412, %v3500
          %v3502 = vpop.f32.mrf.mxu0
          %v3503 = vadd.f32 %v3414, %v3502
          %3504 = vmatmul.bf16.gmra.mxu0 %v2080
          %v3505 = vpop.f32.mrf.mxu0
          %v3506 = vadd.f32 %v3417, %v3505
          %v3507 = vpop.f32.mrf.mxu0
          %v3508 = vadd.f32 %v3419, %v3507
          %3509 = vmatmul.bf16.gmra.mxu0 %v2089
          %v3510 = vpop.f32.mrf.mxu0
          %v3511 = vadd.f32 %v3422, %v3510
          %v3512 = vpop.f32.mrf.mxu0
          %v3513 = vadd.f32 %v3424, %v3512
          %3514 = vmatmul.bf16.gmra.mxu0 %v2098
          %v3515 = vpop.f32.mrf.mxu0
          %v3516 = vadd.f32 %v3427, %v3515
          %v3517 = vpop.f32.mrf.mxu0
          %v3518 = vadd.f32 %v3429, %v3517
          %3519 = vmatmul.bf16.gmra.mxu0 %v2107
          %v3520 = vpop.f32.mrf.mxu0
          %v3521 = vadd.f32 %v3432, %v3520
          %v3522 = vpop.f32.mrf.mxu0
          %v3523 = vadd.f32 %v3434, %v3522
          %3524 = vmatmul.bf16.gmra.mxu0 %v2116
          %v3525 = vpop.f32.mrf.mxu0
          %v3526 = vadd.f32 %v3437, %v3525
          %v3527 = vpop.f32.mrf.mxu0
          %v3528 = vadd.f32 %v3439, %v3527
          %3529 = vmatmul.bf16.gmra.mxu0 %v2125
          %v3530 = vpop.f32.mrf.mxu0
          %v3531 = vadd.f32 %v3442, %v3530
          %v3532 = vpop.f32.mrf.mxu0
          %v3533 = vadd.f32 %v3444, %v3532
          %3534 = vmatmul.bf16.gmra.mxu0 %v2134
          %v3535 = vpop.f32.mrf.mxu0
          %v3536 = vadd.f32 %v3447, %v3535
          %v3537 = vpop.f32.mrf.mxu0
          %v3538 = vadd.f32 %v3449, %v3537
          %3539 = vmatmul.bf16.gmra.mxu0 %v2143
          %v3540 = vpop.f32.mrf.mxu0
          %v3541 = vadd.f32 %v3452, %v3540
          %v3542 = vpop.f32.mrf.mxu0
          %v3543 = vadd.f32 %v3454, %v3542
          %3544 = vmatmul.bf16.gmra.mxu0 %v2152
          %v3545 = vpop.f32.mrf.mxu0
          %v3546 = vadd.f32 %v3457, %v3545
          %v3547 = vpop.f32.mrf.mxu0
          %v3548 = vadd.f32 %v3459, %v3547
          %3549 = vmatmul.bf16.gmra.mxu0 %v2161
          %v3550 = vpop.f32.mrf.mxu0
          %v3551 = vadd.f32 %v3462, %v3550
          %v3552 = vpop.f32.mrf.mxu0
          %v3553 = vadd.f32 %v3464, %v3552
          %3554 = vmatmul.bf16.gmra.mxu0 %v2170
          %v3555 = vpop.f32.mrf.mxu0
          %v3556 = vadd.f32 %v3467, %v3555
          %v3557 = vpop.f32.mrf.mxu0
          %v3558 = vadd.f32 %v3469, %v3557
          %3559 = vmatmul.bf16.gmra.mxu0 %v2179
          %v3560 = vpop.f32.mrf.mxu0
          %v3561 = vadd.f32 %v3472, %v3560
          %v3562 = vpop.f32.mrf.mxu0
          %v3563 = vadd.f32 %v3474, %v3562
          %3564 = vmatmul.bf16.gmra.mxu0 %v2188
          %v3565 = vpop.f32.mrf.mxu0
          %v3566 = vadd.f32 %v3477, %v3565
          %v3567 = vpop.f32.mrf.mxu0
          %v3568 = vadd.f32 %v3479, %v3567
          %3569 = vmatmul.bf16.gmra.mxu0 %v2197
          %v3570 = vpop.f32.mrf.mxu0
          %v3571 = vadd.f32 %v3482, %v3570
          %v3572 = vpop.f32.mrf.mxu0
          %v3573 = vadd.f32 %v3484, %v3572
          %3574 = vdwg.mxu0
          %v3575 = vmax.f32 %v3496, 0.0
          %v3576 = vmax.f32 %v3498, 0.0
          %v3577 = vmax.f32 %v3501, 0.0
          %v3578 = vmax.f32 %v3503, 0.0
          %v3579 = vmax.f32 %v3506, 0.0
          %v3580 = vmax.f32 %v3508, 0.0
          %v3581 = vmax.f32 %v3511, 0.0
          %v3582 = vmax.f32 %v3513, 0.0
          %v3583 = vmax.f32 %v3516, 0.0
          %v3584 = vmax.f32 %v3518, 0.0
          %v3585 = vmax.f32 %v3521, 0.0
          %v3586 = vmax.f32 %v3523, 0.0
          %v3587 = vmax.f32 %v3526, 0.0
          %v3588 = vmax.f32 %v3528, 0.0
          %v3589 = vmax.f32 %v3531, 0.0
          %v3590 = vmax.f32 %v3533, 0.0
          %v3591 = vmax.f32 %v3536, 0.0
          %v3592 = vmax.f32 %v3538, 0.0
          %v3593 = vmax.f32 %v3541, 0.0
          %v3594 = vmax.f32 %v3543, 0.0
          %v3595 = vmax.f32 %v3546, 0.0
          %v3596 = vmax.f32 %v3548, 0.0
          %v3597 = vmax.f32 %v3551, 0.0
          %v3598 = vmax.f32 %v3553, 0.0
          %v3599 = vmax.f32 %v3556, 0.0
          %v3600 = vmax.f32 %v3558, 0.0
          %v3601 = vmax.f32 %v3561, 0.0
          %v3602 = vmax.f32 %v3563, 0.0
          %v3603 = vmax.f32 %v3566, 0.0
          %v3604 = vmax.f32 %v3568, 0.0
          %v3605 = vmax.f32 %v3571, 0.0
          %v3606 = vmax.f32 %v3573, 0.0
          %v3607 = vpack.c.bf16 %v3576, %v3575
          %v3608 = vpack.c.bf16 %v3578, %v3577
          %v3609 = vpack.c.bf16 %v3580, %v3579
          %v3610 = vpack.c.bf16 %v3582, %v3581
          %v3611 = vpack.c.bf16 %v3584, %v3583
          %v3612 = vpack.c.bf16 %v3586, %v3585
          %v3613 = vpack.c.bf16 %v3588, %v3587
          %v3614 = vpack.c.bf16 %v3590, %v3589
          %v3615 = vpack.c.bf16 %v3592, %v3591
          %v3616 = vpack.c.bf16 %v3594, %v3593
          %v3617 = vpack.c.bf16 %v3596, %v3595
          %v3618 = vpack.c.bf16 %v3598, %v3597
          %v3619 = vpack.c.bf16 %v3600, %v3599
          %v3620 = vpack.c.bf16 %v3602, %v3601
          %v3621 = vpack.c.bf16 %v3604, %v3603
          %v3622 = vpack.c.bf16 %v3606, %v3605
          %s3623 = smul.u32 %s332, 16
          %s3624 = smul.addr %s3623, 4
          %s3625 = scalar_lea.vmem [#allocation10], %s3624
          %v3626 = vld [vmem:[%s3625] sm:$0xf]
          %v3627 = vld [vmem:[%s3625 + $0x4] sm:$0xf]
          %v3628 = vld [vmem:[%s3625 + $0x8] sm:$0xf]
          %v3629 = vld [vmem:[%s3625 + $0xc] sm:$0xf]
          %v3630 = vld [vmem:[%s3625 + $0x10] sm:$0xf]
          %v3631 = vld [vmem:[%s3625 + $0x14] sm:$0xf]
          %v3632 = vld [vmem:[%s3625 + $0x18] sm:$0xf]
          %v3633 = vld [vmem:[%s3625 + $0x1c] sm:$0xf]
          %v3634 = vld [vmem:[%s3625 + $0x20] sm:$0xf]
          %v3635 = vld [vmem:[%s3625 + $0x24] sm:$0xf]
          %v3636 = vld [vmem:[%s3625 + $0x28] sm:$0xf]
          %v3637 = vld [vmem:[%s3625 + $0x2c] sm:$0xf]
          %v3638 = vld [vmem:[%s3625 + $0x30] sm:$0xf]
          %v3639 = vld [vmem:[%s3625 + $0x34] sm:$0xf]
          %v3640 = vld [vmem:[%s3625 + $0x38] sm:$0xf]
          %v3641 = vld [vmem:[%s3625 + $0x3c] sm:$0xf]
          %v3658 = vunpack.c.l.b16 %v3626
          %v3659 = vunpack.c.l.b16 %v3627
          %v3660 = vunpack.c.l.b16 %v3628
          %v3661 = vunpack.c.l.b16 %v3629
          %v3662 = vunpack.c.l.b16 %v3630
          %v3663 = vunpack.c.l.b16 %v3631
          %v3664 = vunpack.c.l.b16 %v3632
          %v3665 = vunpack.c.l.b16 %v3633
          %v3666 = vunpack.c.l.b16 %v3634
          %v3667 = vunpack.c.l.b16 %v3635
          %v3668 = vunpack.c.l.b16 %v3636
          %v3669 = vunpack.c.l.b16 %v3637
          %v3670 = vunpack.c.l.b16 %v3638
          %v3671 = vunpack.c.l.b16 %v3639
          %v3672 = vunpack.c.l.b16 %v3640
          %v3673 = vunpack.c.l.b16 %v3641
          %v3674 = vpack.c.b16 %v3659, %v3658
          %v3675 = vpack.c.b16 %v3661, %v3660
          %v3676 = vpack.c.b16 %v3663, %v3662
          %v3677 = vpack.c.b16 %v3665, %v3664
          %v3678 = vpack.c.b16 %v3667, %v3666
          %v3679 = vpack.c.b16 %v3669, %v3668
          %v3680 = vpack.c.b16 %v3671, %v3670
          %v3681 = vpack.c.b16 %v3673, %v3672
          %3690 = vmatpush.bf16.msra.mxu0 %v3681
          %3691 = vmatpush.bf16.msra.mxu0 %v3680
          %3692 = vmatpush.bf16.msra.mxu0 %v3679
          %3693 = vmatpush.bf16.msra.mxu0 %v3678
          %3694 = vmatpush.bf16.msra.mxu0 %v3677
          %3695 = vmatpush.bf16.msra.mxu0 %v3676
          %3696 = vmatpush.bf16.msra.mxu0 %v3675
          %3697 = vmatpush.bf16.msra.mxu0 %v3674
          %3698 = vmatmul.bf16.gmra.mxu0 %v3607
          %v3699 = vpop.f32.mrf.mxu0
          %v3700 = vadd.f32 0.0, %v3699
          %v3701 = vpop.f32.mrf.mxu0
          %v3702 = vadd.f32 0.0, %v3701
          %3703 = vmatmul.bf16.gmra.mxu0 %v3608
          %v3704 = vpop.f32.mrf.mxu0
          %v3705 = vadd.f32 0.0, %v3704
          %v3706 = vpop.f32.mrf.mxu0
          %v3707 = vadd.f32 0.0, %v3706
          %3708 = vmatmul.bf16.gmra.mxu0 %v3609
          %v3709 = vpop.f32.mrf.mxu0
          %v3710 = vadd.f32 0.0, %v3709
          %v3711 = vpop.f32.mrf.mxu0
          %v3712 = vadd.f32 0.0, %v3711
          %3713 = vmatmul.bf16.gmra.mxu0 %v3610
          %v3714 = vpop.f32.mrf.mxu0
          %v3715 = vadd.f32 0.0, %v3714
          %v3716 = vpop.f32.mrf.mxu0
          %v3717 = vadd.f32 0.0, %v3716
          %3718 = vmatmul.bf16.gmra.mxu0 %v3611
          %v3719 = vpop.f32.mrf.mxu0
          %v3720 = vadd.f32 0.0, %v3719
          %v3721 = vpop.f32.mrf.mxu0
          %v3722 = vadd.f32 0.0, %v3721
          %3723 = vmatmul.bf16.gmra.mxu0 %v3612
          %v3724 = vpop.f32.mrf.mxu0
          %v3725 = vadd.f32 0.0, %v3724
          %v3726 = vpop.f32.mrf.mxu0
          %v3727 = vadd.f32 0.0, %v3726
          %3728 = vmatmul.bf16.gmra.mxu0 %v3613
          %v3729 = vpop.f32.mrf.mxu0
          %v3730 = vadd.f32 0.0, %v3729
          %v3731 = vpop.f32.mrf.mxu0
          %v3732 = vadd.f32 0.0, %v3731
          %3733 = vmatmul.bf16.gmra.mxu0 %v3614
          %v3734 = vpop.f32.mrf.mxu0
          %v3735 = vadd.f32 0.0, %v3734
          %v3736 = vpop.f32.mrf.mxu0
          %v3737 = vadd.f32 0.0, %v3736
          %3738 = vmatmul.bf16.gmra.mxu0 %v3615
          %v3739 = vpop.f32.mrf.mxu0
          %v3740 = vadd.f32 0.0, %v3739
          %v3741 = vpop.f32.mrf.mxu0
          %v3742 = vadd.f32 0.0, %v3741
          %3743 = vmatmul.bf16.gmra.mxu0 %v3616
          %v3744 = vpop.f32.mrf.mxu0
          %v3745 = vadd.f32 0.0, %v3744
          %v3746 = vpop.f32.mrf.mxu0
          %v3747 = vadd.f32 0.0, %v3746
          %3748 = vmatmul.bf16.gmra.mxu0 %v3617
          %v3749 = vpop.f32.mrf.mxu0
          %v3750 = vadd.f32 0.0, %v3749
          %v3751 = vpop.f32.mrf.mxu0
          %v3752 = vadd.f32 0.0, %v3751
          %3753 = vmatmul.bf16.gmra.mxu0 %v3618
          %v3754 = vpop.f32.mrf.mxu0
          %v3755 = vadd.f32 0.0, %v3754
          %v3756 = vpop.f32.mrf.mxu0
          %v3757 = vadd.f32 0.0, %v3756
          %3758 = vmatmul.bf16.gmra.mxu0 %v3619
          %v3759 = vpop.f32.mrf.mxu0
          %v3760 = vadd.f32 0.0, %v3759
          %v3761 = vpop.f32.mrf.mxu0
          %v3762 = vadd.f32 0.0, %v3761
          %3763 = vmatmul.bf16.gmra.mxu0 %v3620
          %v3764 = vpop.f32.mrf.mxu0
          %v3765 = vadd.f32 0.0, %v3764
          %v3766 = vpop.f32.mrf.mxu0
          %v3767 = vadd.f32 0.0, %v3766
          %3768 = vmatmul.bf16.gmra.mxu0 %v3621
          %v3769 = vpop.f32.mrf.mxu0
          %v3770 = vadd.f32 0.0, %v3769
          %v3771 = vpop.f32.mrf.mxu0
          %v3772 = vadd.f32 0.0, %v3771
          %3773 = vmatmul.bf16.gmra.mxu0 %v3622
          %v3774 = vpop.f32.mrf.mxu0
          %v3775 = vadd.f32 0.0, %v3774
          %v3776 = vpop.f32.mrf.mxu0
          %v3777 = vadd.f32 0.0, %v3776
          %3778 = vdwg.mxu0
          %v3779 = vld [vmem:[#allocation2] sm:$0xff]
          %v3780 = vld [vmem:[#allocation2 + $0x8] sm:$0xff]
          %v3781 = vld [vmem:[#allocation2 + $0x10] sm:$0xff]
          %v3782 = vld [vmem:[#allocation2 + $0x18] sm:$0xff]
          %v3783 = vld [vmem:[#allocation2 + $0x20] sm:$0xff]
          %v3784 = vld [vmem:[#allocation2 + $0x28] sm:$0xff]
          %v3785 = vld [vmem:[#allocation2 + $0x30] sm:$0xff]
          %v3786 = vld [vmem:[#allocation2 + $0x38] sm:$0xff]
          %v3787 = vld [vmem:[#allocation2 + $0x40] sm:$0xff]
          %v3788 = vld [vmem:[#allocation2 + $0x48] sm:$0xff]
          %v3789 = vld [vmem:[#allocation2 + $0x50] sm:$0xff]
          %v3790 = vld [vmem:[#allocation2 + $0x58] sm:$0xff]
          %v3791 = vld [vmem:[#allocation2 + $0x60] sm:$0xff]
          %v3792 = vld [vmem:[#allocation2 + $0x68] sm:$0xff]
          %v3793 = vld [vmem:[#allocation2 + $0x70] sm:$0xff]
          %v3794 = vld [vmem:[#allocation2 + $0x78] sm:$0xff]
          %v3795 = vld [vmem:[#allocation2 + $0x80] sm:$0xff]
          %v3796 = vld [vmem:[#allocation2 + $0x88] sm:$0xff]
          %v3797 = vld [vmem:[#allocation2 + $0x90] sm:$0xff]
          %v3798 = vld [vmem:[#allocation2 + $0x98] sm:$0xff]
          %v3799 = vld [vmem:[#allocation2 + $0xa0] sm:$0xff]
          %v3800 = vld [vmem:[#allocation2 + $0xa8] sm:$0xff]
          %v3801 = vld [vmem:[#allocation2 + $0xb0] sm:$0xff]
          %v3802 = vld [vmem:[#allocation2 + $0xb8] sm:$0xff]
          %v3803 = vld [vmem:[#allocation2 + $0xc0] sm:$0xff]
          %v3804 = vld [vmem:[#allocation2 + $0xc8] sm:$0xff]
          %v3805 = vld [vmem:[#allocation2 + $0xd0] sm:$0xff]
          %v3806 = vld [vmem:[#allocation2 + $0xd8] sm:$0xff]
          %v3807 = vld [vmem:[#allocation2 + $0xe0] sm:$0xff]
          %v3808 = vld [vmem:[#allocation2 + $0xe8] sm:$0xff]
          %v3809 = vld [vmem:[#allocation2 + $0xf0] sm:$0xff]
          %v3810 = vld [vmem:[#allocation2 + $0xf8] sm:$0xff]
          %v3811 = vadd.f32 %v3779, %v3700
          %v3812 = vadd.f32 %v3780, %v3702
          %v3813 = vadd.f32 %v3781, %v3705
          %v3814 = vadd.f32 %v3782, %v3707
          %v3815 = vadd.f32 %v3783, %v3710
          %v3816 = vadd.f32 %v3784, %v3712
          %v3817 = vadd.f32 %v3785, %v3715
          %v3818 = vadd.f32 %v3786, %v3717
          %v3819 = vadd.f32 %v3787, %v3720
          %v3820 = vadd.f32 %v3788, %v3722
          %v3821 = vadd.f32 %v3789, %v3725
          %v3822 = vadd.f32 %v3790, %v3727
          %v3823 = vadd.f32 %v3791, %v3730
          %v3824 = vadd.f32 %v3792, %v3732
          %v3825 = vadd.f32 %v3793, %v3735
          %v3826 = vadd.f32 %v3794, %v3737
          %v3827 = vadd.f32 %v3795, %v3740
          %v3828 = vadd.f32 %v3796, %v3742
          %v3829 = vadd.f32 %v3797, %v3745
          %v3830 = vadd.f32 %v3798, %v3747
          %v3831 = vadd.f32 %v3799, %v3750
          %v3832 = vadd.f32 %v3800, %v3752
          %v3833 = vadd.f32 %v3801, %v3755
          %v3834 = vadd.f32 %v3802, %v3757
          %v3835 = vadd.f32 %v3803, %v3760
          %v3836 = vadd.f32 %v3804, %v3762
          %v3837 = vadd.f32 %v3805, %v3765
          %v3838 = vadd.f32 %v3806, %v3767
          %v3839 = vadd.f32 %v3807, %v3770
          %v3840 = vadd.f32 %v3808, %v3772
          %v3841 = vadd.f32 %v3809, %v3775
          %v3842 = vadd.f32 %v3810, %v3777
          %3843 = vst [vmem:[#allocation2] sm:$0xff] %v3811
          %3844 = vst [vmem:[#allocation2 + $0x8] sm:$0xff] %v3812
          %3845 = vst [vmem:[#allocation2 + $0x10] sm:$0xff] %v3813
          %3846 = vst [vmem:[#allocation2 + $0x18] sm:$0xff] %v3814
          %3847 = vst [vmem:[#allocation2 + $0x20] sm:$0xff] %v3815
          %3848 = vst [vmem:[#allocation2 + $0x28] sm:$0xff] %v3816
          %3849 = vst [vmem:[#allocation2 + $0x30] sm:$0xff] %v3817
          %3850 = vst [vmem:[#allocation2 + $0x38] sm:$0xff] %v3818
          %3851 = vst [vmem:[#allocation2 + $0x40] sm:$0xff] %v3819
          %3852 = vst [vmem:[#allocation2 + $0x48] sm:$0xff] %v3820
          %3853 = vst [vmem:[#allocation2 + $0x50] sm:$0xff] %v3821
          %3854 = vst [vmem:[#allocation2 + $0x58] sm:$0xff] %v3822
          %3855 = vst [vmem:[#allocation2 + $0x60] sm:$0xff] %v3823
          %3856 = vst [vmem:[#allocation2 + $0x68] sm:$0xff] %v3824
          %3857 = vst [vmem:[#allocation2 + $0x70] sm:$0xff] %v3825
          %3858 = vst [vmem:[#allocation2 + $0x78] sm:$0xff] %v3826
          %3859 = vst [vmem:[#allocation2 + $0x80] sm:$0xff] %v3827
          %3860 = vst [vmem:[#allocation2 + $0x88] sm:$0xff] %v3828
          %3861 = vst [vmem:[#allocation2 + $0x90] sm:$0xff] %v3829
          %3862 = vst [vmem:[#allocation2 + $0x98] sm:$0xff] %v3830
          %3863 = vst [vmem:[#allocation2 + $0xa0] sm:$0xff] %v3831
          %3864 = vst [vmem:[#allocation2 + $0xa8] sm:$0xff] %v3832
          %3865 = vst [vmem:[#allocation2 + $0xb0] sm:$0xff] %v3833
          %3866 = vst [vmem:[#allocation2 + $0xb8] sm:$0xff] %v3834
          %3867 = vst [vmem:[#allocation2 + $0xc0] sm:$0xff] %v3835
          %3868 = vst [vmem:[#allocation2 + $0xc8] sm:$0xff] %v3836
          %3869 = vst [vmem:[#allocation2 + $0xd0] sm:$0xff] %v3837
          %3870 = vst [vmem:[#allocation2 + $0xd8] sm:$0xff] %v3838
          %3871 = vst [vmem:[#allocation2 + $0xe0] sm:$0xff] %v3839
          %3872 = vst [vmem:[#allocation2 + $0xe8] sm:$0xff] %v3840
          %3873 = vst [vmem:[#allocation2 + $0xf0] sm:$0xff] %v3841
          %3874 = vst [vmem:[#allocation2 + $0xf8] sm:$0xff] %v3842
        $region49: #{tpu_custom_call.1} parent=31 // loop_footer
          %s336 = sadd.s32 1, %s332
        $region50: #{tpu_custom_call.1} parent=31 // loop_footer_branch
          %331 = sbr.rel target = $region46
        $region51: #{tpu_custom_call.1} parent=31 // loop_exit
          _
        %v3875 = vld [vmem:[#allocation2] sm:$0xff]
        %v3876 = vld [vmem:[#allocation2 + $0x8] sm:$0xff]
        %v3877 = vld [vmem:[#allocation2 + $0x10] sm:$0xff]
        %v3878 = vld [vmem:[#allocation2 + $0x18] sm:$0xff]
        %v3879 = vld [vmem:[#allocation2 + $0x20] sm:$0xff]
        %v3880 = vld [vmem:[#allocation2 + $0x28] sm:$0xff]
        %v3881 = vld [vmem:[#allocation2 + $0x30] sm:$0xff]
        %v3882 = vld [vmem:[#allocation2 + $0x38] sm:$0xff]
        %v3883 = vld [vmem:[#allocation2 + $0x40] sm:$0xff]
        %v3884 = vld [vmem:[#allocation2 + $0x48] sm:$0xff]
        %v3885 = vld [vmem:[#allocation2 + $0x50] sm:$0xff]
        %v3886 = vld [vmem:[#allocation2 + $0x58] sm:$0xff]
        %v3887 = vld [vmem:[#allocation2 + $0x60] sm:$0xff]
        %v3888 = vld [vmem:[#allocation2 + $0x68] sm:$0xff]
        %v3889 = vld [vmem:[#allocation2 + $0x70] sm:$0xff]
        %v3890 = vld [vmem:[#allocation2 + $0x78] sm:$0xff]
        %v3891 = vld [vmem:[#allocation2 + $0x80] sm:$0xff]
        %v3892 = vld [vmem:[#allocation2 + $0x88] sm:$0xff]
        %v3893 = vld [vmem:[#allocation2 + $0x90] sm:$0xff]
        %v3894 = vld [vmem:[#allocation2 + $0x98] sm:$0xff]
        %v3895 = vld [vmem:[#allocation2 + $0xa0] sm:$0xff]
        %v3896 = vld [vmem:[#allocation2 + $0xa8] sm:$0xff]
        %v3897 = vld [vmem:[#allocation2 + $0xb0] sm:$0xff]
        %v3898 = vld [vmem:[#allocation2 + $0xb8] sm:$0xff]
        %v3899 = vld [vmem:[#allocation2 + $0xc0] sm:$0xff]
        %v3900 = vld [vmem:[#allocation2 + $0xc8] sm:$0xff]
        %v3901 = vld [vmem:[#allocation2 + $0xd0] sm:$0xff]
        %v3902 = vld [vmem:[#allocation2 + $0xd8] sm:$0xff]
        %v3903 = vld [vmem:[#allocation2 + $0xe0] sm:$0xff]
        %v3904 = vld [vmem:[#allocation2 + $0xe8] sm:$0xff]
        %v3905 = vld [vmem:[#allocation2 + $0xf0] sm:$0xff]
        %v3906 = vld [vmem:[#allocation2 + $0xf8] sm:$0xff]
        %v3907 = vmax.f32 %v3875, 0.0
        %v3908 = vmax.f32 %v3876, 0.0
        %v3909 = vmax.f32 %v3877, 0.0
        %v3910 = vmax.f32 %v3878, 0.0
        %v3911 = vmax.f32 %v3879, 0.0
        %v3912 = vmax.f32 %v3880, 0.0
        %v3913 = vmax.f32 %v3881, 0.0
        %v3914 = vmax.f32 %v3882, 0.0
        %v3915 = vmax.f32 %v3883, 0.0
        %v3916 = vmax.f32 %v3884, 0.0
        %v3917 = vmax.f32 %v3885, 0.0
        %v3918 = vmax.f32 %v3886, 0.0
        %v3919 = vmax.f32 %v3887, 0.0
        %v3920 = vmax.f32 %v3888, 0.0
        %v3921 = vmax.f32 %v3889, 0.0
        %v3922 = vmax.f32 %v3890, 0.0
        %v3923 = vmax.f32 %v3891, 0.0
        %v3924 = vmax.f32 %v3892, 0.0
        %v3925 = vmax.f32 %v3893, 0.0
        %v3926 = vmax.f32 %v3894, 0.0
        %v3927 = vmax.f32 %v3895, 0.0
        %v3928 = vmax.f32 %v3896, 0.0
        %v3929 = vmax.f32 %v3897, 0.0
        %v3930 = vmax.f32 %v3898, 0.0
        %v3931 = vmax.f32 %v3899, 0.0
        %v3932 = vmax.f32 %v3900, 0.0
        %v3933 = vmax.f32 %v3901, 0.0
        %v3934 = vmax.f32 %v3902, 0.0
        %v3935 = vmax.f32 %v3903, 0.0
        %v3936 = vmax.f32 %v3904, 0.0
        %v3937 = vmax.f32 %v3905, 0.0
        %v3938 = vmax.f32 %v3906, 0.0
        %3939 = vst [vmem:[%s223] sm:$0xff] %v3907
        %3940 = vst [vmem:[%s223 + $0x8] sm:$0xff] %v3908
        %3941 = vst [vmem:[%s223 + $0x10] sm:$0xff] %v3909
        %3942 = vst [vmem:[%s223 + $0x18] sm:$0xff] %v3910
        %3943 = vst [vmem:[%s223 + $0x20] sm:$0xff] %v3911
        %3944 = vst [vmem:[%s223 + $0x28] sm:$0xff] %v3912
        %3945 = vst [vmem:[%s223 + $0x30] sm:$0xff] %v3913
        %3946 = vst [vmem:[%s223 + $0x38] sm:$0xff] %v3914
        %3947 = vst [vmem:[%s223 + $0x40] sm:$0xff] %v3915
        %3948 = vst [vmem:[%s223 + $0x48] sm:$0xff] %v3916
        %3949 = vst [vmem:[%s223 + $0x50] sm:$0xff] %v3917
        %3950 = vst [vmem:[%s223 + $0x58] sm:$0xff] %v3918
        %3951 = vst [vmem:[%s223 + $0x60] sm:$0xff] %v3919
        %3952 = vst [vmem:[%s223 + $0x68] sm:$0xff] %v3920
        %3953 = vst [vmem:[%s223 + $0x70] sm:$0xff] %v3921
        %3954 = vst [vmem:[%s223 + $0x78] sm:$0xff] %v3922
        %3955 = vst [vmem:[%s223 + $0x80] sm:$0xff] %v3923
        %3956 = vst [vmem:[%s223 + $0x88] sm:$0xff] %v3924
        %3957 = vst [vmem:[%s223 + $0x90] sm:$0xff] %v3925
        %3958 = vst [vmem:[%s223 + $0x98] sm:$0xff] %v3926
        %3959 = vst [vmem:[%s223 + $0xa0] sm:$0xff] %v3927
        %3960 = vst [vmem:[%s223 + $0xa8] sm:$0xff] %v3928
        %3961 = vst [vmem:[%s223 + $0xb0] sm:$0xff] %v3929
        %3962 = vst [vmem:[%s223 + $0xb8] sm:$0xff] %v3930
        %3963 = vst [vmem:[%s223 + $0xc0] sm:$0xff] %v3931
        %3964 = vst [vmem:[%s223 + $0xc8] sm:$0xff] %v3932
        %3965 = vst [vmem:[%s223 + $0xd0] sm:$0xff] %v3933
        %3966 = vst [vmem:[%s223 + $0xd8] sm:$0xff] %v3934
        %3967 = vst [vmem:[%s223 + $0xe0] sm:$0xff] %v3935
        %3968 = vst [vmem:[%s223 + $0xe8] sm:$0xff] %v3936
        %3969 = vst [vmem:[%s223 + $0xf0] sm:$0xff] %v3937
        %3970 = vst [vmem:[%s223 + $0xf8] sm:$0xff] %v3938
        %s3971 = sand.u32 %s97, 1
        %s3972 = scalar_lea.sflag [#allocation7], %s3971
        %s3973 = sand.u32 %s97, 1
        %s3974 = smul.addr %s3973, 256
        %s3975 = scalar_lea.vmem [#allocation11], %s3974
        // Predicated region
        $region52: #{tpu_custom_call.1} parent=31 // pred_check
          %p3976 = pneg %p107
        $region53: #{tpu_custom_call.1} parent=31 // pred_check_branch
          %3978 = sbr.rel (%p3976) target = $region55
        $region54: #{tpu_custom_call.1} parent=31 // pred_region
          %3980 = vsyncadd %s3972, 0
          %s3981 = smul.addr %s21, 32
          %s3982 = smul.addr %s3981, 8
          %s3983 = scalar_lea.hbm %s3, %s3982
          %s3984 = sshll.u32 %s3975, 4
          %s3985 = int_to_ptr.vmem [resolvable:$true] %s3984
          %s3986 = sshll.u32 %s3983, 4
          %s3987 = int_to_ptr.hbm [resolvable:$true] %s3986
          %3992 = dma.vmem_to_hbm [thread:$0]  %s3985, 4096, %s3987, %s3972, 128, 128, 8
        $region55: #{tpu_custom_call.1} parent=31 // pred_fallthru
          _
      $region32: #{tpu_custom_call.1} parent=5 // pred_fallthru
        _
      %p3993 = scmp.le.s32.totalorder 2, %s16
      // Predicated region
      $region56: #{tpu_custom_call.1} parent=5 // pred_check
        %p3994 = pneg %p3993
      $region57: #{tpu_custom_call.1} parent=5 // pred_check_branch
        %3996 = sbr.rel (%p3994) target = $region59
      $region58: #{tpu_custom_call.1} parent=5 // pred_region
        %s3997 = ssub.s32 %s16, 2
        // Predicated region
        $region60: #{tpu_custom_call.1} parent=58 // pred_check
          %p3998 = pneg %p113
        $region61: #{tpu_custom_call.1} parent=58 // pred_check_branch
          %4000 = sbr.rel (%p3998) target = $region63
        $region62: #{tpu_custom_call.1} parent=58 // pred_region
          %s4001 = sand.u32 %s98, 1
          %s4002 = scalar_lea.sflag [#allocation7], %s4001
          %s4003 = sand.u32 %s98, 1
          %s4004 = smul.addr %s4003, 256
          %s4005 = scalar_lea.vmem [#allocation11], %s4004
          %4007 = dma.done %s4002, 4096
        $region63: #{tpu_custom_call.1} parent=58 // pred_fallthru
          _
      $region59: #{tpu_custom_call.1} parent=5 // pred_fallthru
        _
    $region6: #{tpu_custom_call.1} parent=1 // loop_footer
      %s20 = sadd.s32 1, %s16
    $region7: #{tpu_custom_call.1} parent=1 // loop_footer_branch
      %15 = sbr.rel target = $region3
    $region8: #{tpu_custom_call.1} parent=1 // loop_exit
      _
    %4008 = vsyncpa [#allocation6], 1
    %s4009 = scalar_lea.sflag [#allocation6], 1
    %4010 = vsyncpa %s4009, 1
    %4011 = vsyncpa [#allocation9], 1
    %4012 = vsyncpa [#allocation7], 1
    %s4013 = scalar_lea.sflag [#allocation7], 1
    %4014 = vsyncpa %s4013, 1

</llo_original>
